<compile_context>
chip_gen: v5e
topology: v5e:2x2
jax: 0.10.0
libtpu: 0.0.40
codegen_flags: <defaults>
</compile_context>

<pallas_src>
import functools

import jax
import jax.numpy as jnp
import numpy as np
from jax.experimental import pallas as pl
from jax.experimental.pallas import tpu as pltpu

CH = 22        # EEG channels / conv1 spatial extent
CIN = 24       # CH + conv1-bias validity channel + 1 zero pad (multiple of 8)
C2 = 20        # conv2 output channels
NCLS = 4       # classifier outputs
K2 = 12        # conv2 temporal kernel width
PAD = 6        # conv2 temporal padding
POOL_W = 62    # avg-pool window
POOL_S = 12    # avg-pool stride
EPS = 1e-5     # BatchNorm eps


def _sccnet_kernel(x_ref, w2d_ref, b2_ref, pool_ref, wcg_ref, mask_ref,
                   csum_ref, rsum_ref, bc_ref, out_ref, cols_ref):
    ncols = cols_ref.shape[1]                      # B * Tpad

    # im2col over the whole B-sample slab: cols[k*CIN + c, j] = x[c, j + k].
    # Source has a >= K2-1 zero tail so every shifted read stays in bounds;
    # destination row blocks start at multiples of 24 (sublane aligned).
    for k in range(K2):
        cols_ref[k * CIN:(k + 1) * CIN, :] = x_ref[0, :, pl.ds(k, ncols)]

    # Fused conv1+BN1+conv2+BN2: one (20, 288) @ (288, B*Tpad) MXU matmul.
    # The validity channel inside cols carries the edge-corrected conv1 bias.
    h2 = jnp.dot(w2d_ref[...], cols_ref[...],
                 preferred_element_type=jnp.float32) + b2_ref[...]
    sq = h2 * h2
    # TODO(synk): Dropout(0.5) is identity at inference; training-mode mask
    # is not implemented.

    # AvgPool over all B samples at once (block-diagonal pooling matrix; rows
    # past each sample's valid length are zero, so inter-sample garbage
    # columns of h2 never contribute).
    pooled = jnp.dot(sq, pool_ref[...], preferred_element_type=jnp.float32)
    # NOTE: pooled is a mean of squares (>= 0); exactly-zero windows would
    # give -inf here, matching the reference semantics (torch.log).
    feat = jnp.log(pooled)                          # (20, B*Wp)

    # Linear(840, 4) as MXU contractions:
    #   u[(j,w), (b,w')] = sum_g wc[j,g,w] * feat[g, (b,w')]
    #   mask keeps w == w'; csum sums w' within each sample; rsum sums w
    #   within each class -> logits[j, b].
    u = jnp.dot(wcg_ref[...], feat,
                preferred_element_type=jnp.float32) * mask_ref[...]
    perw = jnp.dot(u, csum_ref[...], preferred_element_type=jnp.float32)
    logits = jnp.dot(rsum_ref[...], perw,
                     preferred_element_type=jnp.float32) + bc_ref[...]
    out_ref[...] = logits[None, :, :]               # (1, 4, B) lane-dense block


@functools.partial(jax.jit, static_argnames=("block_b",))
def sccnet_forward(x, params, block_b=8):
    """x: (N, 1, 22, T) float32.  params: folded (w1f, b1f, w2f, b2f, wc, bc)."""
    w1f, b1f, w2f, b2f, wc, bc = params
    N, cin, H, T = x.shape
    assert cin == 1 and H == CH
    Tout = T + 2 * PAD - K2 + 1                  # conv2 output length (T + 1)
    Tpad = Tout + K2 - 1                         # per-sample slab width (T + 2*PAD)
    Wp = (Tout - POOL_W) // POOL_S + 1           # pooled length
    assert wc.shape == (NCLS, C2 * Wp)

    f32 = jnp.float32
    B = int(min(block_b, N))                     # samples per grid step
    G = pl.cdiv(N, B)
    Npad = G * B
    ncols = B * Tpad                             # lane width of one block
    wx = ncols + 16                              # zero tail for shifted reads

    # ---- fuse conv1(+BN1) into conv2(+BN2) -------------------------------
    weff = jnp.einsum("gfk,fc->gck", w2f, w1f)                 # (20, 22, 12)
    wbias = jnp.einsum("gfk,f->gk", w2f, b1f)                  # conv1-bias taps
    w2d = jnp.concatenate(
        [jnp.transpose(weff, (0, 2, 1)),                       # (20, 12, 22)
         wbias[:, :, None],                                    # validity channel
         jnp.zeros((C2, K2, 1), f32)],                         # zero pad channel
        axis=2).reshape(C2, K2 * CIN)
    b2col = b2f[:, None].astype(f32)

    # ---- block-diagonal avg-pool matrix over the B samples of a block ----
    t = jnp.arange(Tpad)[:, None]
    w = jnp.arange(Wp)[None, :]
    pool1 = jnp.where((t >= POOL_S * w) & (t < POOL_S * w + POOL_W),
                      1.0 / POOL_W, 0.0).astype(f32)           # (Tpad, Wp)
    poolbd = jnp.kron(jnp.eye(B, dtype=f32), pool1)            # (B*Tpad, B*Wp)

    # ---- classifier as MXU contractions ----------------------------------
    wc3 = wc.reshape(NCLS, C2, Wp)
    wcg = jnp.transpose(wc3, (0, 2, 1)).reshape(NCLS * Wp, C2)     # (168, 20)
    mask = jnp.tile(jnp.eye(Wp, dtype=f32), (NCLS, B))             # (168, B*Wp)
    csum = jnp.kron(jnp.eye(B, dtype=f32), jnp.ones((Wp, 1), f32)) # (B*Wp, B)
    rsum = jnp.kron(jnp.eye(NCLS, dtype=f32),
                    jnp.ones((1, Wp), f32))                        # (4, 168)
    bccol = bc[:, None].astype(f32)

    # ---- pack x: (G, 24, B*Tpad + 16), samples side-by-side on lanes -----
    xs = jnp.zeros((Npad, CIN, Tpad), f32)
    xs = xs.at[:N, :CH, PAD:PAD + T].set(x[:, 0].astype(f32))
    xs = xs.at[:, CH, PAD:PAD + T].set(1.0)       # conv1-bias validity channel
    x3 = xs.reshape(G, B, CIN, Tpad).transpose(0, 2, 1, 3).reshape(G, CIN, ncols)
    x3 = jnp.pad(x3, ((0, 0), (0, 0), (0, wx - ncols)))

    out = pl.pallas_call(
        _sccnet_kernel,
        out_shape=jax.ShapeDtypeStruct((G, NCLS, B), f32),
        grid=(G,),
        in_specs=[
            pl.BlockSpec((1, CIN, wx), lambda i: (i, 0, 0)),        # x slab
            pl.BlockSpec((C2, K2 * CIN), lambda i: (0, 0)),         # fused conv W
            pl.BlockSpec((C2, 1), lambda i: (0, 0)),                # conv2 bias
            pl.BlockSpec((B * Tpad, B * Wp), lambda i: (0, 0)),     # pool (block diag)
            pl.BlockSpec((NCLS * Wp, C2), lambda i: (0, 0)),        # classifier (g)
            pl.BlockSpec((NCLS * Wp, B * Wp), lambda i: (0, 0)),    # diag-select mask
            pl.BlockSpec((B * Wp, B), lambda i: (0, 0)),            # per-sample w-sum
            pl.BlockSpec((NCLS, NCLS * Wp), lambda i: (0, 0)),      # per-class w-sum
            pl.BlockSpec((NCLS, 1), lambda i: (0, 0)),              # classifier bias
        ],
        out_specs=pl.BlockSpec((1, NCLS, B), lambda i: (i, 0, 0)),
        scratch_shapes=[pltpu.VMEM((K2 * CIN, ncols), f32)],        # im2col
        compiler_params=pltpu.CompilerParams(
            dimension_semantics=("parallel",),          # shard batch over TCs (v7x)
            vmem_limit_bytes=48 * 1024 * 1024),         # explicit budget (v7x: 64MiB phys)
    )(x3, w2d, b2col, poolbd, wcg, mask, csum, rsum, bccol)

    return out.transpose(0, 2, 1).reshape(Npad, NCLS)[:N]


def make_params(key, T):
    """Deterministic synthetic params; BN (eval) folded into conv weights."""
    Tout = T + 2 * PAD - K2 + 1
    Wp = (Tout - POOL_W) // POOL_S + 1
    ks = jax.random.split(key, 14)
    # conv1: weight (22,1,22,1) -> (22,22), bias (22,); BN1 folded.
    w1 = jax.random.normal(ks[0], (CH, CH), jnp.float32) * 0.1
    b1 = jax.random.normal(ks[1], (CH,), jnp.float32) * 0.1
    g1 = 1.0 + 0.1 * jax.random.normal(ks[2], (CH,), jnp.float32)
    be1 = 0.1 * jax.random.normal(ks[3], (CH,), jnp.float32)
    m1 = 0.1 * jax.random.normal(ks[4], (CH,), jnp.float32)
    v1 = 1.0 + 0.1 * jax.random.uniform(ks[5], (CH,), jnp.float32)
    s1 = g1 / jnp.sqrt(v1 + EPS)
    w1f = s1[:, None] * w1
    b1f = s1 * (b1 - m1) + be1
    # conv2: weight (20,22,1,12) -> (20,22,12), bias (20,); BN2 folded.
    w2 = jax.random.normal(ks[6], (C2, CH, K2), jnp.float32) * 0.05
    b2 = jax.random.normal(ks[7], (C2,), jnp.float32) * 0.1
    g2 = 1.0 + 0.1 * jax.random.normal(ks[8], (C2,), jnp.float32)
    be2 = 0.1 * jax.random.normal(ks[9], (C2,), jnp.float32)
    m2 = 0.1 * jax.random.normal(ks[10], (C2,), jnp.float32)
    v2 = 1.0 + 0.1 * jax.random.uniform(ks[11], (C2,), jnp.float32)
    s2 = g2 / jnp.sqrt(v2 + EPS)
    w2f = s2[:, None, None] * w2
    b2f = s2 * (b2 - m2) + be2
    # classifier Linear(840, 4)
    wc = jax.random.normal(ks[12], (NCLS, C2 * Wp), jnp.float32) * 0.05
    bc = jax.random.normal(ks[13], (NCLS,), jnp.float32) * 0.1
    return (w1f, b1f, w2f, b2f, wc, bc)


def sccnet_reference_np(x, params):
    """Pure NumPy float64 reference mirroring the (unfused) PyTorch graph."""
    w1f, b1f, w2f, b2f, wc, bc = [np.asarray(p, np.float64) for p in params]
    xs = np.asarray(x, np.float64)[:, 0]          # (N, 22, T)
    N, _, T = xs.shape
    Tout = T + 2 * PAD - K2 + 1
    Wp = (Tout - POOL_W) // POOL_S + 1
    h1 = np.einsum("fc,nct->nft", w1f, xs) + b1f[None, :, None]
    h1p = np.pad(h1, ((0, 0), (0, 0), (PAD, PAD)))
    h2 = np.broadcast_to(b2f[None, :, None], (N, C2, Tout)).copy()
    for k in range(K2):
        h2 += np.einsum("gf,nft->ngt", w2f[:, :, k], h1p[:, :, k:k + Tout])
    sq = h2 ** 2
    pooled = np.stack(
        [sq[:, :, POOL_S * w:POOL_S * w + POOL_W].mean(-1) for w in range(Wp)],
        axis=-1)                                  # (N, 20, Wp)
    feat = np.log(pooled).reshape(N, C2 * Wp)
    return feat @ wc.T + bc[None, :]


if __name__ == "__main__":
    # T = 553 is implied by the module: conv2 pad gives T+1 = 554,
    # AvgPool((1,62), stride 12) -> 42 windows, 20*42 = 840 classifier features.
    N, T = 2, 553
    key = jax.random.PRNGKey(0)
    kx, kp = jax.random.split(key)
    x = jax.random.normal(kx, (N, 1, CH, T), jnp.float32)
    params = make_params(kp, T)

    out = jax.block_until_ready(sccnet_forward(x, params))
    assert out.shape == (N, NCLS)
    assert bool(jnp.all(jnp.isfinite(out)))

    ref = sccnet_reference_np(x, params)
    np.testing.assert_allclose(np.asarray(out), ref, rtol=1e-2, atol=1e-2)
    print("KERNEL_OK")
</pallas_src>

<mosaic_0001>
module attributes {stable_mosaic.version = 11 : i64} {
  func.func @_sccnet_kernel(%arg0: i32, %arg1: memref<1x24x1146xf32, #tpu.memory_space<vmem>>, %arg2: memref<20x288xf32, #tpu.memory_space<vmem>>, %arg3: memref<20x1xf32, #tpu.memory_space<vmem>>, %arg4: memref<1130x84xf32, #tpu.memory_space<vmem>>, %arg5: memref<168x20xf32, #tpu.memory_space<vmem>>, %arg6: memref<168x84xf32, #tpu.memory_space<vmem>>, %arg7: memref<84x2xf32, #tpu.memory_space<vmem>>, %arg8: memref<4x168xf32, #tpu.memory_space<vmem>>, %arg9: memref<4x1xf32, #tpu.memory_space<vmem>>, %arg10: memref<1x4x2xf32, #tpu.memory_space<vmem>>, %arg11: memref<288x1130xf32, #tpu.memory_space<vmem>>) attributes {dimension_semantics = [#tpu.dimension_semantics<parallel>], iteration_bounds = array<i64: 1>, scalar_prefetch = 0 : i64, scratch_operands = 1 : i64, tpu.core_type = #tpu.core_type<tc>, window_params = [{transform_indices = @transform_0, window_bounds = array<i64: 1, 24, 1146>}, {pipeline_mode = #tpu.pipeline_mode<synchronous>, transform_indices = @transform_1, window_bounds = array<i64: 20, 288>}, {pipeline_mode = #tpu.pipeline_mode<synchronous>, transform_indices = @transform_2, window_bounds = array<i64: 20, 1>}, {pipeline_mode = #tpu.pipeline_mode<synchronous>, transform_indices = @transform_3, window_bounds = array<i64: 1130, 84>}, {pipeline_mode = #tpu.pipeline_mode<synchronous>, transform_indices = @transform_4, window_bounds = array<i64: 168, 20>}, {pipeline_mode = #tpu.pipeline_mode<synchronous>, transform_indices = @transform_5, window_bounds = array<i64: 168, 84>}, {pipeline_mode = #tpu.pipeline_mode<synchronous>, transform_indices = @transform_6, window_bounds = array<i64: 84, 2>}, {pipeline_mode = #tpu.pipeline_mode<synchronous>, transform_indices = @transform_7, window_bounds = array<i64: 4, 168>}, {pipeline_mode = #tpu.pipeline_mode<synchronous>, transform_indices = @transform_8, window_bounds = array<i64: 4, 1>}, {transform_indices = @transform_9, window_bounds = array<i64: 1, 4, 2>}]} {
    %c0 = arith.constant 0 : index
    %c0_0 = arith.constant 0 : index
    %c0_1 = arith.constant 0 : index
    %0 = vector.load %arg1[%c0, %c0_0, %c0_1] : memref<1x24x1146xf32, #tpu.memory_space<vmem>>, vector<1x24x1130xf32>
    %1 = vector.shape_cast %0 : vector<1x24x1130xf32> to vector<24x1130xf32>
    %c0_2 = arith.constant 0 : index
    %c0_3 = arith.constant 0 : index
    %2 = vector.load %arg11[%c0_2, %c0_3] : memref<288x1130xf32, #tpu.memory_space<vmem>>, vector<24x1130xf32>
    tpu.vector_store %arg11[%c0_2, %c0_3], %1 {strides = array<i32>} : memref<288x1130xf32, #tpu.memory_space<vmem>>, vector<24x1130xf32>,
    %c0_4 = arith.constant 0 : index
    %c0_5 = arith.constant 0 : index
    %c1 = arith.constant 1 : index
    %3 = vector.load %arg1[%c0_4, %c0_5, %c1] : memref<1x24x1146xf32, #tpu.memory_space<vmem>>, vector<1x24x1130xf32>
    %4 = vector.shape_cast %3 : vector<1x24x1130xf32> to vector<24x1130xf32>
    %c24 = arith.constant 24 : index
    %c0_6 = arith.constant 0 : index
    %5 = vector.load %arg11[%c24, %c0_6] : memref<288x1130xf32, #tpu.memory_space<vmem>>, vector<24x1130xf32>
    tpu.vector_store %arg11[%c24, %c0_6], %4 {strides = array<i32>} : memref<288x1130xf32, #tpu.memory_space<vmem>>, vector<24x1130xf32>,
    %c0_7 = arith.constant 0 : index
    %c0_8 = arith.constant 0 : index
    %c2 = arith.constant 2 : index
    %6 = vector.load %arg1[%c0_7, %c0_8, %c2] : memref<1x24x1146xf32, #tpu.memory_space<vmem>>, vector<1x24x1130xf32>
    %7 = vector.shape_cast %6 : vector<1x24x1130xf32> to vector<24x1130xf32>
    %c48 = arith.constant 48 : index
    %c0_9 = arith.constant 0 : index
    %8 = vector.load %arg11[%c48, %c0_9] : memref<288x1130xf32, #tpu.memory_space<vmem>>, vector<24x1130xf32>
    tpu.vector_store %arg11[%c48, %c0_9], %7 {strides = array<i32>} : memref<288x1130xf32, #tpu.memory_space<vmem>>, vector<24x1130xf32>,
    %c0_10 = arith.constant 0 : index
    %c0_11 = arith.constant 0 : index
    %c3 = arith.constant 3 : index
    %9 = vector.load %arg1[%c0_10, %c0_11, %c3] : memref<1x24x1146xf32, #tpu.memory_space<vmem>>, vector<1x24x1130xf32>
    %10 = vector.shape_cast %9 : vector<1x24x1130xf32> to vector<24x1130xf32>
    %c72 = arith.constant 72 : index
    %c0_12 = arith.constant 0 : index
    %11 = vector.load %arg11[%c72, %c0_12] : memref<288x1130xf32, #tpu.memory_space<vmem>>, vector<24x1130xf32>
    tpu.vector_store %arg11[%c72, %c0_12], %10 {strides = array<i32>} : memref<288x1130xf32, #tpu.memory_space<vmem>>, vector<24x1130xf32>,
    %c0_13 = arith.constant 0 : index
    %c0_14 = arith.constant 0 : index
    %c4 = arith.constant 4 : index
    %12 = vector.load %arg1[%c0_13, %c0_14, %c4] : memref<1x24x1146xf32, #tpu.memory_space<vmem>>, vector<1x24x1130xf32>
    %13 = vector.shape_cast %12 : vector<1x24x1130xf32> to vector<24x1130xf32>
    %c96 = arith.constant 96 : index
    %c0_15 = arith.constant 0 : index
    %14 = vector.load %arg11[%c96, %c0_15] : memref<288x1130xf32, #tpu.memory_space<vmem>>, vector<24x1130xf32>
    tpu.vector_store %arg11[%c96, %c0_15], %13 {strides = array<i32>} : memref<288x1130xf32, #tpu.memory_space<vmem>>, vector<24x1130xf32>,
    %c0_16 = arith.constant 0 : index
    %c0_17 = arith.constant 0 : index
    %c5 = arith.constant 5 : index
    %15 = vector.load %arg1[%c0_16, %c0_17, %c5] : memref<1x24x1146xf32, #tpu.memory_space<vmem>>, vector<1x24x1130xf32>
    %16 = vector.shape_cast %15 : vector<1x24x1130xf32> to vector<24x1130xf32>
    %c120 = arith.constant 120 : index
    %c0_18 = arith.constant 0 : index
    %17 = vector.load %arg11[%c120, %c0_18] : memref<288x1130xf32, #tpu.memory_space<vmem>>, vector<24x1130xf32>
    tpu.vector_store %arg11[%c120, %c0_18], %16 {strides = array<i32>} : memref<288x1130xf32, #tpu.memory_space<vmem>>, vector<24x1130xf32>,
    %c0_19 = arith.constant 0 : index
    %c0_20 = arith.constant 0 : index
    %c6 = arith.constant 6 : index
    %18 = vector.load %arg1[%c0_19, %c0_20, %c6] : memref<1x24x1146xf32, #tpu.memory_space<vmem>>, vector<1x24x1130xf32>
    %19 = vector.shape_cast %18 : vector<1x24x1130xf32> to vector<24x1130xf32>
    %c144 = arith.constant 144 : index
    %c0_21 = arith.constant 0 : index
    %20 = vector.load %arg11[%c144, %c0_21] : memref<288x1130xf32, #tpu.memory_space<vmem>>, vector<24x1130xf32>
    tpu.vector_store %arg11[%c144, %c0_21], %19 {strides = array<i32>} : memref<288x1130xf32, #tpu.memory_space<vmem>>, vector<24x1130xf32>,
    %c0_22 = arith.constant 0 : index
    %c0_23 = arith.constant 0 : index
    %c7 = arith.constant 7 : index
    %21 = vector.load %arg1[%c0_22, %c0_23, %c7] : memref<1x24x1146xf32, #tpu.memory_space<vmem>>, vector<1x24x1130xf32>
    %22 = vector.shape_cast %21 : vector<1x24x1130xf32> to vector<24x1130xf32>
    %c168 = arith.constant 168 : index
    %c0_24 = arith.constant 0 : index
    %23 = vector.load %arg11[%c168, %c0_24] : memref<288x1130xf32, #tpu.memory_space<vmem>>, vector<24x1130xf32>
    tpu.vector_store %arg11[%c168, %c0_24], %22 {strides = array<i32>} : memref<288x1130xf32, #tpu.memory_space<vmem>>, vector<24x1130xf32>,
    %c0_25 = arith.constant 0 : index
    %c0_26 = arith.constant 0 : index
    %c8 = arith.constant 8 : index
    %24 = vector.load %arg1[%c0_25, %c0_26, %c8] : memref<1x24x1146xf32, #tpu.memory_space<vmem>>, vector<1x24x1130xf32>
    %25 = vector.shape_cast %24 : vector<1x24x1130xf32> to vector<24x1130xf32>
    %c192 = arith.constant 192 : index
    %c0_27 = arith.constant 0 : index
    %26 = vector.load %arg11[%c192, %c0_27] : memref<288x1130xf32, #tpu.memory_space<vmem>>, vector<24x1130xf32>
    tpu.vector_store %arg11[%c192, %c0_27], %25 {strides = array<i32>} : memref<288x1130xf32, #tpu.memory_space<vmem>>, vector<24x1130xf32>,
    %c0_28 = arith.constant 0 : index
    %c0_29 = arith.constant 0 : index
    %c9 = arith.constant 9 : index
    %27 = vector.load %arg1[%c0_28, %c0_29, %c9] : memref<1x24x1146xf32, #tpu.memory_space<vmem>>, vector<1x24x1130xf32>
    %28 = vector.shape_cast %27 : vector<1x24x1130xf32> to vector<24x1130xf32>
    %c216 = arith.constant 216 : index
    %c0_30 = arith.constant 0 : index
    %29 = vector.load %arg11[%c216, %c0_30] : memref<288x1130xf32, #tpu.memory_space<vmem>>, vector<24x1130xf32>
    tpu.vector_store %arg11[%c216, %c0_30], %28 {strides = array<i32>} : memref<288x1130xf32, #tpu.memory_space<vmem>>, vector<24x1130xf32>,
    %c0_31 = arith.constant 0 : index
    %c0_32 = arith.constant 0 : index
    %c10 = arith.constant 10 : index
    %30 = vector.load %arg1[%c0_31, %c0_32, %c10] : memref<1x24x1146xf32, #tpu.memory_space<vmem>>, vector<1x24x1130xf32>
    %31 = vector.shape_cast %30 : vector<1x24x1130xf32> to vector<24x1130xf32>
    %c240 = arith.constant 240 : index
    %c0_33 = arith.constant 0 : index
    %32 = vector.load %arg11[%c240, %c0_33] : memref<288x1130xf32, #tpu.memory_space<vmem>>, vector<24x1130xf32>
    tpu.vector_store %arg11[%c240, %c0_33], %31 {strides = array<i32>} : memref<288x1130xf32, #tpu.memory_space<vmem>>, vector<24x1130xf32>,
    %c0_34 = arith.constant 0 : index
    %c0_35 = arith.constant 0 : index
    %c11 = arith.constant 11 : index
    %33 = vector.load %arg1[%c0_34, %c0_35, %c11] : memref<1x24x1146xf32, #tpu.memory_space<vmem>>, vector<1x24x1130xf32>
    %34 = vector.shape_cast %33 : vector<1x24x1130xf32> to vector<24x1130xf32>
    %c264 = arith.constant 264 : index
    %c0_36 = arith.constant 0 : index
    %35 = vector.load %arg11[%c264, %c0_36] : memref<288x1130xf32, #tpu.memory_space<vmem>>, vector<24x1130xf32>
    tpu.vector_store %arg11[%c264, %c0_36], %34 {strides = array<i32>} : memref<288x1130xf32, #tpu.memory_space<vmem>>, vector<24x1130xf32>,
    %c0_37 = arith.constant 0 : index
    %c0_38 = arith.constant 0 : index
    %36 = vector.load %arg2[%c0_37, %c0_38] : memref<20x288xf32, #tpu.memory_space<vmem>>, vector<20x288xf32>
    %c0_39 = arith.constant 0 : index
    %c0_40 = arith.constant 0 : index
    %37 = vector.load %arg11[%c0_39, %c0_40] : memref<288x1130xf32, #tpu.memory_space<vmem>>, vector<288x1130xf32>
    %cst = arith.constant dense<0.000000e+00> : vector<20x1130xf32>
    %38 = tpu.matmul %36, %37, %cst {dimension_numbers = #tpu.dot_dimension_numbers<[1], [0], [0], [1], [0, 0, 1, 1], [], []>} : vector<20x288xf32>, vector<288x1130xf32>, vector<20x1130xf32> -> vector<20x1130xf32>
    %c0_41 = arith.constant 0 : index
    %c0_42 = arith.constant 0 : index
    %39 = vector.load %arg3[%c0_41, %c0_42] : memref<20x1xf32, #tpu.memory_space<vmem>>, vector<20x1xf32>
    %40 = vector.broadcast %39 : vector<20x1xf32> to vector<20x1130xf32>
    %41 = arith.addf %38, %40 : vector<20x1130xf32>
    %42 = arith.mulf %41, %41 : vector<20x1130xf32>
    %c0_43 = arith.constant 0 : index
    %c0_44 = arith.constant 0 : index
    %43 = vector.load %arg4[%c0_43, %c0_44] : memref<1130x84xf32, #tpu.memory_space<vmem>>, vector<1130x84xf32>
    %cst_45 = arith.constant dense<0.000000e+00> : vector<20x84xf32>
    %44 = tpu.matmul %42, %43, %cst_45 {dimension_numbers = #tpu.dot_dimension_numbers<[1], [0], [0], [1], [0, 0, 1, 1], [], []>} : vector<20x1130xf32>, vector<1130x84xf32>, vector<20x84xf32> -> vector<20x84xf32>
    %45 = math.log %44 : vector<20x84xf32>
    %c0_46 = arith.constant 0 : index
    %c0_47 = arith.constant 0 : index
    %46 = vector.load %arg5[%c0_46, %c0_47] : memref<168x20xf32, #tpu.memory_space<vmem>>, vector<168x20xf32>
    %cst_48 = arith.constant dense<0.000000e+00> : vector<168x84xf32>
    %47 = tpu.matmul %46, %45, %cst_48 {dimension_numbers = #tpu.dot_dimension_numbers<[1], [0], [0], [1], [0, 0, 1, 1], [], []>} : vector<168x20xf32>, vector<20x84xf32>, vector<168x84xf32> -> vector<168x84xf32>
    %c0_49 = arith.constant 0 : index
    %c0_50 = arith.constant 0 : index
    %48 = vector.load %arg6[%c0_49, %c0_50] : memref<168x84xf32, #tpu.memory_space<vmem>>, vector<168x84xf32>
    %49 = arith.mulf %47, %48 : vector<168x84xf32>
    %c0_51 = arith.constant 0 : index
    %c0_52 = arith.constant 0 : index
    %50 = vector.load %arg7[%c0_51, %c0_52] : memref<84x2xf32, #tpu.memory_space<vmem>>, vector<84x2xf32>
    %cst_53 = arith.constant dense<0.000000e+00> : vector<168x2xf32>
    %51 = tpu.matmul %49, %50, %cst_53 {dimension_numbers = #tpu.dot_dimension_numbers<[1], [0], [0], [1], [0, 0, 1, 1], [], []>} : vector<168x84xf32>, vector<84x2xf32>, vector<168x2xf32> -> vector<168x2xf32>
    %c0_54 = arith.constant 0 : index
    %c0_55 = arith.constant 0 : index
    %52 = vector.load %arg8[%c0_54, %c0_55] : memref<4x168xf32, #tpu.memory_space<vmem>>, vector<4x168xf32>
    %cst_56 = arith.constant dense<0.000000e+00> : vector<4x2xf32>
    %53 = tpu.matmul %52, %51, %cst_56 {dimension_numbers = #tpu.dot_dimension_numbers<[1], [0], [0], [1], [0, 0, 1, 1], [], []>} : vector<4x168xf32>, vector<168x2xf32>, vector<4x2xf32> -> vector<4x2xf32>
    %c0_57 = arith.constant 0 : index
    %c0_58 = arith.constant 0 : index
    %54 = vector.load %arg9[%c0_57, %c0_58] : memref<4x1xf32, #tpu.memory_space<vmem>>, vector<4x1xf32>
    %55 = vector.broadcast %54 : vector<4x1xf32> to vector<4x2xf32>
    %56 = arith.addf %53, %55 : vector<4x2xf32>
    %57 = vector.shape_cast %56 : vector<4x2xf32> to vector<1x4x2xf32>
    %c0_59 = arith.constant 0 : index
    %c0_60 = arith.constant 0 : index
    %c0_61 = arith.constant 0 : index
    %58 = vector.load %arg10[%c0_59, %c0_60, %c0_61] : memref<1x4x2xf32, #tpu.memory_space<vmem>>, vector<1x4x2xf32>
    tpu.vector_store %arg10[%c0_59, %c0_60, %c0_61], %57 {strides = array<i32>} : memref<1x4x2xf32, #tpu.memory_space<vmem>>, vector<1x4x2xf32>,
    return
  }
  func.func @transform_0(%arg0: i32) -> (i32, i32, i32) {
    %c0_i32 = arith.constant 0 : i32
    %c0_i32_0 = arith.constant 0 : i32
    %c0_i32_1 = arith.constant 0 : i32
    return %arg0, %c0_i32, %c0_i32_0 : i32, i32, i32
  }
  func.func @transform_1(%arg0: i32) -> (i32, i32) {
    %c0_i32 = arith.constant 0 : i32
    %c0_i32_0 = arith.constant 0 : i32
    %c0_i32_1 = arith.constant 0 : i32
    return %c0_i32, %c0_i32_0 : i32, i32
  }
  func.func @transform_2(%arg0: i32) -> (i32, i32) {
    %c0_i32 = arith.constant 0 : i32
    %c0_i32_0 = arith.constant 0 : i32
    %c0_i32_1 = arith.constant 0 : i32
    return %c0_i32, %c0_i32_0 : i32, i32
  }
  func.func @transform_3(%arg0: i32) -> (i32, i32) {
    %c0_i32 = arith.constant 0 : i32
    %c0_i32_0 = arith.constant 0 : i32
    %c0_i32_1 = arith.constant 0 : i32
    return %c0_i32, %c0_i32_0 : i32, i32
  }
  func.func @transform_4(%arg0: i32) -> (i32, i32) {
    %c0_i32 = arith.constant 0 : i32
    %c0_i32_0 = arith.constant 0 : i32
    %c0_i32_1 = arith.constant 0 : i32
    return %c0_i32, %c0_i32_0 : i32, i32
  }
  func.func @transform_5(%arg0: i32) -> (i32, i32) {
    %c0_i32 = arith.constant 0 : i32
    %c0_i32_0 = arith.constant 0 : i32
    %c0_i32_1 = arith.constant 0 : i32
    return %c0_i32, %c0_i32_0 : i32, i32
  }
  func.func @transform_6(%arg0: i32) -> (i32, i32) {
    %c0_i32 = arith.constant 0 : i32
    %c0_i32_0 = arith.constant 0 : i32
    %c0_i32_1 = arith.constant 0 : i32
    return %c0_i32, %c0_i32_0 : i32, i32
  }
  func.func @transform_7(%arg0: i32) -> (i32, i32) {
    %c0_i32 = arith.constant 0 : i32
    %c0_i32_0 = arith.constant 0 : i32
    %c0_i32_1 = arith.constant 0 : i32
    return %c0_i32, %c0_i32_0 : i32, i32
  }
  func.func @transform_8(%arg0: i32) -> (i32, i32) {
    %c0_i32 = arith.constant 0 : i32
    %c0_i32_0 = arith.constant 0 : i32
    %c0_i32_1 = arith.constant 0 : i32
    return %c0_i32, %c0_i32_0 : i32, i32
  }
  func.func @transform_9(%arg0: i32) -> (i32, i32, i32) {
    %c0_i32 = arith.constant 0 : i32
    %c0_i32_0 = arith.constant 0 : i32
    %c0_i32_1 = arith.constant 0 : i32
    return %arg0, %c0_i32, %c0_i32_0 : i32, i32, i32
  }
}

</mosaic_0001>

<llo_original>
// kernel: tile.8
$region0: #{tile.8}
  #allocation0 [shape = 's32[1]{0}', space=sflag, size = 0x4, scoped, tag = 'scoped memory for tile.8']
  %s0 = inlined_call_operand.vmem [shape: f32[42,42], index: 0, kind: input, shape index: {}]
  %s1 = inlined_call_operand.vmem [shape: f32[4,42,2,42], index: 1, kind: output, shape index: {}]
  // Predicated region
  $region2: #{tile.8} parent=0 // pred_check
    _
  $region3: #{tile.8} parent=0 // pred_check_branch
    %3 = sbr.rel (0) target = $region5
  $region4: #{tile.8} parent=0 // pred_region
    _
  $region5: #{tile.8} parent=0 // pred_fallthru
    _
  %v4 = vld [vmem:[%s0] ss:$0 sm:$0xff]
  %5 = vst [vmem:[%s1] sm:$0x3] %v4
  %s6 = scalar_lea.vmem %s1, 84
  %7 = vst [vmem:[%s6] sm:$0x3] %v4
  %s8 = scalar_lea.vmem %s1, 168
  %9 = vst [vmem:[%s8] sm:$0x3] %v4
  %s10 = scalar_lea.vmem %s1, 252
  %11 = vst [vmem:[%s10] sm:$0x3] %v4
  %s12 = scalar_lea.vmem %s0, 1
  %v13 = vld [vmem:[%s12] ss:$0 sm:$0xff]
  %s14 = scalar_lea.vmem %s1, 2
  %15 = vst [vmem:[%s14] sm:$0x3] %v13
  %s16 = scalar_lea.vmem %s1, 86
  %17 = vst [vmem:[%s16] sm:$0x3] %v13
  %s18 = scalar_lea.vmem %s1, 170
  %19 = vst [vmem:[%s18] sm:$0x3] %v13
  %s20 = scalar_lea.vmem %s1, 254
  %21 = vst [vmem:[%s20] sm:$0x3] %v13
  %s22 = scalar_lea.vmem %s0, 2
  %v23 = vld [vmem:[%s22] ss:$0 sm:$0xff]
  %s24 = scalar_lea.vmem %s1, 4
  %25 = vst [vmem:[%s24] sm:$0x3] %v23
  %s26 = scalar_lea.vmem %s1, 88
  %27 = vst [vmem:[%s26] sm:$0x3] %v23
  %s28 = scalar_lea.vmem %s1, 172
  %29 = vst [vmem:[%s28] sm:$0x3] %v23
  %s30 = scalar_lea.vmem %s1, 256
  %31 = vst [vmem:[%s30] sm:$0x3] %v23
  %s32 = scalar_lea.vmem %s0, 3
  %v33 = vld [vmem:[%s32] ss:$0 sm:$0xff]
  %s34 = scalar_lea.vmem %s1, 6
  %35 = vst [vmem:[%s34] sm:$0x3] %v33
  %s36 = scalar_lea.vmem %s1, 90
  %37 = vst [vmem:[%s36] sm:$0x3] %v33
  %s38 = scalar_lea.vmem %s1, 174
  %39 = vst [vmem:[%s38] sm:$0x3] %v33
  %s40 = scalar_lea.vmem %s1, 258
  %41 = vst [vmem:[%s40] sm:$0x3] %v33
  %s42 = scalar_lea.vmem %s0, 4
  %v43 = vld [vmem:[%s42] ss:$0 sm:$0xff]
  %s44 = scalar_lea.vmem %s1, 8
  %45 = vst [vmem:[%s44] sm:$0x3] %v43
  %s46 = scalar_lea.vmem %s1, 92
  %47 = vst [vmem:[%s46] sm:$0x3] %v43
  %s48 = scalar_lea.vmem %s1, 176
  %49 = vst [vmem:[%s48] sm:$0x3] %v43
  %s50 = scalar_lea.vmem %s1, 260
  %51 = vst [vmem:[%s50] sm:$0x3] %v43
  %s52 = scalar_lea.vmem %s0, 5
  %v53 = vld [vmem:[%s52] ss:$0 sm:$0xff]
  %s54 = scalar_lea.vmem %s1, 10
  %55 = vst [vmem:[%s54] sm:$0x3] %v53
  %s56 = scalar_lea.vmem %s1, 94
  %57 = vst [vmem:[%s56] sm:$0x3] %v53
  %s58 = scalar_lea.vmem %s1, 178
  %59 = vst [vmem:[%s58] sm:$0x3] %v53
  %s60 = scalar_lea.vmem %s1, 262
  %61 = vst [vmem:[%s60] sm:$0x3] %v53
  %s62 = scalar_lea.vmem %s0, 6
  %v63 = vld [vmem:[%s62] ss:$0 sm:$0xff]
  %s64 = scalar_lea.vmem %s1, 12
  %65 = vst [vmem:[%s64] sm:$0x3] %v63
  %s66 = scalar_lea.vmem %s1, 96
  %67 = vst [vmem:[%s66] sm:$0x3] %v63
  %s68 = scalar_lea.vmem %s1, 180
  %69 = vst [vmem:[%s68] sm:$0x3] %v63
  %s70 = scalar_lea.vmem %s1, 264
  %71 = vst [vmem:[%s70] sm:$0x3] %v63
  %s72 = scalar_lea.vmem %s0, 7
  %v73 = vld [vmem:[%s72] ss:$0 sm:$0xff]
  %s74 = scalar_lea.vmem %s1, 14
  %75 = vst [vmem:[%s74] sm:$0x3] %v73
  %s76 = scalar_lea.vmem %s1, 98
  %77 = vst [vmem:[%s76] sm:$0x3] %v73
  %s78 = scalar_lea.vmem %s1, 182
  %79 = vst [vmem:[%s78] sm:$0x3] %v73
  %s80 = scalar_lea.vmem %s1, 266
  %81 = vst [vmem:[%s80] sm:$0x3] %v73
  %s82 = scalar_lea.vmem %s0, 8
  %v83 = vld [vmem:[%s82] ss:$0 sm:$0xff]
  %s84 = scalar_lea.vmem %s1, 16
  %85 = vst [vmem:[%s84] sm:$0x3] %v83
  %s86 = scalar_lea.vmem %s1, 100
  %87 = vst [vmem:[%s86] sm:$0x3] %v83
  %s88 = scalar_lea.vmem %s1, 184
  %89 = vst [vmem:[%s88] sm:$0x3] %v83
  %s90 = scalar_lea.vmem %s1, 268
  %91 = vst [vmem:[%s90] sm:$0x3] %v83
  %s92 = scalar_lea.vmem %s0, 8
  %s93 = scalar_lea.vmem %s92, 1
  %v94 = vld [vmem:[%s93] ss:$0 sm:$0xff]
  %s95 = scalar_lea.vmem %s1, 18
  %96 = vst [vmem:[%s95] sm:$0x3] %v94
  %s97 = scalar_lea.vmem %s1, 102
  %98 = vst [vmem:[%s97] sm:$0x3] %v94
  %s99 = scalar_lea.vmem %s1, 186
  %100 = vst [vmem:[%s99] sm:$0x3] %v94
  %s101 = scalar_lea.vmem %s1, 270
  %102 = vst [vmem:[%s101] sm:$0x3] %v94
  %s103 = scalar_lea.vmem %s0, 8
  %s104 = scalar_lea.vmem %s103, 2
  %v105 = vld [vmem:[%s104] ss:$0 sm:$0xff]
  %s106 = scalar_lea.vmem %s1, 20
  %107 = vst [vmem:[%s106] sm:$0x3] %v105
  %s108 = scalar_lea.vmem %s1, 104
  %109 = vst [vmem:[%s108] sm:$0x3] %v105
  %s110 = scalar_lea.vmem %s1, 188
  %111 = vst [vmem:[%s110] sm:$0x3] %v105
  %s112 = scalar_lea.vmem %s1, 272
  %113 = vst [vmem:[%s112] sm:$0x3] %v105
  %s114 = scalar_lea.vmem %s0, 8
  %s115 = scalar_lea.vmem %s114, 3
  %v116 = vld [vmem:[%s115] ss:$0 sm:$0xff]
  %s117 = scalar_lea.vmem %s1, 22
  %118 = vst [vmem:[%s117] sm:$0x3] %v116
  %s119 = scalar_lea.vmem %s1, 106
  %120 = vst [vmem:[%s119] sm:$0x3] %v116
  %s121 = scalar_lea.vmem %s1, 190
  %122 = vst [vmem:[%s121] sm:$0x3] %v116
  %s123 = scalar_lea.vmem %s1, 274
  %124 = vst [vmem:[%s123] sm:$0x3] %v116
  %s125 = scalar_lea.vmem %s0, 8
  %s126 = scalar_lea.vmem %s125, 4
  %v127 = vld [vmem:[%s126] ss:$0 sm:$0xff]
  %s128 = scalar_lea.vmem %s1, 24
  %129 = vst [vmem:[%s128] sm:$0x3] %v127
  %s130 = scalar_lea.vmem %s1, 108
  %131 = vst [vmem:[%s130] sm:$0x3] %v127
  %s132 = scalar_lea.vmem %s1, 192
  %133 = vst [vmem:[%s132] sm:$0x3] %v127
  %s134 = scalar_lea.vmem %s1, 276
  %135 = vst [vmem:[%s134] sm:$0x3] %v127
  %s136 = scalar_lea.vmem %s0, 8
  %s137 = scalar_lea.vmem %s136, 5
  %v138 = vld [vmem:[%s137] ss:$0 sm:$0xff]
  %s139 = scalar_lea.vmem %s1, 26
  %140 = vst [vmem:[%s139] sm:$0x3] %v138
  %s141 = scalar_lea.vmem %s1, 110
  %142 = vst [vmem:[%s141] sm:$0x3] %v138
  %s143 = scalar_lea.vmem %s1, 194
  %144 = vst [vmem:[%s143] sm:$0x3] %v138
  %s145 = scalar_lea.vmem %s1, 278
  %146 = vst [vmem:[%s145] sm:$0x3] %v138
  %s147 = scalar_lea.vmem %s0, 8
  %s148 = scalar_lea.vmem %s147, 6
  %v149 = vld [vmem:[%s148] ss:$0 sm:$0xff]
  %s150 = scalar_lea.vmem %s1, 28
  %151 = vst [vmem:[%s150] sm:$0x3] %v149
  %s152 = scalar_lea.vmem %s1, 112
  %153 = vst [vmem:[%s152] sm:$0x3] %v149
  %s154 = scalar_lea.vmem %s1, 196
  %155 = vst [vmem:[%s154] sm:$0x3] %v149
  %s156 = scalar_lea.vmem %s1, 280
  %157 = vst [vmem:[%s156] sm:$0x3] %v149
  %s158 = scalar_lea.vmem %s0, 8
  %s159 = scalar_lea.vmem %s158, 7
  %v160 = vld [vmem:[%s159] ss:$0 sm:$0xff]
  %s161 = scalar_lea.vmem %s1, 30
  %162 = vst [vmem:[%s161] sm:$0x3] %v160
  %s163 = scalar_lea.vmem %s1, 114
  %164 = vst [vmem:[%s163] sm:$0x3] %v160
  %s165 = scalar_lea.vmem %s1, 198
  %166 = vst [vmem:[%s165] sm:$0x3] %v160
  %s167 = scalar_lea.vmem %s1, 282
  %168 = vst [vmem:[%s167] sm:$0x3] %v160
  %s169 = scalar_lea.vmem %s0, 16
  %v170 = vld [vmem:[%s169] ss:$0 sm:$0xff]
  %s171 = scalar_lea.vmem %s1, 32
  %172 = vst [vmem:[%s171] sm:$0x3] %v170
  %s173 = scalar_lea.vmem %s1, 116
  %174 = vst [vmem:[%s173] sm:$0x3] %v170
  %s175 = scalar_lea.vmem %s1, 200
  %176 = vst [vmem:[%s175] sm:$0x3] %v170
  %s177 = scalar_lea.vmem %s1, 284
  %178 = vst [vmem:[%s177] sm:$0x3] %v170
  %s179 = scalar_lea.vmem %s0, 16
  %s180 = scalar_lea.vmem %s179, 1
  %v181 = vld [vmem:[%s180] ss:$0 sm:$0xff]
  %s182 = scalar_lea.vmem %s1, 34
  %183 = vst [vmem:[%s182] sm:$0x3] %v181
  %s184 = scalar_lea.vmem %s1, 118
  %185 = vst [vmem:[%s184] sm:$0x3] %v181
  %s186 = scalar_lea.vmem %s1, 202
  %187 = vst [vmem:[%s186] sm:$0x3] %v181
  %s188 = scalar_lea.vmem %s1, 286
  %189 = vst [vmem:[%s188] sm:$0x3] %v181
  %s190 = scalar_lea.vmem %s0, 16
  %s191 = scalar_lea.vmem %s190, 2
  %v192 = vld [vmem:[%s191] ss:$0 sm:$0xff]
  %s193 = scalar_lea.vmem %s1, 36
  %194 = vst [vmem:[%s193] sm:$0x3] %v192
  %s195 = scalar_lea.vmem %s1, 120
  %196 = vst [vmem:[%s195] sm:$0x3] %v192
  %s197 = scalar_lea.vmem %s1, 204
  %198 = vst [vmem:[%s197] sm:$0x3] %v192
  %s199 = scalar_lea.vmem %s1, 288
  %200 = vst [vmem:[%s199] sm:$0x3] %v192
  %s201 = scalar_lea.vmem %s0, 16
  %s202 = scalar_lea.vmem %s201, 3
  %v203 = vld [vmem:[%s202] ss:$0 sm:$0xff]
  %s204 = scalar_lea.vmem %s1, 38
  %205 = vst [vmem:[%s204] sm:$0x3] %v203
  %s206 = scalar_lea.vmem %s1, 122
  %207 = vst [vmem:[%s206] sm:$0x3] %v203
  %s208 = scalar_lea.vmem %s1, 206
  %209 = vst [vmem:[%s208] sm:$0x3] %v203
  %s210 = scalar_lea.vmem %s1, 290
  %211 = vst [vmem:[%s210] sm:$0x3] %v203
  %s212 = scalar_lea.vmem %s0, 16
  %s213 = scalar_lea.vmem %s212, 4
  %v214 = vld [vmem:[%s213] ss:$0 sm:$0xff]
  %s215 = scalar_lea.vmem %s1, 40
  %216 = vst [vmem:[%s215] sm:$0x3] %v214
  %s217 = scalar_lea.vmem %s1, 124
  %218 = vst [vmem:[%s217] sm:$0x3] %v214
  %s219 = scalar_lea.vmem %s1, 208
  %220 = vst [vmem:[%s219] sm:$0x3] %v214
  %s221 = scalar_lea.vmem %s1, 292
  %222 = vst [vmem:[%s221] sm:$0x3] %v214
  %s223 = scalar_lea.vmem %s0, 16
  %s224 = scalar_lea.vmem %s223, 5
  %v225 = vld [vmem:[%s224] ss:$0 sm:$0xff]
  %s226 = scalar_lea.vmem %s1, 42
  %227 = vst [vmem:[%s226] sm:$0x3] %v225
  %s228 = scalar_lea.vmem %s1, 126
  %229 = vst [vmem:[%s228] sm:$0x3] %v225
  %s230 = scalar_lea.vmem %s1, 210
  %231 = vst [vmem:[%s230] sm:$0x3] %v225
  %s232 = scalar_lea.vmem %s1, 294
  %233 = vst [vmem:[%s232] sm:$0x3] %v225
  %s234 = scalar_lea.vmem %s0, 16
  %s235 = scalar_lea.vmem %s234, 6
  %v236 = vld [vmem:[%s235] ss:$0 sm:$0xff]
  %s237 = scalar_lea.vmem %s1, 44
  %238 = vst [vmem:[%s237] sm:$0x3] %v236
  %s239 = scalar_lea.vmem %s1, 128
  %240 = vst [vmem:[%s239] sm:$0x3] %v236
  %s241 = scalar_lea.vmem %s1, 212
  %242 = vst [vmem:[%s241] sm:$0x3] %v236
  %s243 = scalar_lea.vmem %s1, 296
  %244 = vst [vmem:[%s243] sm:$0x3] %v236
  %s245 = scalar_lea.vmem %s0, 16
  %s246 = scalar_lea.vmem %s245, 7
  %v247 = vld [vmem:[%s246] ss:$0 sm:$0xff]
  %s248 = scalar_lea.vmem %s1, 46
  %249 = vst [vmem:[%s248] sm:$0x3] %v247
  %s250 = scalar_lea.vmem %s1, 130
  %251 = vst [vmem:[%s250] sm:$0x3] %v247
  %s252 = scalar_lea.vmem %s1, 214
  %253 = vst [vmem:[%s252] sm:$0x3] %v247
  %s254 = scalar_lea.vmem %s1, 298
  %255 = vst [vmem:[%s254] sm:$0x3] %v247
  %s256 = scalar_lea.vmem %s0, 24
  %v257 = vld [vmem:[%s256] ss:$0 sm:$0xff]
  %s258 = scalar_lea.vmem %s1, 48
  %259 = vst [vmem:[%s258] sm:$0x3] %v257
  %s260 = scalar_lea.vmem %s1, 132
  %261 = vst [vmem:[%s260] sm:$0x3] %v257
  %s262 = scalar_lea.vmem %s1, 216
  %263 = vst [vmem:[%s262] sm:$0x3] %v257
  %s264 = scalar_lea.vmem %s1, 300
  %265 = vst [vmem:[%s264] sm:$0x3] %v257
  %s266 = scalar_lea.vmem %s0, 24
  %s267 = scalar_lea.vmem %s266, 1
  %v268 = vld [vmem:[%s267] ss:$0 sm:$0xff]
  %s269 = scalar_lea.vmem %s1, 50
  %270 = vst [vmem:[%s269] sm:$0x3] %v268
  %s271 = scalar_lea.vmem %s1, 134
  %272 = vst [vmem:[%s271] sm:$0x3] %v268
  %s273 = scalar_lea.vmem %s1, 218
  %274 = vst [vmem:[%s273] sm:$0x3] %v268
  %s275 = scalar_lea.vmem %s1, 302
  %276 = vst [vmem:[%s275] sm:$0x3] %v268
  %s277 = scalar_lea.vmem %s0, 24
  %s278 = scalar_lea.vmem %s277, 2
  %v279 = vld [vmem:[%s278] ss:$0 sm:$0xff]
  %s280 = scalar_lea.vmem %s1, 52
  %281 = vst [vmem:[%s280] sm:$0x3] %v279
  %s282 = scalar_lea.vmem %s1, 136
  %283 = vst [vmem:[%s282] sm:$0x3] %v279
  %s284 = scalar_lea.vmem %s1, 220
  %285 = vst [vmem:[%s284] sm:$0x3] %v279
  %s286 = scalar_lea.vmem %s1, 304
  %287 = vst [vmem:[%s286] sm:$0x3] %v279
  %s288 = scalar_lea.vmem %s0, 24
  %s289 = scalar_lea.vmem %s288, 3
  %v290 = vld [vmem:[%s289] ss:$0 sm:$0xff]
  %s291 = scalar_lea.vmem %s1, 54
  %292 = vst [vmem:[%s291] sm:$0x3] %v290
  %s293 = scalar_lea.vmem %s1, 138
  %294 = vst [vmem:[%s293] sm:$0x3] %v290
  %s295 = scalar_lea.vmem %s1, 222
  %296 = vst [vmem:[%s295] sm:$0x3] %v290
  %s297 = scalar_lea.vmem %s1, 306
  %298 = vst [vmem:[%s297] sm:$0x3] %v290
  %s299 = scalar_lea.vmem %s0, 24
  %s300 = scalar_lea.vmem %s299, 4
  %v301 = vld [vmem:[%s300] ss:$0 sm:$0xff]
  %s302 = scalar_lea.vmem %s1, 56
  %303 = vst [vmem:[%s302] sm:$0x3] %v301
  %s304 = scalar_lea.vmem %s1, 140
  %305 = vst [vmem:[%s304] sm:$0x3] %v301
  %s306 = scalar_lea.vmem %s1, 224
  %307 = vst [vmem:[%s306] sm:$0x3] %v301
  %s308 = scalar_lea.vmem %s1, 308
  %309 = vst [vmem:[%s308] sm:$0x3] %v301
  %s310 = scalar_lea.vmem %s0, 24
  %s311 = scalar_lea.vmem %s310, 5
  %v312 = vld [vmem:[%s311] ss:$0 sm:$0xff]
  %s313 = scalar_lea.vmem %s1, 58
  %314 = vst [vmem:[%s313] sm:$0x3] %v312
  %s315 = scalar_lea.vmem %s1, 142
  %316 = vst [vmem:[%s315] sm:$0x3] %v312
  %s317 = scalar_lea.vmem %s1, 226
  %318 = vst [vmem:[%s317] sm:$0x3] %v312
  %s319 = scalar_lea.vmem %s1, 310
  %320 = vst [vmem:[%s319] sm:$0x3] %v312
  %s321 = scalar_lea.vmem %s0, 24
  %s322 = scalar_lea.vmem %s321, 6
  %v323 = vld [vmem:[%s322] ss:$0 sm:$0xff]
  %s324 = scalar_lea.vmem %s1, 60
  %325 = vst [vmem:[%s324] sm:$0x3] %v323
  %s326 = scalar_lea.vmem %s1, 144
  %327 = vst [vmem:[%s326] sm:$0x3] %v323
  %s328 = scalar_lea.vmem %s1, 228
  %329 = vst [vmem:[%s328] sm:$0x3] %v323
  %s330 = scalar_lea.vmem %s1, 312
  %331 = vst [vmem:[%s330] sm:$0x3] %v323
  %s332 = scalar_lea.vmem %s0, 24
  %s333 = scalar_lea.vmem %s332, 7
  %v334 = vld [vmem:[%s333] ss:$0 sm:$0xff]
  %s335 = scalar_lea.vmem %s1, 62
  %336 = vst [vmem:[%s335] sm:$0x3] %v334
  %s337 = scalar_lea.vmem %s1, 146
  %338 = vst [vmem:[%s337] sm:$0x3] %v334
  %s339 = scalar_lea.vmem %s1, 230
  %340 = vst [vmem:[%s339] sm:$0x3] %v334
  %s341 = scalar_lea.vmem %s1, 314
  %342 = vst [vmem:[%s341] sm:$0x3] %v334
  %s343 = scalar_lea.vmem %s0, 32
  %v344 = vld [vmem:[%s343] ss:$0 sm:$0xff]
  %s345 = scalar_lea.vmem %s1, 64
  %346 = vst [vmem:[%s345] sm:$0x3] %v344
  %s347 = scalar_lea.vmem %s1, 148
  %348 = vst [vmem:[%s347] sm:$0x3] %v344
  %s349 = scalar_lea.vmem %s1, 232
  %350 = vst [vmem:[%s349] sm:$0x3] %v344
  %s351 = scalar_lea.vmem %s1, 316
  %352 = vst [vmem:[%s351] sm:$0x3] %v344
  %s353 = scalar_lea.vmem %s0, 32
  %s354 = scalar_lea.vmem %s353, 1
  %v355 = vld [vmem:[%s354] ss:$0 sm:$0xff]
  %s356 = scalar_lea.vmem %s1, 66
  %357 = vst [vmem:[%s356] sm:$0x3] %v355
  %s358 = scalar_lea.vmem %s1, 150
  %359 = vst [vmem:[%s358] sm:$0x3] %v355
  %s360 = scalar_lea.vmem %s1, 234
  %361 = vst [vmem:[%s360] sm:$0x3] %v355
  %s362 = scalar_lea.vmem %s1, 318
  %363 = vst [vmem:[%s362] sm:$0x3] %v355
  %s364 = scalar_lea.vmem %s0, 32
  %s365 = scalar_lea.vmem %s364, 2
  %v366 = vld [vmem:[%s365] ss:$0 sm:$0xff]
  %s367 = scalar_lea.vmem %s1, 68
  %368 = vst [vmem:[%s367] sm:$0x3] %v366
  %s369 = scalar_lea.vmem %s1, 152
  %370 = vst [vmem:[%s369] sm:$0x3] %v366
  %s371 = scalar_lea.vmem %s1, 236
  %372 = vst [vmem:[%s371] sm:$0x3] %v366
  %s373 = scalar_lea.vmem %s1, 320
  %374 = vst [vmem:[%s373] sm:$0x3] %v366
  %s375 = scalar_lea.vmem %s0, 32
  %s376 = scalar_lea.vmem %s375, 3
  %v377 = vld [vmem:[%s376] ss:$0 sm:$0xff]
  %s378 = scalar_lea.vmem %s1, 70
  %379 = vst [vmem:[%s378] sm:$0x3] %v377
  %s380 = scalar_lea.vmem %s1, 154
  %381 = vst [vmem:[%s380] sm:$0x3] %v377
  %s382 = scalar_lea.vmem %s1, 238
  %383 = vst [vmem:[%s382] sm:$0x3] %v377
  %s384 = scalar_lea.vmem %s1, 322
  %385 = vst [vmem:[%s384] sm:$0x3] %v377
  %s386 = scalar_lea.vmem %s0, 32
  %s387 = scalar_lea.vmem %s386, 4
  %v388 = vld [vmem:[%s387] ss:$0 sm:$0xff]
  %s389 = scalar_lea.vmem %s1, 72
  %390 = vst [vmem:[%s389] sm:$0x3] %v388
  %s391 = scalar_lea.vmem %s1, 156
  %392 = vst [vmem:[%s391] sm:$0x3] %v388
  %s393 = scalar_lea.vmem %s1, 240
  %394 = vst [vmem:[%s393] sm:$0x3] %v388
  %s395 = scalar_lea.vmem %s1, 324
  %396 = vst [vmem:[%s395] sm:$0x3] %v388
  %s397 = scalar_lea.vmem %s0, 32
  %s398 = scalar_lea.vmem %s397, 5
  %v399 = vld [vmem:[%s398] ss:$0 sm:$0xff]
  %s400 = scalar_lea.vmem %s1, 74
  %401 = vst [vmem:[%s400] sm:$0x3] %v399
  %s402 = scalar_lea.vmem %s1, 158
  %403 = vst [vmem:[%s402] sm:$0x3] %v399
  %s404 = scalar_lea.vmem %s1, 242
  %405 = vst [vmem:[%s404] sm:$0x3] %v399
  %s406 = scalar_lea.vmem %s1, 326
  %407 = vst [vmem:[%s406] sm:$0x3] %v399
  %s408 = scalar_lea.vmem %s0, 32
  %s409 = scalar_lea.vmem %s408, 6
  %v410 = vld [vmem:[%s409] ss:$0 sm:$0xff]
  %s411 = scalar_lea.vmem %s1, 76
  %412 = vst [vmem:[%s411] sm:$0x3] %v410
  %s413 = scalar_lea.vmem %s1, 160
  %414 = vst [vmem:[%s413] sm:$0x3] %v410
  %s415 = scalar_lea.vmem %s1, 244
  %416 = vst [vmem:[%s415] sm:$0x3] %v410
  %s417 = scalar_lea.vmem %s1, 328
  %418 = vst [vmem:[%s417] sm:$0x3] %v410
  %s419 = scalar_lea.vmem %s0, 32
  %s420 = scalar_lea.vmem %s419, 7
  %v421 = vld [vmem:[%s420] ss:$0 sm:$0xff]
  %s422 = scalar_lea.vmem %s1, 78
  %423 = vst [vmem:[%s422] sm:$0x3] %v421
  %s424 = scalar_lea.vmem %s1, 162
  %425 = vst [vmem:[%s424] sm:$0x3] %v421
  %s426 = scalar_lea.vmem %s1, 246
  %427 = vst [vmem:[%s426] sm:$0x3] %v421
  %s428 = scalar_lea.vmem %s1, 330
  %429 = vst [vmem:[%s428] sm:$0x3] %v421
  %s430 = scalar_lea.vmem %s0, 40
  %v431 = vld [vmem:[%s430] ss:$0 sm:$0xff]
  %s432 = scalar_lea.vmem %s1, 80
  %433 = vst [vmem:[%s432] sm:$0x3] %v431
  %s434 = scalar_lea.vmem %s1, 164
  %435 = vst [vmem:[%s434] sm:$0x3] %v431
  %s436 = scalar_lea.vmem %s1, 248
  %437 = vst [vmem:[%s436] sm:$0x3] %v431
  %s438 = scalar_lea.vmem %s1, 332
  %439 = vst [vmem:[%s438] sm:$0x3] %v431
  %s440 = scalar_lea.vmem %s0, 40
  %s441 = scalar_lea.vmem %s440, 1
  %v442 = vld [vmem:[%s441] ss:$0 sm:$0xff]
  %s443 = scalar_lea.vmem %s1, 82
  %444 = vst [vmem:[%s443] sm:$0x3] %v442
  %s445 = scalar_lea.vmem %s1, 166
  %446 = vst [vmem:[%s445] sm:$0x3] %v442
  %s447 = scalar_lea.vmem %s1, 250
  %448 = vst [vmem:[%s447] sm:$0x3] %v442
  %s449 = scalar_lea.vmem %s1, 334
  %450 = vst [vmem:[%s449] sm:$0x3] %v442

// kernel: tile.9
$region0: #{tile.9}
  %s0 = inlined_call_operand.vmem [shape: f32[4,42,2,42], index: 0, kind: input, shape index: {}]
  %s1 = inlined_call_operand.vmem [shape: f32[168,84], index: 1, kind: output, shape index: {}]
  $region1: #{tile.9} parent=0
    #allocation0 [shape = 'u8[688128]{0}', space=vmem, size = 0xa8000, scoped, tag = 'scoped mem for input reshape']
    %s3 = ssub.s32 4, 1
    %s4 = scalar_lea.vmem %s0, 334
    %v5 = vld [vmem:[%s4] sm:%s3]
    %s6 = scalar_lea.vmem [#allocation0], 1336
    %7 = vst [vmem:[%s6] sm:%s3] %v5
    %s8 = scalar_lea.vmem %s0, 332
    %v9 = vld [vmem:[%s8] sm:%s3]
    %s10 = scalar_lea.vmem [#allocation0], 1328
    %11 = vst [vmem:[%s10] sm:%s3] %v9
    %s12 = scalar_lea.vmem %s0, 330
    %v13 = vld [vmem:[%s12] sm:%s3]
    %s14 = scalar_lea.vmem [#allocation0], 1320
    %15 = vst [vmem:[%s14] sm:%s3] %v13
    %s16 = scalar_lea.vmem %s0, 328
    %v17 = vld [vmem:[%s16] sm:%s3]
    %s18 = scalar_lea.vmem [#allocation0], 1312
    %19 = vst [vmem:[%s18] sm:%s3] %v17
    %s20 = scalar_lea.vmem %s0, 326
    %v21 = vld [vmem:[%s20] sm:%s3]
    %s22 = scalar_lea.vmem [#allocation0], 1304
    %23 = vst [vmem:[%s22] sm:%s3] %v21
    %s24 = scalar_lea.vmem %s0, 324
    %v25 = vld [vmem:[%s24] sm:%s3]
    %s26 = scalar_lea.vmem [#allocation0], 1296
    %27 = vst [vmem:[%s26] sm:%s3] %v25
    %s28 = scalar_lea.vmem %s0, 322
    %v29 = vld [vmem:[%s28] sm:%s3]
    %s30 = scalar_lea.vmem [#allocation0], 1288
    %31 = vst [vmem:[%s30] sm:%s3] %v29
    %s32 = scalar_lea.vmem %s0, 320
    %v33 = vld [vmem:[%s32] sm:%s3]
    %s34 = scalar_lea.vmem [#allocation0], 1280
    %35 = vst [vmem:[%s34] sm:%s3] %v33
    %s36 = scalar_lea.vmem %s0, 318
    %v37 = vld [vmem:[%s36] sm:%s3]
    %s38 = scalar_lea.vmem [#allocation0], 1272
    %39 = vst [vmem:[%s38] sm:%s3] %v37
    %s40 = scalar_lea.vmem %s0, 316
    %v41 = vld [vmem:[%s40] sm:%s3]
    %s42 = scalar_lea.vmem [#allocation0], 1264
    %43 = vst [vmem:[%s42] sm:%s3] %v41
    %s44 = scalar_lea.vmem %s0, 314
    %v45 = vld [vmem:[%s44] sm:%s3]
    %s46 = scalar_lea.vmem [#allocation0], 1256
    %47 = vst [vmem:[%s46] sm:%s3] %v45
    %s48 = scalar_lea.vmem %s0, 312
    %v49 = vld [vmem:[%s48] sm:%s3]
    %s50 = scalar_lea.vmem [#allocation0], 1248
    %51 = vst [vmem:[%s50] sm:%s3] %v49
    %s52 = scalar_lea.vmem %s0, 310
    %v53 = vld [vmem:[%s52] sm:%s3]
    %s54 = scalar_lea.vmem [#allocation0], 1240
    %55 = vst [vmem:[%s54] sm:%s3] %v53
    %s56 = scalar_lea.vmem %s0, 308
    %v57 = vld [vmem:[%s56] sm:%s3]
    %s58 = scalar_lea.vmem [#allocation0], 1232
    %59 = vst [vmem:[%s58] sm:%s3] %v57
    %s60 = scalar_lea.vmem %s0, 306
    %v61 = vld [vmem:[%s60] sm:%s3]
    %s62 = scalar_lea.vmem [#allocation0], 1224
    %63 = vst [vmem:[%s62] sm:%s3] %v61
    %s64 = scalar_lea.vmem %s0, 304
    %v65 = vld [vmem:[%s64] sm:%s3]
    %s66 = scalar_lea.vmem [#allocation0], 1216
    %67 = vst [vmem:[%s66] sm:%s3] %v65
    %s68 = scalar_lea.vmem %s0, 302
    %v69 = vld [vmem:[%s68] sm:%s3]
    %s70 = scalar_lea.vmem [#allocation0], 1208
    %71 = vst [vmem:[%s70] sm:%s3] %v69
    %s72 = scalar_lea.vmem %s0, 300
    %v73 = vld [vmem:[%s72] sm:%s3]
    %s74 = scalar_lea.vmem [#allocation0], 1200
    %75 = vst [vmem:[%s74] sm:%s3] %v73
    %s76 = scalar_lea.vmem %s0, 298
    %v77 = vld [vmem:[%s76] sm:%s3]
    %s78 = scalar_lea.vmem [#allocation0], 1192
    %79 = vst [vmem:[%s78] sm:%s3] %v77
    %s80 = scalar_lea.vmem %s0, 296
    %v81 = vld [vmem:[%s80] sm:%s3]
    %s82 = scalar_lea.vmem [#allocation0], 1184
    %83 = vst [vmem:[%s82] sm:%s3] %v81
    %s84 = scalar_lea.vmem %s0, 294
    %v85 = vld [vmem:[%s84] sm:%s3]
    %s86 = scalar_lea.vmem [#allocation0], 1176
    %87 = vst [vmem:[%s86] sm:%s3] %v85
    %s88 = scalar_lea.vmem %s0, 292
    %v89 = vld [vmem:[%s88] sm:%s3]
    %s90 = scalar_lea.vmem [#allocation0], 1168
    %91 = vst [vmem:[%s90] sm:%s3] %v89
    %s92 = scalar_lea.vmem %s0, 290
    %v93 = vld [vmem:[%s92] sm:%s3]
    %s94 = scalar_lea.vmem [#allocation0], 1160
    %95 = vst [vmem:[%s94] sm:%s3] %v93
    %s96 = scalar_lea.vmem %s0, 288
    %v97 = vld [vmem:[%s96] sm:%s3]
    %s98 = scalar_lea.vmem [#allocation0], 1152
    %99 = vst [vmem:[%s98] sm:%s3] %v97
    %s100 = scalar_lea.vmem %s0, 286
    %v101 = vld [vmem:[%s100] sm:%s3]
    %s102 = scalar_lea.vmem [#allocation0], 1144
    %103 = vst [vmem:[%s102] sm:%s3] %v101
    %s104 = scalar_lea.vmem %s0, 284
    %v105 = vld [vmem:[%s104] sm:%s3]
    %s106 = scalar_lea.vmem [#allocation0], 1136
    %107 = vst [vmem:[%s106] sm:%s3] %v105
    %s108 = scalar_lea.vmem %s0, 282
    %v109 = vld [vmem:[%s108] sm:%s3]
    %s110 = scalar_lea.vmem [#allocation0], 1128
    %111 = vst [vmem:[%s110] sm:%s3] %v109
    %s112 = scalar_lea.vmem %s0, 280
    %v113 = vld [vmem:[%s112] sm:%s3]
    %s114 = scalar_lea.vmem [#allocation0], 1120
    %115 = vst [vmem:[%s114] sm:%s3] %v113
    %s116 = scalar_lea.vmem %s0, 278
    %v117 = vld [vmem:[%s116] sm:%s3]
    %s118 = scalar_lea.vmem [#allocation0], 1112
    %119 = vst [vmem:[%s118] sm:%s3] %v117
    %s120 = scalar_lea.vmem %s0, 276
    %v121 = vld [vmem:[%s120] sm:%s3]
    %s122 = scalar_lea.vmem [#allocation0], 1104
    %123 = vst [vmem:[%s122] sm:%s3] %v121
    %s124 = scalar_lea.vmem %s0, 274
    %v125 = vld [vmem:[%s124] sm:%s3]
    %s126 = scalar_lea.vmem [#allocation0], 1096
    %127 = vst [vmem:[%s126] sm:%s3] %v125
    %s128 = scalar_lea.vmem %s0, 272
    %v129 = vld [vmem:[%s128] sm:%s3]
    %s130 = scalar_lea.vmem [#allocation0], 1088
    %131 = vst [vmem:[%s130] sm:%s3] %v129
    %s132 = scalar_lea.vmem %s0, 270
    %v133 = vld [vmem:[%s132] sm:%s3]
    %s134 = scalar_lea.vmem [#allocation0], 1080
    %135 = vst [vmem:[%s134] sm:%s3] %v133
    %s136 = scalar_lea.vmem %s0, 268
    %v137 = vld [vmem:[%s136] sm:%s3]
    %s138 = scalar_lea.vmem [#allocation0], 1072
    %139 = vst [vmem:[%s138] sm:%s3] %v137
    %s140 = scalar_lea.vmem %s0, 266
    %v141 = vld [vmem:[%s140] sm:%s3]
    %s142 = scalar_lea.vmem [#allocation0], 1064
    %143 = vst [vmem:[%s142] sm:%s3] %v141
    %s144 = scalar_lea.vmem %s0, 264
    %v145 = vld [vmem:[%s144] sm:%s3]
    %s146 = scalar_lea.vmem [#allocation0], 1056
    %147 = vst [vmem:[%s146] sm:%s3] %v145
    %s148 = scalar_lea.vmem %s0, 262
    %v149 = vld [vmem:[%s148] sm:%s3]
    %s150 = scalar_lea.vmem [#allocation0], 1048
    %151 = vst [vmem:[%s150] sm:%s3] %v149
    %s152 = scalar_lea.vmem %s0, 260
    %v153 = vld [vmem:[%s152] sm:%s3]
    %s154 = scalar_lea.vmem [#allocation0], 1040
    %155 = vst [vmem:[%s154] sm:%s3] %v153
    %s156 = scalar_lea.vmem %s0, 258
    %v157 = vld [vmem:[%s156] sm:%s3]
    %s158 = scalar_lea.vmem [#allocation0], 1032
    %159 = vst [vmem:[%s158] sm:%s3] %v157
    %s160 = scalar_lea.vmem %s0, 256
    %v161 = vld [vmem:[%s160] sm:%s3]
    %s162 = scalar_lea.vmem [#allocation0], 1024
    %163 = vst [vmem:[%s162] sm:%s3] %v161
    %s164 = scalar_lea.vmem %s0, 254
    %v165 = vld [vmem:[%s164] sm:%s3]
    %s166 = scalar_lea.vmem [#allocation0], 1016
    %167 = vst [vmem:[%s166] sm:%s3] %v165
    %s168 = scalar_lea.vmem %s0, 252
    %v169 = vld [vmem:[%s168] sm:%s3]
    %s170 = scalar_lea.vmem [#allocation0], 1008
    %171 = vst [vmem:[%s170] sm:%s3] %v169
    %s172 = scalar_lea.vmem %s0, 250
    %v173 = vld [vmem:[%s172] sm:%s3]
    %s174 = scalar_lea.vmem [#allocation0], 1000
    %175 = vst [vmem:[%s174] sm:%s3] %v173
    %s176 = scalar_lea.vmem %s0, 248
    %v177 = vld [vmem:[%s176] sm:%s3]
    %s178 = scalar_lea.vmem [#allocation0], 992
    %179 = vst [vmem:[%s178] sm:%s3] %v177
    %s180 = scalar_lea.vmem %s0, 246
    %v181 = vld [vmem:[%s180] sm:%s3]
    %s182 = scalar_lea.vmem [#allocation0], 984
    %183 = vst [vmem:[%s182] sm:%s3] %v181
    %s184 = scalar_lea.vmem %s0, 244
    %v185 = vld [vmem:[%s184] sm:%s3]
    %s186 = scalar_lea.vmem [#allocation0], 976
    %187 = vst [vmem:[%s186] sm:%s3] %v185
    %s188 = scalar_lea.vmem %s0, 242
    %v189 = vld [vmem:[%s188] sm:%s3]
    %s190 = scalar_lea.vmem [#allocation0], 968
    %191 = vst [vmem:[%s190] sm:%s3] %v189
    %s192 = scalar_lea.vmem %s0, 240
    %v193 = vld [vmem:[%s192] sm:%s3]
    %s194 = scalar_lea.vmem [#allocation0], 960
    %195 = vst [vmem:[%s194] sm:%s3] %v193
    %s196 = scalar_lea.vmem %s0, 238
    %v197 = vld [vmem:[%s196] sm:%s3]
    %s198 = scalar_lea.vmem [#allocation0], 952
    %199 = vst [vmem:[%s198] sm:%s3] %v197
    %s200 = scalar_lea.vmem %s0, 236
    %v201 = vld [vmem:[%s200] sm:%s3]
    %s202 = scalar_lea.vmem [#allocation0], 944
    %203 = vst [vmem:[%s202] sm:%s3] %v201
    %s204 = scalar_lea.vmem %s0, 234
    %v205 = vld [vmem:[%s204] sm:%s3]
    %s206 = scalar_lea.vmem [#allocation0], 936
    %207 = vst [vmem:[%s206] sm:%s3] %v205
    %s208 = scalar_lea.vmem %s0, 232
    %v209 = vld [vmem:[%s208] sm:%s3]
    %s210 = scalar_lea.vmem [#allocation0], 928
    %211 = vst [vmem:[%s210] sm:%s3] %v209
    %s212 = scalar_lea.vmem %s0, 230
    %v213 = vld [vmem:[%s212] sm:%s3]
    %s214 = scalar_lea.vmem [#allocation0], 920
    %215 = vst [vmem:[%s214] sm:%s3] %v213
    %s216 = scalar_lea.vmem %s0, 228
    %v217 = vld [vmem:[%s216] sm:%s3]
    %s218 = scalar_lea.vmem [#allocation0], 912
    %219 = vst [vmem:[%s218] sm:%s3] %v217
    %s220 = scalar_lea.vmem %s0, 226
    %v221 = vld [vmem:[%s220] sm:%s3]
    %s222 = scalar_lea.vmem [#allocation0], 904
    %223 = vst [vmem:[%s222] sm:%s3] %v221
    %s224 = scalar_lea.vmem %s0, 224
    %v225 = vld [vmem:[%s224] sm:%s3]
    %s226 = scalar_lea.vmem [#allocation0], 896
    %227 = vst [vmem:[%s226] sm:%s3] %v225
    %s228 = scalar_lea.vmem %s0, 222
    %v229 = vld [vmem:[%s228] sm:%s3]
    %s230 = scalar_lea.vmem [#allocation0], 888
    %231 = vst [vmem:[%s230] sm:%s3] %v229
    %s232 = scalar_lea.vmem %s0, 220
    %v233 = vld [vmem:[%s232] sm:%s3]
    %s234 = scalar_lea.vmem [#allocation0], 880
    %235 = vst [vmem:[%s234] sm:%s3] %v233
    %s236 = scalar_lea.vmem %s0, 218
    %v237 = vld [vmem:[%s236] sm:%s3]
    %s238 = scalar_lea.vmem [#allocation0], 872
    %239 = vst [vmem:[%s238] sm:%s3] %v237
    %s240 = scalar_lea.vmem %s0, 216
    %v241 = vld [vmem:[%s240] sm:%s3]
    %s242 = scalar_lea.vmem [#allocation0], 864
    %243 = vst [vmem:[%s242] sm:%s3] %v241
    %s244 = scalar_lea.vmem %s0, 214
    %v245 = vld [vmem:[%s244] sm:%s3]
    %s246 = scalar_lea.vmem [#allocation0], 856
    %247 = vst [vmem:[%s246] sm:%s3] %v245
    %s248 = scalar_lea.vmem %s0, 212
    %v249 = vld [vmem:[%s248] sm:%s3]
    %s250 = scalar_lea.vmem [#allocation0], 848
    %251 = vst [vmem:[%s250] sm:%s3] %v249
    %s252 = scalar_lea.vmem %s0, 210
    %v253 = vld [vmem:[%s252] sm:%s3]
    %s254 = scalar_lea.vmem [#allocation0], 840
    %255 = vst [vmem:[%s254] sm:%s3] %v253
    %s256 = scalar_lea.vmem %s0, 208
    %v257 = vld [vmem:[%s256] sm:%s3]
    %s258 = scalar_lea.vmem [#allocation0], 832
    %259 = vst [vmem:[%s258] sm:%s3] %v257
    %s260 = scalar_lea.vmem %s0, 206
    %v261 = vld [vmem:[%s260] sm:%s3]
    %s262 = scalar_lea.vmem [#allocation0], 824
    %263 = vst [vmem:[%s262] sm:%s3] %v261
    %s264 = scalar_lea.vmem %s0, 204
    %v265 = vld [vmem:[%s264] sm:%s3]
    %s266 = scalar_lea.vmem [#allocation0], 816
    %267 = vst [vmem:[%s266] sm:%s3] %v265
    %s268 = scalar_lea.vmem %s0, 202
    %v269 = vld [vmem:[%s268] sm:%s3]
    %s270 = scalar_lea.vmem [#allocation0], 808
    %271 = vst [vmem:[%s270] sm:%s3] %v269
    %s272 = scalar_lea.vmem %s0, 200
    %v273 = vld [vmem:[%s272] sm:%s3]
    %s274 = scalar_lea.vmem [#allocation0], 800
    %275 = vst [vmem:[%s274] sm:%s3] %v273
    %s276 = scalar_lea.vmem %s0, 198
    %v277 = vld [vmem:[%s276] sm:%s3]
    %s278 = scalar_lea.vmem [#allocation0], 792
    %279 = vst [vmem:[%s278] sm:%s3] %v277
    %s280 = scalar_lea.vmem %s0, 196
    %v281 = vld [vmem:[%s280] sm:%s3]
    %s282 = scalar_lea.vmem [#allocation0], 784
    %283 = vst [vmem:[%s282] sm:%s3] %v281
    %s284 = scalar_lea.vmem %s0, 194
    %v285 = vld [vmem:[%s284] sm:%s3]
    %s286 = scalar_lea.vmem [#allocation0], 776
    %287 = vst [vmem:[%s286] sm:%s3] %v285
    %s288 = scalar_lea.vmem %s0, 192
    %v289 = vld [vmem:[%s288] sm:%s3]
    %s290 = scalar_lea.vmem [#allocation0], 768
    %291 = vst [vmem:[%s290] sm:%s3] %v289
    %s292 = scalar_lea.vmem %s0, 190
    %v293 = vld [vmem:[%s292] sm:%s3]
    %s294 = scalar_lea.vmem [#allocation0], 760
    %295 = vst [vmem:[%s294] sm:%s3] %v293
    %s296 = scalar_lea.vmem %s0, 188
    %v297 = vld [vmem:[%s296] sm:%s3]
    %s298 = scalar_lea.vmem [#allocation0], 752
    %299 = vst [vmem:[%s298] sm:%s3] %v297
    %s300 = scalar_lea.vmem %s0, 186
    %v301 = vld [vmem:[%s300] sm:%s3]
    %s302 = scalar_lea.vmem [#allocation0], 744
    %303 = vst [vmem:[%s302] sm:%s3] %v301
    %s304 = scalar_lea.vmem %s0, 184
    %v305 = vld [vmem:[%s304] sm:%s3]
    %s306 = scalar_lea.vmem [#allocation0], 736
    %307 = vst [vmem:[%s306] sm:%s3] %v305
    %s308 = scalar_lea.vmem %s0, 182
    %v309 = vld [vmem:[%s308] sm:%s3]
    %s310 = scalar_lea.vmem [#allocation0], 728
    %311 = vst [vmem:[%s310] sm:%s3] %v309
    %s312 = scalar_lea.vmem %s0, 180
    %v313 = vld [vmem:[%s312] sm:%s3]
    %s314 = scalar_lea.vmem [#allocation0], 720
    %315 = vst [vmem:[%s314] sm:%s3] %v313
    %s316 = scalar_lea.vmem %s0, 178
    %v317 = vld [vmem:[%s316] sm:%s3]
    %s318 = scalar_lea.vmem [#allocation0], 712
    %319 = vst [vmem:[%s318] sm:%s3] %v317
    %s320 = scalar_lea.vmem %s0, 176
    %v321 = vld [vmem:[%s320] sm:%s3]
    %s322 = scalar_lea.vmem [#allocation0], 704
    %323 = vst [vmem:[%s322] sm:%s3] %v321
    %s324 = scalar_lea.vmem %s0, 174
    %v325 = vld [vmem:[%s324] sm:%s3]
    %s326 = scalar_lea.vmem [#allocation0], 696
    %327 = vst [vmem:[%s326] sm:%s3] %v325
    %s328 = scalar_lea.vmem %s0, 172
    %v329 = vld [vmem:[%s328] sm:%s3]
    %s330 = scalar_lea.vmem [#allocation0], 688
    %331 = vst [vmem:[%s330] sm:%s3] %v329
    %s332 = scalar_lea.vmem %s0, 170
    %v333 = vld [vmem:[%s332] sm:%s3]
    %s334 = scalar_lea.vmem [#allocation0], 680
    %335 = vst [vmem:[%s334] sm:%s3] %v333
    %s336 = scalar_lea.vmem %s0, 168
    %v337 = vld [vmem:[%s336] sm:%s3]
    %s338 = scalar_lea.vmem [#allocation0], 672
    %339 = vst [vmem:[%s338] sm:%s3] %v337
    %s340 = scalar_lea.vmem %s0, 166
    %v341 = vld [vmem:[%s340] sm:%s3]
    %s342 = scalar_lea.vmem [#allocation0], 664
    %343 = vst [vmem:[%s342] sm:%s3] %v341
    %s344 = scalar_lea.vmem %s0, 164
    %v345 = vld [vmem:[%s344] sm:%s3]
    %s346 = scalar_lea.vmem [#allocation0], 656
    %347 = vst [vmem:[%s346] sm:%s3] %v345
    %s348 = scalar_lea.vmem %s0, 162
    %v349 = vld [vmem:[%s348] sm:%s3]
    %s350 = scalar_lea.vmem [#allocation0], 648
    %351 = vst [vmem:[%s350] sm:%s3] %v349
    %s352 = scalar_lea.vmem %s0, 160
    %v353 = vld [vmem:[%s352] sm:%s3]
    %s354 = scalar_lea.vmem [#allocation0], 640
    %355 = vst [vmem:[%s354] sm:%s3] %v353
    %s356 = scalar_lea.vmem %s0, 158
    %v357 = vld [vmem:[%s356] sm:%s3]
    %s358 = scalar_lea.vmem [#allocation0], 632
    %359 = vst [vmem:[%s358] sm:%s3] %v357
    %s360 = scalar_lea.vmem %s0, 156
    %v361 = vld [vmem:[%s360] sm:%s3]
    %s362 = scalar_lea.vmem [#allocation0], 624
    %363 = vst [vmem:[%s362] sm:%s3] %v361
    %s364 = scalar_lea.vmem %s0, 154
    %v365 = vld [vmem:[%s364] sm:%s3]
    %s366 = scalar_lea.vmem [#allocation0], 616
    %367 = vst [vmem:[%s366] sm:%s3] %v365
    %s368 = scalar_lea.vmem %s0, 152
    %v369 = vld [vmem:[%s368] sm:%s3]
    %s370 = scalar_lea.vmem [#allocation0], 608
    %371 = vst [vmem:[%s370] sm:%s3] %v369
    %s372 = scalar_lea.vmem %s0, 150
    %v373 = vld [vmem:[%s372] sm:%s3]
    %s374 = scalar_lea.vmem [#allocation0], 600
    %375 = vst [vmem:[%s374] sm:%s3] %v373
    %s376 = scalar_lea.vmem %s0, 148
    %v377 = vld [vmem:[%s376] sm:%s3]
    %s378 = scalar_lea.vmem [#allocation0], 592
    %379 = vst [vmem:[%s378] sm:%s3] %v377
    %s380 = scalar_lea.vmem %s0, 146
    %v381 = vld [vmem:[%s380] sm:%s3]
    %s382 = scalar_lea.vmem [#allocation0], 584
    %383 = vst [vmem:[%s382] sm:%s3] %v381
    %s384 = scalar_lea.vmem %s0, 144
    %v385 = vld [vmem:[%s384] sm:%s3]
    %s386 = scalar_lea.vmem [#allocation0], 576
    %387 = vst [vmem:[%s386] sm:%s3] %v385
    %s388 = scalar_lea.vmem %s0, 142
    %v389 = vld [vmem:[%s388] sm:%s3]
    %s390 = scalar_lea.vmem [#allocation0], 568
    %391 = vst [vmem:[%s390] sm:%s3] %v389
    %s392 = scalar_lea.vmem %s0, 140
    %v393 = vld [vmem:[%s392] sm:%s3]
    %s394 = scalar_lea.vmem [#allocation0], 560
    %395 = vst [vmem:[%s394] sm:%s3] %v393
    %s396 = scalar_lea.vmem %s0, 138
    %v397 = vld [vmem:[%s396] sm:%s3]
    %s398 = scalar_lea.vmem [#allocation0], 552
    %399 = vst [vmem:[%s398] sm:%s3] %v397
    %s400 = scalar_lea.vmem %s0, 136
    %v401 = vld [vmem:[%s400] sm:%s3]
    %s402 = scalar_lea.vmem [#allocation0], 544
    %403 = vst [vmem:[%s402] sm:%s3] %v401
    %s404 = scalar_lea.vmem %s0, 134
    %v405 = vld [vmem:[%s404] sm:%s3]
    %s406 = scalar_lea.vmem [#allocation0], 536
    %407 = vst [vmem:[%s406] sm:%s3] %v405
    %s408 = scalar_lea.vmem %s0, 132
    %v409 = vld [vmem:[%s408] sm:%s3]
    %s410 = scalar_lea.vmem [#allocation0], 528
    %411 = vst [vmem:[%s410] sm:%s3] %v409
    %s412 = scalar_lea.vmem %s0, 130
    %v413 = vld [vmem:[%s412] sm:%s3]
    %s414 = scalar_lea.vmem [#allocation0], 520
    %415 = vst [vmem:[%s414] sm:%s3] %v413
    %s416 = scalar_lea.vmem %s0, 128
    %v417 = vld [vmem:[%s416] sm:%s3]
    %s418 = scalar_lea.vmem [#allocation0], 512
    %419 = vst [vmem:[%s418] sm:%s3] %v417
    %s420 = scalar_lea.vmem %s0, 126
    %v421 = vld [vmem:[%s420] sm:%s3]
    %s422 = scalar_lea.vmem [#allocation0], 504
    %423 = vst [vmem:[%s422] sm:%s3] %v421
    %s424 = scalar_lea.vmem %s0, 124
    %v425 = vld [vmem:[%s424] sm:%s3]
    %s426 = scalar_lea.vmem [#allocation0], 496
    %427 = vst [vmem:[%s426] sm:%s3] %v425
    %s428 = scalar_lea.vmem %s0, 122
    %v429 = vld [vmem:[%s428] sm:%s3]
    %s430 = scalar_lea.vmem [#allocation0], 488
    %431 = vst [vmem:[%s430] sm:%s3] %v429
    %s432 = scalar_lea.vmem %s0, 120
    %v433 = vld [vmem:[%s432] sm:%s3]
    %s434 = scalar_lea.vmem [#allocation0], 480
    %435 = vst [vmem:[%s434] sm:%s3] %v433
    %s436 = scalar_lea.vmem %s0, 118
    %v437 = vld [vmem:[%s436] sm:%s3]
    %s438 = scalar_lea.vmem [#allocation0], 472
    %439 = vst [vmem:[%s438] sm:%s3] %v437
    %s440 = scalar_lea.vmem %s0, 116
    %v441 = vld [vmem:[%s440] sm:%s3]
    %s442 = scalar_lea.vmem [#allocation0], 464
    %443 = vst [vmem:[%s442] sm:%s3] %v441
    %s444 = scalar_lea.vmem %s0, 114
    %v445 = vld [vmem:[%s444] sm:%s3]
    %s446 = scalar_lea.vmem [#allocation0], 456
    %447 = vst [vmem:[%s446] sm:%s3] %v445
    %s448 = scalar_lea.vmem %s0, 112
    %v449 = vld [vmem:[%s448] sm:%s3]
    %s450 = scalar_lea.vmem [#allocation0], 448
    %451 = vst [vmem:[%s450] sm:%s3] %v449
    %s452 = scalar_lea.vmem %s0, 110
    %v453 = vld [vmem:[%s452] sm:%s3]
    %s454 = scalar_lea.vmem [#allocation0], 440
    %455 = vst [vmem:[%s454] sm:%s3] %v453
    %s456 = scalar_lea.vmem %s0, 108
    %v457 = vld [vmem:[%s456] sm:%s3]
    %s458 = scalar_lea.vmem [#allocation0], 432
    %459 = vst [vmem:[%s458] sm:%s3] %v457
    %s460 = scalar_lea.vmem %s0, 106
    %v461 = vld [vmem:[%s460] sm:%s3]
    %s462 = scalar_lea.vmem [#allocation0], 424
    %463 = vst [vmem:[%s462] sm:%s3] %v461
    %s464 = scalar_lea.vmem %s0, 104
    %v465 = vld [vmem:[%s464] sm:%s3]
    %s466 = scalar_lea.vmem [#allocation0], 416
    %467 = vst [vmem:[%s466] sm:%s3] %v465
    %s468 = scalar_lea.vmem %s0, 102
    %v469 = vld [vmem:[%s468] sm:%s3]
    %s470 = scalar_lea.vmem [#allocation0], 408
    %471 = vst [vmem:[%s470] sm:%s3] %v469
    %s472 = scalar_lea.vmem %s0, 100
    %v473 = vld [vmem:[%s472] sm:%s3]
    %s474 = scalar_lea.vmem [#allocation0], 400
    %475 = vst [vmem:[%s474] sm:%s3] %v473
    %s476 = scalar_lea.vmem %s0, 98
    %v477 = vld [vmem:[%s476] sm:%s3]
    %s478 = scalar_lea.vmem [#allocation0], 392
    %479 = vst [vmem:[%s478] sm:%s3] %v477
    %s480 = scalar_lea.vmem %s0, 96
    %v481 = vld [vmem:[%s480] sm:%s3]
    %s482 = scalar_lea.vmem [#allocation0], 384
    %483 = vst [vmem:[%s482] sm:%s3] %v481
    %s484 = scalar_lea.vmem %s0, 94
    %v485 = vld [vmem:[%s484] sm:%s3]
    %s486 = scalar_lea.vmem [#allocation0], 376
    %487 = vst [vmem:[%s486] sm:%s3] %v485
    %s488 = scalar_lea.vmem %s0, 92
    %v489 = vld [vmem:[%s488] sm:%s3]
    %s490 = scalar_lea.vmem [#allocation0], 368
    %491 = vst [vmem:[%s490] sm:%s3] %v489
    %s492 = scalar_lea.vmem %s0, 90
    %v493 = vld [vmem:[%s492] sm:%s3]
    %s494 = scalar_lea.vmem [#allocation0], 360
    %495 = vst [vmem:[%s494] sm:%s3] %v493
    %s496 = scalar_lea.vmem %s0, 88
    %v497 = vld [vmem:[%s496] sm:%s3]
    %s498 = scalar_lea.vmem [#allocation0], 352
    %499 = vst [vmem:[%s498] sm:%s3] %v497
    %s500 = scalar_lea.vmem %s0, 86
    %v501 = vld [vmem:[%s500] sm:%s3]
    %s502 = scalar_lea.vmem [#allocation0], 344
    %503 = vst [vmem:[%s502] sm:%s3] %v501
    %s504 = scalar_lea.vmem %s0, 84
    %v505 = vld [vmem:[%s504] sm:%s3]
    %s506 = scalar_lea.vmem [#allocation0], 336
    %507 = vst [vmem:[%s506] sm:%s3] %v505
    %s508 = scalar_lea.vmem %s0, 82
    %v509 = vld [vmem:[%s508] sm:%s3]
    %s510 = scalar_lea.vmem [#allocation0], 328
    %511 = vst [vmem:[%s510] sm:%s3] %v509
    %s512 = scalar_lea.vmem %s0, 80
    %v513 = vld [vmem:[%s512] sm:%s3]
    %s514 = scalar_lea.vmem [#allocation0], 320
    %515 = vst [vmem:[%s514] sm:%s3] %v513
    %s516 = scalar_lea.vmem %s0, 78
    %v517 = vld [vmem:[%s516] sm:%s3]
    %s518 = scalar_lea.vmem [#allocation0], 312
    %519 = vst [vmem:[%s518] sm:%s3] %v517
    %s520 = scalar_lea.vmem %s0, 76
    %v521 = vld [vmem:[%s520] sm:%s3]
    %s522 = scalar_lea.vmem [#allocation0], 304
    %523 = vst [vmem:[%s522] sm:%s3] %v521
    %s524 = scalar_lea.vmem %s0, 74
    %v525 = vld [vmem:[%s524] sm:%s3]
    %s526 = scalar_lea.vmem [#allocation0], 296
    %527 = vst [vmem:[%s526] sm:%s3] %v525
    %s528 = scalar_lea.vmem %s0, 72
    %v529 = vld [vmem:[%s528] sm:%s3]
    %s530 = scalar_lea.vmem [#allocation0], 288
    %531 = vst [vmem:[%s530] sm:%s3] %v529
    %s532 = scalar_lea.vmem %s0, 70
    %v533 = vld [vmem:[%s532] sm:%s3]
    %s534 = scalar_lea.vmem [#allocation0], 280
    %535 = vst [vmem:[%s534] sm:%s3] %v533
    %s536 = scalar_lea.vmem %s0, 68
    %v537 = vld [vmem:[%s536] sm:%s3]
    %s538 = scalar_lea.vmem [#allocation0], 272
    %539 = vst [vmem:[%s538] sm:%s3] %v537
    %s540 = scalar_lea.vmem %s0, 66
    %v541 = vld [vmem:[%s540] sm:%s3]
    %s542 = scalar_lea.vmem [#allocation0], 264
    %543 = vst [vmem:[%s542] sm:%s3] %v541
    %s544 = scalar_lea.vmem %s0, 64
    %v545 = vld [vmem:[%s544] sm:%s3]
    %s546 = scalar_lea.vmem [#allocation0], 256
    %547 = vst [vmem:[%s546] sm:%s3] %v545
    %s548 = scalar_lea.vmem %s0, 62
    %v549 = vld [vmem:[%s548] sm:%s3]
    %s550 = scalar_lea.vmem [#allocation0], 248
    %551 = vst [vmem:[%s550] sm:%s3] %v549
    %s552 = scalar_lea.vmem %s0, 60
    %v553 = vld [vmem:[%s552] sm:%s3]
    %s554 = scalar_lea.vmem [#allocation0], 240
    %555 = vst [vmem:[%s554] sm:%s3] %v553
    %s556 = scalar_lea.vmem %s0, 58
    %v557 = vld [vmem:[%s556] sm:%s3]
    %s558 = scalar_lea.vmem [#allocation0], 232
    %559 = vst [vmem:[%s558] sm:%s3] %v557
    %s560 = scalar_lea.vmem %s0, 56
    %v561 = vld [vmem:[%s560] sm:%s3]
    %s562 = scalar_lea.vmem [#allocation0], 224
    %563 = vst [vmem:[%s562] sm:%s3] %v561
    %s564 = scalar_lea.vmem %s0, 54
    %v565 = vld [vmem:[%s564] sm:%s3]
    %s566 = scalar_lea.vmem [#allocation0], 216
    %567 = vst [vmem:[%s566] sm:%s3] %v565
    %s568 = scalar_lea.vmem %s0, 52
    %v569 = vld [vmem:[%s568] sm:%s3]
    %s570 = scalar_lea.vmem [#allocation0], 208
    %571 = vst [vmem:[%s570] sm:%s3] %v569
    %s572 = scalar_lea.vmem %s0, 50
    %v573 = vld [vmem:[%s572] sm:%s3]
    %s574 = scalar_lea.vmem [#allocation0], 200
    %575 = vst [vmem:[%s574] sm:%s3] %v573
    %s576 = scalar_lea.vmem %s0, 48
    %v577 = vld [vmem:[%s576] sm:%s3]
    %s578 = scalar_lea.vmem [#allocation0], 192
    %579 = vst [vmem:[%s578] sm:%s3] %v577
    %s580 = scalar_lea.vmem %s0, 46
    %v581 = vld [vmem:[%s580] sm:%s3]
    %s582 = scalar_lea.vmem [#allocation0], 184
    %583 = vst [vmem:[%s582] sm:%s3] %v581
    %s584 = scalar_lea.vmem %s0, 44
    %v585 = vld [vmem:[%s584] sm:%s3]
    %s586 = scalar_lea.vmem [#allocation0], 176
    %587 = vst [vmem:[%s586] sm:%s3] %v585
    %s588 = scalar_lea.vmem %s0, 42
    %v589 = vld [vmem:[%s588] sm:%s3]
    %s590 = scalar_lea.vmem [#allocation0], 168
    %591 = vst [vmem:[%s590] sm:%s3] %v589
    %s592 = scalar_lea.vmem %s0, 40
    %v593 = vld [vmem:[%s592] sm:%s3]
    %s594 = scalar_lea.vmem [#allocation0], 160
    %595 = vst [vmem:[%s594] sm:%s3] %v593
    %s596 = scalar_lea.vmem %s0, 38
    %v597 = vld [vmem:[%s596] sm:%s3]
    %s598 = scalar_lea.vmem [#allocation0], 152
    %599 = vst [vmem:[%s598] sm:%s3] %v597
    %s600 = scalar_lea.vmem %s0, 36
    %v601 = vld [vmem:[%s600] sm:%s3]
    %s602 = scalar_lea.vmem [#allocation0], 144
    %603 = vst [vmem:[%s602] sm:%s3] %v601
    %s604 = scalar_lea.vmem %s0, 34
    %v605 = vld [vmem:[%s604] sm:%s3]
    %s606 = scalar_lea.vmem [#allocation0], 136
    %607 = vst [vmem:[%s606] sm:%s3] %v605
    %s608 = scalar_lea.vmem %s0, 32
    %v609 = vld [vmem:[%s608] sm:%s3]
    %s610 = scalar_lea.vmem [#allocation0], 128
    %611 = vst [vmem:[%s610] sm:%s3] %v609
    %s612 = scalar_lea.vmem %s0, 30
    %v613 = vld [vmem:[%s612] sm:%s3]
    %s614 = scalar_lea.vmem [#allocation0], 120
    %615 = vst [vmem:[%s614] sm:%s3] %v613
    %s616 = scalar_lea.vmem %s0, 28
    %v617 = vld [vmem:[%s616] sm:%s3]
    %s618 = scalar_lea.vmem [#allocation0], 112
    %619 = vst [vmem:[%s618] sm:%s3] %v617
    %s620 = scalar_lea.vmem %s0, 26
    %v621 = vld [vmem:[%s620] sm:%s3]
    %s622 = scalar_lea.vmem [#allocation0], 104
    %623 = vst [vmem:[%s622] sm:%s3] %v621
    %s624 = scalar_lea.vmem %s0, 24
    %v625 = vld [vmem:[%s624] sm:%s3]
    %s626 = scalar_lea.vmem [#allocation0], 96
    %627 = vst [vmem:[%s626] sm:%s3] %v625
    %s628 = scalar_lea.vmem %s0, 22
    %v629 = vld [vmem:[%s628] sm:%s3]
    %s630 = scalar_lea.vmem [#allocation0], 88
    %631 = vst [vmem:[%s630] sm:%s3] %v629
    %s632 = scalar_lea.vmem %s0, 20
    %v633 = vld [vmem:[%s632] sm:%s3]
    %s634 = scalar_lea.vmem [#allocation0], 80
    %635 = vst [vmem:[%s634] sm:%s3] %v633
    %s636 = scalar_lea.vmem %s0, 18
    %v637 = vld [vmem:[%s636] sm:%s3]
    %s638 = scalar_lea.vmem [#allocation0], 72
    %639 = vst [vmem:[%s638] sm:%s3] %v637
    %s640 = scalar_lea.vmem %s0, 16
    %v641 = vld [vmem:[%s640] sm:%s3]
    %s642 = scalar_lea.vmem [#allocation0], 64
    %643 = vst [vmem:[%s642] sm:%s3] %v641
    %s644 = scalar_lea.vmem %s0, 14
    %v645 = vld [vmem:[%s644] sm:%s3]
    %s646 = scalar_lea.vmem [#allocation0], 56
    %647 = vst [vmem:[%s646] sm:%s3] %v645
    %s648 = scalar_lea.vmem %s0, 12
    %v649 = vld [vmem:[%s648] sm:%s3]
    %s650 = scalar_lea.vmem [#allocation0], 48
    %651 = vst [vmem:[%s650] sm:%s3] %v649
    %s652 = scalar_lea.vmem %s0, 10
    %v653 = vld [vmem:[%s652] sm:%s3]
    %s654 = scalar_lea.vmem [#allocation0], 40
    %655 = vst [vmem:[%s654] sm:%s3] %v653
    %s656 = scalar_lea.vmem %s0, 8
    %v657 = vld [vmem:[%s656] sm:%s3]
    %s658 = scalar_lea.vmem [#allocation0], 32
    %659 = vst [vmem:[%s658] sm:%s3] %v657
    %s660 = scalar_lea.vmem %s0, 6
    %v661 = vld [vmem:[%s660] sm:%s3]
    %s662 = scalar_lea.vmem [#allocation0], 24
    %663 = vst [vmem:[%s662] sm:%s3] %v661
    %s664 = scalar_lea.vmem %s0, 4
    %v665 = vld [vmem:[%s664] sm:%s3]
    %s666 = scalar_lea.vmem [#allocation0], 16
    %667 = vst [vmem:[%s666] sm:%s3] %v665
    %s668 = scalar_lea.vmem %s0, 2
    %v669 = vld [vmem:[%s668] sm:%s3]
    %s670 = scalar_lea.vmem [#allocation0], 8
    %671 = vst [vmem:[%s670] sm:%s3] %v669
    %v672 = vld [vmem:[%s0] sm:%s3]
    %673 = vst [vmem:[#allocation0] sm:%s3] %v672
    %v674 = vld [vmem:[#allocation0] ss:$8 sm:$0xf]
    %v675 = vld [vmem:[#allocation0] ss:$8 sm:$0xf0]
    %vm676 = vcmask 1047556
    %v677 = vsel %vm676, %v675, %v674
    %vm678 = vcmask 343040
    %679 = vst.msk [vmem:[%s1] sm:$0xff] %vm678, %v677
    %s680 = scalar_lea.vmem [#allocation0], 64
    %v681 = vld [vmem:[%s680] ss:$8 sm:$0xf]
    %s682 = scalar_lea.vmem [#allocation0], 64
    %v683 = vld [vmem:[%s682] ss:$8 sm:$0xf0]
    %vm684 = vcmask 1047556
    %v685 = vsel %vm684, %v683, %v681
    %vm686 = vcmask 343040
    %s687 = scalar_lea.vmem %s1, 8
    %688 = vst.msk [vmem:[%s687] sm:$0xff] %vm686, %v685
    %s689 = scalar_lea.vmem [#allocation0], 128
    %v690 = vld [vmem:[%s689] ss:$8 sm:$0xf]
    %s691 = scalar_lea.vmem [#allocation0], 128
    %v692 = vld [vmem:[%s691] ss:$8 sm:$0xf0]
    %vm693 = vcmask 1047556
    %v694 = vsel %vm693, %v692, %v690
    %vm695 = vcmask 343040
    %s696 = scalar_lea.vmem %s1, 16
    %697 = vst.msk [vmem:[%s696] sm:$0xff] %vm695, %v694
    %s698 = scalar_lea.vmem [#allocation0], 192
    %v699 = vld [vmem:[%s698] ss:$8 sm:$0xf]
    %s700 = scalar_lea.vmem [#allocation0], 192
    %v701 = vld [vmem:[%s700] ss:$8 sm:$0xf0]
    %vm702 = vcmask 1047556
    %v703 = vsel %vm702, %v701, %v699
    %vm704 = vcmask 343040
    %s705 = scalar_lea.vmem %s1, 24
    %706 = vst.msk [vmem:[%s705] sm:$0xff] %vm704, %v703
    %s707 = scalar_lea.vmem [#allocation0], 256
    %v708 = vld [vmem:[%s707] ss:$8 sm:$0xf]
    %s709 = scalar_lea.vmem [#allocation0], 256
    %v710 = vld [vmem:[%s709] ss:$8 sm:$0xf0]
    %vm711 = vcmask 1047556
    %v712 = vsel %vm711, %v710, %v708
    %vm713 = vcmask 343040
    %s714 = scalar_lea.vmem %s1, 32
    %715 = vst.msk [vmem:[%s714] sm:$0xff] %vm713, %v712
    %s716 = scalar_lea.vmem [#allocation0], 320
    %v717 = vld [vmem:[%s716] ss:$8 sm:$0xf]
    %s718 = scalar_lea.vmem [#allocation0], 320
    %v719 = vld [vmem:[%s718] ss:$8 sm:$0xf0]
    %vm720 = vcmask 1047556
    %v721 = vsel %vm720, %v719, %v717
    %vm722 = vcmask 343040
    %s723 = scalar_lea.vmem %s1, 40
    %724 = vst.msk [vmem:[%s723] sm:$0xff] %vm722, %v721
    %s725 = scalar_lea.vmem [#allocation0], 384
    %v726 = vld [vmem:[%s725] ss:$8 sm:$0xf]
    %s727 = scalar_lea.vmem [#allocation0], 384
    %v728 = vld [vmem:[%s727] ss:$8 sm:$0xf0]
    %vm729 = vcmask 1047556
    %v730 = vsel %vm729, %v728, %v726
    %vm731 = vcmask 343040
    %s732 = scalar_lea.vmem %s1, 48
    %733 = vst.msk [vmem:[%s732] sm:$0xff] %vm731, %v730
    %s734 = scalar_lea.vmem [#allocation0], 448
    %v735 = vld [vmem:[%s734] ss:$8 sm:$0xf]
    %s736 = scalar_lea.vmem [#allocation0], 448
    %v737 = vld [vmem:[%s736] ss:$8 sm:$0xf0]
    %vm738 = vcmask 1047556
    %v739 = vsel %vm738, %v737, %v735
    %vm740 = vcmask 343040
    %s741 = scalar_lea.vmem %s1, 56
    %742 = vst.msk [vmem:[%s741] sm:$0xff] %vm740, %v739
    %s743 = scalar_lea.vmem [#allocation0], 512
    %v744 = vld [vmem:[%s743] ss:$8 sm:$0xf]
    %s745 = scalar_lea.vmem [#allocation0], 512
    %v746 = vld [vmem:[%s745] ss:$8 sm:$0xf0]
    %vm747 = vcmask 1047556
    %v748 = vsel %vm747, %v746, %v744
    %vm749 = vcmask 343040
    %s750 = scalar_lea.vmem %s1, 64
    %751 = vst.msk [vmem:[%s750] sm:$0xff] %vm749, %v748
    %s752 = scalar_lea.vmem [#allocation0], 576
    %v753 = vld [vmem:[%s752] ss:$8 sm:$0xf]
    %s754 = scalar_lea.vmem [#allocation0], 576
    %v755 = vld [vmem:[%s754] ss:$8 sm:$0xf0]
    %vm756 = vcmask 1047556
    %v757 = vsel %vm756, %v755, %v753
    %vm758 = vcmask 343040
    %s759 = scalar_lea.vmem %s1, 72
    %760 = vst.msk [vmem:[%s759] sm:$0xff] %vm758, %v757
    %s761 = scalar_lea.vmem [#allocation0], 640
    %v762 = vld [vmem:[%s761] ss:$8 sm:$0xf]
    %s763 = scalar_lea.vmem [#allocation0], 640
    %v764 = vld [vmem:[%s763] ss:$8 sm:$0xf0]
    %vm765 = vcmask 1047556
    %v766 = vsel %vm765, %v764, %v762
    %vm767 = vcmask 343040
    %s768 = scalar_lea.vmem %s1, 80
    %769 = vst.msk [vmem:[%s768] sm:$0xff] %vm767, %v766
    %s770 = scalar_lea.vmem [#allocation0], 704
    %v771 = vld [vmem:[%s770] ss:$8 sm:$0xf]
    %s772 = scalar_lea.vmem [#allocation0], 704
    %v773 = vld [vmem:[%s772] ss:$8 sm:$0xf0]
    %vm774 = vcmask 1047556
    %v775 = vsel %vm774, %v773, %v771
    %vm776 = vcmask 343040
    %s777 = scalar_lea.vmem %s1, 88
    %778 = vst.msk [vmem:[%s777] sm:$0xff] %vm776, %v775
    %s779 = scalar_lea.vmem [#allocation0], 768
    %v780 = vld [vmem:[%s779] ss:$8 sm:$0xf]
    %s781 = scalar_lea.vmem [#allocation0], 768
    %v782 = vld [vmem:[%s781] ss:$8 sm:$0xf0]
    %vm783 = vcmask 1047556
    %v784 = vsel %vm783, %v782, %v780
    %vm785 = vcmask 343040
    %s786 = scalar_lea.vmem %s1, 96
    %787 = vst.msk [vmem:[%s786] sm:$0xff] %vm785, %v784
    %s788 = scalar_lea.vmem [#allocation0], 832
    %v789 = vld [vmem:[%s788] ss:$8 sm:$0xf]
    %s790 = scalar_lea.vmem [#allocation0], 832
    %v791 = vld [vmem:[%s790] ss:$8 sm:$0xf0]
    %vm792 = vcmask 1047556
    %v793 = vsel %vm792, %v791, %v789
    %vm794 = vcmask 343040
    %s795 = scalar_lea.vmem %s1, 104
    %796 = vst.msk [vmem:[%s795] sm:$0xff] %vm794, %v793
    %s797 = scalar_lea.vmem [#allocation0], 896
    %v798 = vld [vmem:[%s797] ss:$8 sm:$0xf]
    %s799 = scalar_lea.vmem [#allocation0], 896
    %v800 = vld [vmem:[%s799] ss:$8 sm:$0xf0]
    %vm801 = vcmask 1047556
    %v802 = vsel %vm801, %v800, %v798
    %vm803 = vcmask 343040
    %s804 = scalar_lea.vmem %s1, 112
    %805 = vst.msk [vmem:[%s804] sm:$0xff] %vm803, %v802
    %s806 = scalar_lea.vmem [#allocation0], 960
    %v807 = vld [vmem:[%s806] ss:$8 sm:$0xf]
    %s808 = scalar_lea.vmem [#allocation0], 960
    %v809 = vld [vmem:[%s808] ss:$8 sm:$0xf0]
    %vm810 = vcmask 1047556
    %v811 = vsel %vm810, %v809, %v807
    %vm812 = vcmask 343040
    %s813 = scalar_lea.vmem %s1, 120
    %814 = vst.msk [vmem:[%s813] sm:$0xff] %vm812, %v811
    %s815 = scalar_lea.vmem [#allocation0], 1024
    %v816 = vld [vmem:[%s815] ss:$8 sm:$0xf]
    %s817 = scalar_lea.vmem [#allocation0], 1024
    %v818 = vld [vmem:[%s817] ss:$8 sm:$0xf0]
    %vm819 = vcmask 1047556
    %v820 = vsel %vm819, %v818, %v816
    %vm821 = vcmask 343040
    %s822 = scalar_lea.vmem %s1, 128
    %823 = vst.msk [vmem:[%s822] sm:$0xff] %vm821, %v820
    %s824 = scalar_lea.vmem [#allocation0], 1088
    %v825 = vld [vmem:[%s824] ss:$8 sm:$0xf]
    %s826 = scalar_lea.vmem [#allocation0], 1088
    %v827 = vld [vmem:[%s826] ss:$8 sm:$0xf0]
    %vm828 = vcmask 1047556
    %v829 = vsel %vm828, %v827, %v825
    %vm830 = vcmask 343040
    %s831 = scalar_lea.vmem %s1, 136
    %832 = vst.msk [vmem:[%s831] sm:$0xff] %vm830, %v829
    %s833 = scalar_lea.vmem [#allocation0], 1152
    %v834 = vld [vmem:[%s833] ss:$8 sm:$0xf]
    %s835 = scalar_lea.vmem [#allocation0], 1152
    %v836 = vld [vmem:[%s835] ss:$8 sm:$0xf0]
    %vm837 = vcmask 1047556
    %v838 = vsel %vm837, %v836, %v834
    %vm839 = vcmask 343040
    %s840 = scalar_lea.vmem %s1, 144
    %841 = vst.msk [vmem:[%s840] sm:$0xff] %vm839, %v838
    %s842 = scalar_lea.vmem [#allocation0], 1216
    %v843 = vld [vmem:[%s842] ss:$8 sm:$0xf]
    %s844 = scalar_lea.vmem [#allocation0], 1216
    %v845 = vld [vmem:[%s844] ss:$8 sm:$0xf0]
    %vm846 = vcmask 1047556
    %v847 = vsel %vm846, %v845, %v843
    %vm848 = vcmask 343040
    %s849 = scalar_lea.vmem %s1, 152
    %850 = vst.msk [vmem:[%s849] sm:$0xff] %vm848, %v847
    %s851 = scalar_lea.vmem [#allocation0], 1280
    %v852 = vld [vmem:[%s851] ss:$8 sm:$0xf]
    %s853 = scalar_lea.vmem [#allocation0], 1280
    %v854 = vld [vmem:[%s853] ss:$8 sm:$0xf0]
    %vm855 = vcmask 1047556
    %v856 = vsel %vm855, %v854, %v852
    %vm857 = vcmask 343040
    %s858 = scalar_lea.vmem %s1, 160
    %859 = vst.msk [vmem:[%s858] sm:$0xff] %vm857, %v856
    %s860 = scalar_lea.vmem [#allocation0], 1
    %v861 = vld [vmem:[%s860] ss:$8 sm:$0xf]
    %s862 = scalar_lea.vmem [#allocation0], 1
    %v863 = vld [vmem:[%s862] ss:$8 sm:$0xf0]
    %vm864 = vcmask 1047556
    %v865 = vsel %vm864, %v863, %v861
    %866 = vrot.lane.b32.xlu0 %v865, 42
    %v867 = vpop.permute.xlu0 %866
    %vm868 = vcmask 687440
    %869 = vst.msk [vmem:[%s1] sm:$0xff] %vm868, %v867
    %s870 = scalar_lea.vmem [#allocation0], 257
    %v871 = vld [vmem:[%s870] ss:$8 sm:$0xf]
    %s872 = scalar_lea.vmem [#allocation0], 257
    %v873 = vld [vmem:[%s872] ss:$8 sm:$0xf0]
    %vm874 = vcmask 1047556
    %v875 = vsel %vm874, %v873, %v871
    %876 = vrot.lane.b32.xlu0 %v875, 42
    %v877 = vpop.permute.xlu0 %876
    %vm878 = vcmask 687440
    %s879 = scalar_lea.vmem %s1, 32
    %880 = vst.msk [vmem:[%s879] sm:$0xff] %vm878, %v877
    %s881 = scalar_lea.vmem [#allocation0], 513
    %v882 = vld [vmem:[%s881] ss:$8 sm:$0xf]
    %s883 = scalar_lea.vmem [#allocation0], 513
    %v884 = vld [vmem:[%s883] ss:$8 sm:$0xf0]
    %vm885 = vcmask 1047556
    %v886 = vsel %vm885, %v884, %v882
    %887 = vrot.lane.b32.xlu0 %v886, 42
    %v888 = vpop.permute.xlu0 %887
    %vm889 = vcmask 687440
    %s890 = scalar_lea.vmem %s1, 64
    %891 = vst.msk [vmem:[%s890] sm:$0xff] %vm889, %v888
    %s892 = scalar_lea.vmem [#allocation0], 769
    %v893 = vld [vmem:[%s892] ss:$8 sm:$0xf]
    %s894 = scalar_lea.vmem [#allocation0], 769
    %v895 = vld [vmem:[%s894] ss:$8 sm:$0xf0]
    %vm896 = vcmask 1047556
    %v897 = vsel %vm896, %v895, %v893
    %898 = vrot.lane.b32.xlu0 %v897, 42
    %v899 = vpop.permute.xlu0 %898
    %vm900 = vcmask 687440
    %s901 = scalar_lea.vmem %s1, 96
    %902 = vst.msk [vmem:[%s901] sm:$0xff] %vm900, %v899
    %s903 = scalar_lea.vmem [#allocation0], 1025
    %v904 = vld [vmem:[%s903] ss:$8 sm:$0xf]
    %s905 = scalar_lea.vmem [#allocation0], 1025
    %v906 = vld [vmem:[%s905] ss:$8 sm:$0xf0]
    %vm907 = vcmask 1047556
    %v908 = vsel %vm907, %v906, %v904
    %909 = vrot.lane.b32.xlu0 %v908, 42
    %v910 = vpop.permute.xlu0 %909
    %vm911 = vcmask 687440
    %s912 = scalar_lea.vmem %s1, 128
    %913 = vst.msk [vmem:[%s912] sm:$0xff] %vm911, %v910
    %s914 = scalar_lea.vmem [#allocation0], 1281
    %v915 = vld [vmem:[%s914] ss:$8 sm:$0xf]
    %s916 = scalar_lea.vmem [#allocation0], 1281
    %v917 = vld [vmem:[%s916] ss:$8 sm:$0xf0]
    %vm918 = vcmask 1047556
    %v919 = vsel %vm918, %v917, %v915
    %920 = vrot.lane.b32.xlu0 %v919, 42
    %v921 = vpop.permute.xlu0 %920
    %vm922 = vcmask 687440
    %s923 = scalar_lea.vmem %s1, 160
    %924 = vst.msk [vmem:[%s923] sm:$0xff] %vm922, %v921
    %s925 = scalar_lea.vmem [#allocation0], 65
    %v926 = vld [vmem:[%s925] ss:$8 sm:$0xf]
    %s927 = scalar_lea.vmem [#allocation0], 65
    %v928 = vld [vmem:[%s927] ss:$8 sm:$0xf0]
    %vm929 = vcmask 1047556
    %v930 = vsel %vm929, %v928, %v926
    %931 = vrot.lane.b32.xlu0 %v930, 42
    %v932 = vpop.permute.xlu0 %931
    %vm933 = vcmask 687440
    %s934 = scalar_lea.vmem %s1, 8
    %935 = vst.msk [vmem:[%s934] sm:$0xff] %vm933, %v932
    %s936 = scalar_lea.vmem [#allocation0], 321
    %v937 = vld [vmem:[%s936] ss:$8 sm:$0xf]
    %s938 = scalar_lea.vmem [#allocation0], 321
    %v939 = vld [vmem:[%s938] ss:$8 sm:$0xf0]
    %vm940 = vcmask 1047556
    %v941 = vsel %vm940, %v939, %v937
    %942 = vrot.lane.b32.xlu0 %v941, 42
    %v943 = vpop.permute.xlu0 %942
    %vm944 = vcmask 687440
    %s945 = scalar_lea.vmem %s1, 40
    %946 = vst.msk [vmem:[%s945] sm:$0xff] %vm944, %v943
    %s947 = scalar_lea.vmem [#allocation0], 577
    %v948 = vld [vmem:[%s947] ss:$8 sm:$0xf]
    %s949 = scalar_lea.vmem [#allocation0], 577
    %v950 = vld [vmem:[%s949] ss:$8 sm:$0xf0]
    %vm951 = vcmask 1047556
    %v952 = vsel %vm951, %v950, %v948
    %953 = vrot.lane.b32.xlu0 %v952, 42
    %v954 = vpop.permute.xlu0 %953
    %vm955 = vcmask 687440
    %s956 = scalar_lea.vmem %s1, 72
    %957 = vst.msk [vmem:[%s956] sm:$0xff] %vm955, %v954
    %s958 = scalar_lea.vmem [#allocation0], 833
    %v959 = vld [vmem:[%s958] ss:$8 sm:$0xf]
    %s960 = scalar_lea.vmem [#allocation0], 833
    %v961 = vld [vmem:[%s960] ss:$8 sm:$0xf0]
    %vm962 = vcmask 1047556
    %v963 = vsel %vm962, %v961, %v959
    %964 = vrot.lane.b32.xlu0 %v963, 42
    %v965 = vpop.permute.xlu0 %964
    %vm966 = vcmask 687440
    %s967 = scalar_lea.vmem %s1, 104
    %968 = vst.msk [vmem:[%s967] sm:$0xff] %vm966, %v965
    %s969 = scalar_lea.vmem [#allocation0], 1089
    %v970 = vld [vmem:[%s969] ss:$8 sm:$0xf]
    %s971 = scalar_lea.vmem [#allocation0], 1089
    %v972 = vld [vmem:[%s971] ss:$8 sm:$0xf0]
    %vm973 = vcmask 1047556
    %v974 = vsel %vm973, %v972, %v970
    %975 = vrot.lane.b32.xlu0 %v974, 42
    %v976 = vpop.permute.xlu0 %975
    %vm977 = vcmask 687440
    %s978 = scalar_lea.vmem %s1, 136
    %979 = vst.msk [vmem:[%s978] sm:$0xff] %vm977, %v976
    %s980 = scalar_lea.vmem [#allocation0], 129
    %v981 = vld [vmem:[%s980] ss:$8 sm:$0xf]
    %s982 = scalar_lea.vmem [#allocation0], 129
    %v983 = vld [vmem:[%s982] ss:$8 sm:$0xf0]
    %vm984 = vcmask 1047556
    %v985 = vsel %vm984, %v983, %v981
    %986 = vrot.lane.b32.xlu0 %v985, 42
    %v987 = vpop.permute.xlu0 %986
    %vm988 = vcmask 687440
    %s989 = scalar_lea.vmem %s1, 16
    %990 = vst.msk [vmem:[%s989] sm:$0xff] %vm988, %v987
    %s991 = scalar_lea.vmem [#allocation0], 385
    %v992 = vld [vmem:[%s991] ss:$8 sm:$0xf]
    %s993 = scalar_lea.vmem [#allocation0], 385
    %v994 = vld [vmem:[%s993] ss:$8 sm:$0xf0]
    %vm995 = vcmask 1047556
    %v996 = vsel %vm995, %v994, %v992
    %997 = vrot.lane.b32.xlu0 %v996, 42
    %v998 = vpop.permute.xlu0 %997
    %vm999 = vcmask 687440
    %s1000 = scalar_lea.vmem %s1, 48
    %1001 = vst.msk [vmem:[%s1000] sm:$0xff] %vm999, %v998
    %s1002 = scalar_lea.vmem [#allocation0], 641
    %v1003 = vld [vmem:[%s1002] ss:$8 sm:$0xf]
    %s1004 = scalar_lea.vmem [#allocation0], 641
    %v1005 = vld [vmem:[%s1004] ss:$8 sm:$0xf0]
    %vm1006 = vcmask 1047556
    %v1007 = vsel %vm1006, %v1005, %v1003
    %1008 = vrot.lane.b32.xlu0 %v1007, 42
    %v1009 = vpop.permute.xlu0 %1008
    %vm1010 = vcmask 687440
    %s1011 = scalar_lea.vmem %s1, 80
    %1012 = vst.msk [vmem:[%s1011] sm:$0xff] %vm1010, %v1009
    %s1013 = scalar_lea.vmem [#allocation0], 897
    %v1014 = vld [vmem:[%s1013] ss:$8 sm:$0xf]
    %s1015 = scalar_lea.vmem [#allocation0], 897
    %v1016 = vld [vmem:[%s1015] ss:$8 sm:$0xf0]
    %vm1017 = vcmask 1047556
    %v1018 = vsel %vm1017, %v1016, %v1014
    %1019 = vrot.lane.b32.xlu0 %v1018, 42
    %v1020 = vpop.permute.xlu0 %1019
    %vm1021 = vcmask 687440
    %s1022 = scalar_lea.vmem %s1, 112
    %1023 = vst.msk [vmem:[%s1022] sm:$0xff] %vm1021, %v1020
    %s1024 = scalar_lea.vmem [#allocation0], 1153
    %v1025 = vld [vmem:[%s1024] ss:$8 sm:$0xf]
    %s1026 = scalar_lea.vmem [#allocation0], 1153
    %v1027 = vld [vmem:[%s1026] ss:$8 sm:$0xf0]
    %vm1028 = vcmask 1047556
    %v1029 = vsel %vm1028, %v1027, %v1025
    %1030 = vrot.lane.b32.xlu0 %v1029, 42
    %v1031 = vpop.permute.xlu0 %1030
    %vm1032 = vcmask 687440
    %s1033 = scalar_lea.vmem %s1, 144
    %1034 = vst.msk [vmem:[%s1033] sm:$0xff] %vm1032, %v1031
    %s1035 = scalar_lea.vmem [#allocation0], 193
    %v1036 = vld [vmem:[%s1035] ss:$8 sm:$0xf]
    %s1037 = scalar_lea.vmem [#allocation0], 193
    %v1038 = vld [vmem:[%s1037] ss:$8 sm:$0xf0]
    %vm1039 = vcmask 1047556
    %v1040 = vsel %vm1039, %v1038, %v1036
    %1041 = vrot.lane.b32.xlu0 %v1040, 42
    %v1042 = vpop.permute.xlu0 %1041
    %vm1043 = vcmask 687440
    %s1044 = scalar_lea.vmem %s1, 24
    %1045 = vst.msk [vmem:[%s1044] sm:$0xff] %vm1043, %v1042
    %s1046 = scalar_lea.vmem [#allocation0], 449
    %v1047 = vld [vmem:[%s1046] ss:$8 sm:$0xf]
    %s1048 = scalar_lea.vmem [#allocation0], 449
    %v1049 = vld [vmem:[%s1048] ss:$8 sm:$0xf0]
    %vm1050 = vcmask 1047556
    %v1051 = vsel %vm1050, %v1049, %v1047
    %1052 = vrot.lane.b32.xlu0 %v1051, 42
    %v1053 = vpop.permute.xlu0 %1052
    %vm1054 = vcmask 687440
    %s1055 = scalar_lea.vmem %s1, 56
    %1056 = vst.msk [vmem:[%s1055] sm:$0xff] %vm1054, %v1053
    %s1057 = scalar_lea.vmem [#allocation0], 705
    %v1058 = vld [vmem:[%s1057] ss:$8 sm:$0xf]
    %s1059 = scalar_lea.vmem [#allocation0], 705
    %v1060 = vld [vmem:[%s1059] ss:$8 sm:$0xf0]
    %vm1061 = vcmask 1047556
    %v1062 = vsel %vm1061, %v1060, %v1058
    %1063 = vrot.lane.b32.xlu0 %v1062, 42
    %v1064 = vpop.permute.xlu0 %1063
    %vm1065 = vcmask 687440
    %s1066 = scalar_lea.vmem %s1, 88
    %1067 = vst.msk [vmem:[%s1066] sm:$0xff] %vm1065, %v1064
    %s1068 = scalar_lea.vmem [#allocation0], 961
    %v1069 = vld [vmem:[%s1068] ss:$8 sm:$0xf]
    %s1070 = scalar_lea.vmem [#allocation0], 961
    %v1071 = vld [vmem:[%s1070] ss:$8 sm:$0xf0]
    %vm1072 = vcmask 1047556
    %v1073 = vsel %vm1072, %v1071, %v1069
    %1074 = vrot.lane.b32.xlu0 %v1073, 42
    %v1075 = vpop.permute.xlu0 %1074
    %vm1076 = vcmask 687440
    %s1077 = scalar_lea.vmem %s1, 120
    %1078 = vst.msk [vmem:[%s1077] sm:$0xff] %vm1076, %v1075
    %s1079 = scalar_lea.vmem [#allocation0], 1217
    %v1080 = vld [vmem:[%s1079] ss:$8 sm:$0xf]
    %s1081 = scalar_lea.vmem [#allocation0], 1217
    %v1082 = vld [vmem:[%s1081] ss:$8 sm:$0xf0]
    %vm1083 = vcmask 1047556
    %v1084 = vsel %vm1083, %v1082, %v1080
    %1085 = vrot.lane.b32.xlu0 %v1084, 42
    %v1086 = vpop.permute.xlu0 %1085
    %vm1087 = vcmask 687440
    %s1088 = scalar_lea.vmem %s1, 152
    %1089 = vst.msk [vmem:[%s1088] sm:$0xff] %vm1087, %v1086

// kernel: sccnet_forward.1
$region0: #{sccnet_forward.1}
  #allocation0 [shape = 'u32[]', space=smem, size = 0x4, offset = 0x4, fixed_abs, tag = 'smem constant byte address 0x4 - core index']
  #allocation1 [shape = 'u32[72,128]{1,0:T(1,128)}', space=vmem, size = 0x9000, scoped, tag = 'internal scratch']
  #allocation2 [shape = 'f32[288,1130]{1,0:T(8,128)}', space=vmem, size = 0x144000, scoped, tag = 'scratch operand']
  %s0 = inlined_call_operand.vmem [shape: f32[1,24,1146], index: 0, kind: input, shape index: {}]
  %s1 = inlined_call_operand.vmem [shape: f32[20,288], index: 1, kind: input, shape index: {}]
  %s2 = inlined_call_operand.vmem [shape: f32[20,1], index: 2, kind: input, shape index: {}]
  %s3 = inlined_call_operand.vmem [shape: f32[1130,84], index: 3, kind: input, shape index: {}]
  %s4 = inlined_call_operand.vmem [shape: f32[168,20], index: 4, kind: input, shape index: {}]
  %s5 = inlined_call_operand.vmem [shape: f32[168,84], index: 5, kind: input, shape index: {}]
  %s6 = inlined_call_operand.vmem [shape: f32[84,2], index: 6, kind: input, shape index: {}]
  %s7 = inlined_call_operand.vmem [shape: f32[4,168], index: 7, kind: input, shape index: {}]
  %s8 = inlined_call_operand.vmem [shape: f32[4,1], index: 8, kind: input, shape index: {}]
  %s9 = inlined_call_operand.vmem [shape: f32[1,4,2], index: 9, kind: output, shape index: {}]
  %s10 = sld [smem:[#allocation0]]
  $region46: #{sccnet_forward.1} parent=0
    _
  %s12 = ssub.s32 1, %s10
  %s13 = scalar_select 0, %s12, %s10
  // Predicated region
  $region2: #{sccnet_forward.1} parent=0 // pred_check
    _
  $region3: #{sccnet_forward.1} parent=0 // pred_check_branch
    %15 = sbr.rel (0) target = $region5
  $region4: #{sccnet_forward.1} parent=0 // pred_region
    _
  $region5: #{sccnet_forward.1} parent=0 // pred_fallthru
    _
  // Predicated region
  $region6: #{sccnet_forward.1} parent=0 // pred_check
    _
  $region7: #{sccnet_forward.1} parent=0 // pred_check_branch
    %17 = sbr.rel (0) target = $region9
  $region8: #{sccnet_forward.1} parent=0 // pred_region
    _
  $region9: #{sccnet_forward.1} parent=0 // pred_fallthru
    _
  // Predicated region
  $region10: #{sccnet_forward.1} parent=0 // pred_check
    _
  $region11: #{sccnet_forward.1} parent=0 // pred_check_branch
    %19 = sbr.rel (0) target = $region13
  $region12: #{sccnet_forward.1} parent=0 // pred_region
    _
  $region13: #{sccnet_forward.1} parent=0 // pred_fallthru
    _
  // Predicated region
  $region14: #{sccnet_forward.1} parent=0 // pred_check
    _
  $region15: #{sccnet_forward.1} parent=0 // pred_check_branch
    %21 = sbr.rel (0) target = $region17
  $region16: #{sccnet_forward.1} parent=0 // pred_region
    _
  $region17: #{sccnet_forward.1} parent=0 // pred_fallthru
    _
  // Predicated region
  $region18: #{sccnet_forward.1} parent=0 // pred_check
    _
  $region19: #{sccnet_forward.1} parent=0 // pred_check_branch
    %23 = sbr.rel (0) target = $region21
  $region20: #{sccnet_forward.1} parent=0 // pred_region
    _
  $region21: #{sccnet_forward.1} parent=0 // pred_fallthru
    _
  // Predicated region
  $region22: #{sccnet_forward.1} parent=0 // pred_check
    _
  $region23: #{sccnet_forward.1} parent=0 // pred_check_branch
    %25 = sbr.rel (0) target = $region25
  $region24: #{sccnet_forward.1} parent=0 // pred_region
    _
  $region25: #{sccnet_forward.1} parent=0 // pred_fallthru
    _
  // Predicated region
  $region26: #{sccnet_forward.1} parent=0 // pred_check
    _
  $region27: #{sccnet_forward.1} parent=0 // pred_check_branch
    %27 = sbr.rel (0) target = $region29
  $region28: #{sccnet_forward.1} parent=0 // pred_region
    _
  $region29: #{sccnet_forward.1} parent=0 // pred_fallthru
    _
  // Predicated region
  $region30: #{sccnet_forward.1} parent=0 // pred_check
    _
  $region31: #{sccnet_forward.1} parent=0 // pred_check_branch
    %29 = sbr.rel (0) target = $region33
  $region32: #{sccnet_forward.1} parent=0 // pred_region
    _
  $region33: #{sccnet_forward.1} parent=0 // pred_fallthru
    _
  // Predicated region
  $region34: #{sccnet_forward.1} parent=0 // pred_check
    _
  $region35: #{sccnet_forward.1} parent=0 // pred_check_branch
    %31 = sbr.rel (0) target = $region37
  $region36: #{sccnet_forward.1} parent=0 // pred_region
    _
  $region37: #{sccnet_forward.1} parent=0 // pred_fallthru
    _
  %v32 = vld [vmem:[%s0] sm:$0xff]
  %v33 = vld [vmem:[%s0 + $0x8] sm:$0xff]
  %v34 = vld [vmem:[%s0 + $0x10] sm:$0xff]
  %v35 = vld [vmem:[%s0 + $0x18] sm:$0xff]
  %v36 = vld [vmem:[%s0 + $0x20] sm:$0xff]
  %v37 = vld [vmem:[%s0 + $0x28] sm:$0xff]
  %v38 = vld [vmem:[%s0 + $0x30] sm:$0xff]
  %v39 = vld [vmem:[%s0 + $0x38] sm:$0xff]
  %v40 = vld [vmem:[%s0 + $0x40] sm:$0xff]
  %v41 = vld [vmem:[%s0 + $0x48] sm:$0xff]
  %v42 = vld [vmem:[%s0 + $0x50] sm:$0xff]
  %v43 = vld [vmem:[%s0 + $0x58] sm:$0xff]
  %v44 = vld [vmem:[%s0 + $0x60] sm:$0xff]
  %v45 = vld [vmem:[%s0 + $0x68] sm:$0xff]
  %v46 = vld [vmem:[%s0 + $0x70] sm:$0xff]
  %v47 = vld [vmem:[%s0 + $0x78] sm:$0xff]
  %v48 = vld [vmem:[%s0 + $0x80] sm:$0xff]
  %v49 = vld [vmem:[%s0 + $0x88] sm:$0xff]
  %v50 = vld [vmem:[%s0 + $0x90] sm:$0xff]
  %v51 = vld [vmem:[%s0 + $0x98] sm:$0xff]
  %v52 = vld [vmem:[%s0 + $0xa0] sm:$0xff]
  %v53 = vld [vmem:[%s0 + $0xa8] sm:$0xff]
  %v54 = vld [vmem:[%s0 + $0xb0] sm:$0xff]
  %v55 = vld [vmem:[%s0 + $0xb8] sm:$0xff]
  %v56 = vld [vmem:[%s0 + $0xc0] sm:$0xff]
  %v57 = vld [vmem:[%s0 + $0xc8] sm:$0xff]
  %v58 = vld [vmem:[%s0 + $0xd0] sm:$0xff]
  %59 = vst [vmem:[#allocation2] sm:$0xff] %v32
  %60 = vst [vmem:[#allocation2 + $0x8] sm:$0xff] %v33
  %61 = vst [vmem:[#allocation2 + $0x10] sm:$0xff] %v34
  %62 = vst [vmem:[#allocation2 + $0x18] sm:$0xff] %v35
  %63 = vst [vmem:[#allocation2 + $0x20] sm:$0xff] %v36
  %64 = vst [vmem:[#allocation2 + $0x28] sm:$0xff] %v37
  %65 = vst [vmem:[#allocation2 + $0x30] sm:$0xff] %v38
  %66 = vst [vmem:[#allocation2 + $0x38] sm:$0xff] %v39
  %vm67 = vcmask 867328
  %68 = vst.msk [vmem:[#allocation2 + $0x40] sm:$0xff] %vm67, %v40
  %69 = vst [vmem:[#allocation2 + $0x48] sm:$0xff] %v41
  %70 = vst [vmem:[#allocation2 + $0x50] sm:$0xff] %v42
  %71 = vst [vmem:[#allocation2 + $0x58] sm:$0xff] %v43
  %72 = vst [vmem:[#allocation2 + $0x60] sm:$0xff] %v44
  %73 = vst [vmem:[#allocation2 + $0x68] sm:$0xff] %v45
  %74 = vst [vmem:[#allocation2 + $0x70] sm:$0xff] %v46
  %75 = vst [vmem:[#allocation2 + $0x78] sm:$0xff] %v47
  %76 = vst [vmem:[#allocation2 + $0x80] sm:$0xff] %v48
  %77 = vst.msk [vmem:[#allocation2 + $0x88] sm:$0xff] %vm67, %v49
  %78 = vst [vmem:[#allocation2 + $0x90] sm:$0xff] %v50
  %79 = vst [vmem:[#allocation2 + $0x98] sm:$0xff] %v51
  %80 = vst [vmem:[#allocation2 + $0xa0] sm:$0xff] %v52
  %81 = vst [vmem:[#allocation2 + $0xa8] sm:$0xff] %v53
  %82 = vst [vmem:[#allocation2 + $0xb0] sm:$0xff] %v54
  %83 = vst [vmem:[#allocation2 + $0xb8] sm:$0xff] %v55
  %84 = vst [vmem:[#allocation2 + $0xc0] sm:$0xff] %v56
  %85 = vst [vmem:[#allocation2 + $0xc8] sm:$0xff] %v57
  %86 = vst.msk [vmem:[#allocation2 + $0xd0] sm:$0xff] %vm67, %v58
  %v87 = vld [vmem:[%s0] sm:$0xff]
  %v88 = vld [vmem:[%s0 + $0x8] sm:$0xff]
  %v89 = vld [vmem:[%s0 + $0x10] sm:$0xff]
  %v90 = vld [vmem:[%s0 + $0x18] sm:$0xff]
  %v91 = vld [vmem:[%s0 + $0x20] sm:$0xff]
  %v92 = vld [vmem:[%s0 + $0x28] sm:$0xff]
  %v93 = vld [vmem:[%s0 + $0x30] sm:$0xff]
  %v94 = vld [vmem:[%s0 + $0x38] sm:$0xff]
  %v95 = vld [vmem:[%s0 + $0x40] sm:$0xff]
  %v96 = vld [vmem:[%s0 + $0x48] sm:$0xff]
  %v97 = vld [vmem:[%s0 + $0x50] sm:$0xff]
  %v98 = vld [vmem:[%s0 + $0x58] sm:$0xff]
  %v99 = vld [vmem:[%s0 + $0x60] sm:$0xff]
  %v100 = vld [vmem:[%s0 + $0x68] sm:$0xff]
  %v101 = vld [vmem:[%s0 + $0x70] sm:$0xff]
  %v102 = vld [vmem:[%s0 + $0x78] sm:$0xff]
  %v103 = vld [vmem:[%s0 + $0x80] sm:$0xff]
  %v104 = vld [vmem:[%s0 + $0x88] sm:$0xff]
  %v105 = vld [vmem:[%s0 + $0x90] sm:$0xff]
  %v106 = vld [vmem:[%s0 + $0x98] sm:$0xff]
  %v107 = vld [vmem:[%s0 + $0xa0] sm:$0xff]
  %v108 = vld [vmem:[%s0 + $0xa8] sm:$0xff]
  %v109 = vld [vmem:[%s0 + $0xb0] sm:$0xff]
  %v110 = vld [vmem:[%s0 + $0xb8] sm:$0xff]
  %v111 = vld [vmem:[%s0 + $0xc0] sm:$0xff]
  %v112 = vld [vmem:[%s0 + $0xc8] sm:$0xff]
  %v113 = vld [vmem:[%s0 + $0xd0] sm:$0xff]
  %141 = vrot.lane.b32.xlu0 %v87, 127
  %v142 = vpop.permute.xlu0 %141
  %143 = vrot.lane.b32.xlu0 %v88, 127
  %v144 = vpop.permute.xlu0 %143
  %145 = vrot.lane.b32.xlu0 %v89, 127
  %v146 = vpop.permute.xlu0 %145
  %147 = vrot.lane.b32.xlu0 %v90, 127
  %v148 = vpop.permute.xlu0 %147
  %149 = vrot.lane.b32.xlu0 %v91, 127
  %v150 = vpop.permute.xlu0 %149
  %151 = vrot.lane.b32.xlu0 %v92, 127
  %v152 = vpop.permute.xlu0 %151
  %153 = vrot.lane.b32.xlu0 %v93, 127
  %v154 = vpop.permute.xlu0 %153
  %155 = vrot.lane.b32.xlu0 %v94, 127
  %v156 = vpop.permute.xlu0 %155
  %157 = vrot.lane.b32.xlu0 %v95, 127
  %v158 = vpop.permute.xlu0 %157
  %159 = vrot.lane.b32.xlu0 %v96, 127
  %v160 = vpop.permute.xlu0 %159
  %161 = vrot.lane.b32.xlu0 %v97, 127
  %v162 = vpop.permute.xlu0 %161
  %163 = vrot.lane.b32.xlu0 %v98, 127
  %v164 = vpop.permute.xlu0 %163
  %165 = vrot.lane.b32.xlu0 %v99, 127
  %v166 = vpop.permute.xlu0 %165
  %167 = vrot.lane.b32.xlu0 %v100, 127
  %v168 = vpop.permute.xlu0 %167
  %169 = vrot.lane.b32.xlu0 %v101, 127
  %v170 = vpop.permute.xlu0 %169
  %171 = vrot.lane.b32.xlu0 %v102, 127
  %v172 = vpop.permute.xlu0 %171
  %173 = vrot.lane.b32.xlu0 %v103, 127
  %v174 = vpop.permute.xlu0 %173
  %175 = vrot.lane.b32.xlu0 %v104, 127
  %v176 = vpop.permute.xlu0 %175
  %177 = vrot.lane.b32.xlu0 %v105, 127
  %v178 = vpop.permute.xlu0 %177
  %179 = vrot.lane.b32.xlu0 %v106, 127
  %v180 = vpop.permute.xlu0 %179
  %181 = vrot.lane.b32.xlu0 %v107, 127
  %v182 = vpop.permute.xlu0 %181
  %183 = vrot.lane.b32.xlu0 %v108, 127
  %v184 = vpop.permute.xlu0 %183
  %185 = vrot.lane.b32.xlu0 %v109, 127
  %v186 = vpop.permute.xlu0 %185
  %187 = vrot.lane.b32.xlu0 %v110, 127
  %v188 = vpop.permute.xlu0 %187
  %189 = vrot.lane.b32.xlu0 %v111, 127
  %v190 = vpop.permute.xlu0 %189
  %191 = vrot.lane.b32.xlu0 %v112, 127
  %v192 = vpop.permute.xlu0 %191
  %193 = vrot.lane.b32.xlu0 %v113, 127
  %v194 = vpop.permute.xlu0 %193
  %vm195 = vcmask 1039360
  %v196 = vsel %vm195, %v142, %v144
  %v197 = vsel %vm195, %v144, %v146
  %v198 = vsel %vm195, %v146, %v148
  %v199 = vsel %vm195, %v148, %v150
  %v200 = vsel %vm195, %v150, %v152
  %v201 = vsel %vm195, %v152, %v154
  %v202 = vsel %vm195, %v154, %v156
  %v203 = vsel %vm195, %v156, %v158
  %v204 = vsel %vm195, %v160, %v162
  %v205 = vsel %vm195, %v162, %v164
  %v206 = vsel %vm195, %v164, %v166
  %v207 = vsel %vm195, %v166, %v168
  %v208 = vsel %vm195, %v168, %v170
  %v209 = vsel %vm195, %v170, %v172
  %v210 = vsel %vm195, %v172, %v174
  %v211 = vsel %vm195, %v174, %v176
  %v212 = vsel %vm195, %v178, %v180
  %v213 = vsel %vm195, %v180, %v182
  %v214 = vsel %vm195, %v182, %v184
  %v215 = vsel %vm195, %v184, %v186
  %v216 = vsel %vm195, %v186, %v188
  %v217 = vsel %vm195, %v188, %v190
  %v218 = vsel %vm195, %v190, %v192
  %v219 = vsel %vm195, %v192, %v194
  %247 = vst [vmem:[#allocation2 + $0xd8] sm:$0xff] %v196
  %248 = vst [vmem:[#allocation2 + $0xe0] sm:$0xff] %v197
  %249 = vst [vmem:[#allocation2 + $0xe8] sm:$0xff] %v198
  %250 = vst [vmem:[#allocation2 + $0xf0] sm:$0xff] %v199
  %251 = vst [vmem:[#allocation2 + $0xf8] sm:$0xff] %v200
  %252 = vst [vmem:[#allocation2 + $0x100] sm:$0xff] %v201
  %253 = vst [vmem:[#allocation2 + $0x108] sm:$0xff] %v202
  %254 = vst [vmem:[#allocation2 + $0x110] sm:$0xff] %v203
  %255 = vst.msk [vmem:[#allocation2 + $0x118] sm:$0xff] %vm67, %v158
  %256 = vst [vmem:[#allocation2 + $0x120] sm:$0xff] %v204
  %257 = vst [vmem:[#allocation2 + $0x128] sm:$0xff] %v205
  %258 = vst [vmem:[#allocation2 + $0x130] sm:$0xff] %v206
  %259 = vst [vmem:[#allocation2 + $0x138] sm:$0xff] %v207
  %260 = vst [vmem:[#allocation2 + $0x140] sm:$0xff] %v208
  %261 = vst [vmem:[#allocation2 + $0x148] sm:$0xff] %v209
  %262 = vst [vmem:[#allocation2 + $0x150] sm:$0xff] %v210
  %263 = vst [vmem:[#allocation2 + $0x158] sm:$0xff] %v211
  %264 = vst.msk [vmem:[#allocation2 + $0x160] sm:$0xff] %vm67, %v176
  %265 = vst [vmem:[#allocation2 + $0x168] sm:$0xff] %v212
  %266 = vst [vmem:[#allocation2 + $0x170] sm:$0xff] %v213
  %267 = vst [vmem:[#allocation2 + $0x178] sm:$0xff] %v214
  %268 = vst [vmem:[#allocation2 + $0x180] sm:$0xff] %v215
  %269 = vst [vmem:[#allocation2 + $0x188] sm:$0xff] %v216
  %270 = vst [vmem:[#allocation2 + $0x190] sm:$0xff] %v217
  %271 = vst [vmem:[#allocation2 + $0x198] sm:$0xff] %v218
  %272 = vst [vmem:[#allocation2 + $0x1a0] sm:$0xff] %v219
  %273 = vst.msk [vmem:[#allocation2 + $0x1a8] sm:$0xff] %vm67, %v194
  %v274 = vld [vmem:[%s0] sm:$0xff]
  %v275 = vld [vmem:[%s0 + $0x8] sm:$0xff]
  %v276 = vld [vmem:[%s0 + $0x10] sm:$0xff]
  %v277 = vld [vmem:[%s0 + $0x18] sm:$0xff]
  %v278 = vld [vmem:[%s0 + $0x20] sm:$0xff]
  %v279 = vld [vmem:[%s0 + $0x28] sm:$0xff]
  %v280 = vld [vmem:[%s0 + $0x30] sm:$0xff]
  %v281 = vld [vmem:[%s0 + $0x38] sm:$0xff]
  %v282 = vld [vmem:[%s0 + $0x40] sm:$0xff]
  %v283 = vld [vmem:[%s0 + $0x48] sm:$0xff]
  %v284 = vld [vmem:[%s0 + $0x50] sm:$0xff]
  %v285 = vld [vmem:[%s0 + $0x58] sm:$0xff]
  %v286 = vld [vmem:[%s0 + $0x60] sm:$0xff]
  %v287 = vld [vmem:[%s0 + $0x68] sm:$0xff]
  %v288 = vld [vmem:[%s0 + $0x70] sm:$0xff]
  %v289 = vld [vmem:[%s0 + $0x78] sm:$0xff]
  %v290 = vld [vmem:[%s0 + $0x80] sm:$0xff]
  %v291 = vld [vmem:[%s0 + $0x88] sm:$0xff]
  %v292 = vld [vmem:[%s0 + $0x90] sm:$0xff]
  %v293 = vld [vmem:[%s0 + $0x98] sm:$0xff]
  %v294 = vld [vmem:[%s0 + $0xa0] sm:$0xff]
  %v295 = vld [vmem:[%s0 + $0xa8] sm:$0xff]
  %v296 = vld [vmem:[%s0 + $0xb0] sm:$0xff]
  %v297 = vld [vmem:[%s0 + $0xb8] sm:$0xff]
  %v298 = vld [vmem:[%s0 + $0xc0] sm:$0xff]
  %v299 = vld [vmem:[%s0 + $0xc8] sm:$0xff]
  %v300 = vld [vmem:[%s0 + $0xd0] sm:$0xff]
  %328 = vrot.lane.b32.xlu0 %v274, 126
  %v329 = vpop.permute.xlu0 %328
  %330 = vrot.lane.b32.xlu0 %v275, 126
  %v331 = vpop.permute.xlu0 %330
  %332 = vrot.lane.b32.xlu0 %v276, 126
  %v333 = vpop.permute.xlu0 %332
  %334 = vrot.lane.b32.xlu0 %v277, 126
  %v335 = vpop.permute.xlu0 %334
  %336 = vrot.lane.b32.xlu0 %v278, 126
  %v337 = vpop.permute.xlu0 %336
  %338 = vrot.lane.b32.xlu0 %v279, 126
  %v339 = vpop.permute.xlu0 %338
  %340 = vrot.lane.b32.xlu0 %v280, 126
  %v341 = vpop.permute.xlu0 %340
  %342 = vrot.lane.b32.xlu0 %v281, 126
  %v343 = vpop.permute.xlu0 %342
  %344 = vrot.lane.b32.xlu0 %v282, 126
  %v345 = vpop.permute.xlu0 %344
  %346 = vrot.lane.b32.xlu0 %v283, 126
  %v347 = vpop.permute.xlu0 %346
  %348 = vrot.lane.b32.xlu0 %v284, 126
  %v349 = vpop.permute.xlu0 %348
  %350 = vrot.lane.b32.xlu0 %v285, 126
  %v351 = vpop.permute.xlu0 %350
  %352 = vrot.lane.b32.xlu0 %v286, 126
  %v353 = vpop.permute.xlu0 %352
  %354 = vrot.lane.b32.xlu0 %v287, 126
  %v355 = vpop.permute.xlu0 %354
  %356 = vrot.lane.b32.xlu0 %v288, 126
  %v357 = vpop.permute.xlu0 %356
  %358 = vrot.lane.b32.xlu0 %v289, 126
  %v359 = vpop.permute.xlu0 %358
  %360 = vrot.lane.b32.xlu0 %v290, 126
  %v361 = vpop.permute.xlu0 %360
  %362 = vrot.lane.b32.xlu0 %v291, 126
  %v363 = vpop.permute.xlu0 %362
  %364 = vrot.lane.b32.xlu0 %v292, 126
  %v365 = vpop.permute.xlu0 %364
  %366 = vrot.lane.b32.xlu0 %v293, 126
  %v367 = vpop.permute.xlu0 %366
  %368 = vrot.lane.b32.xlu0 %v294, 126
  %v369 = vpop.permute.xlu0 %368
  %370 = vrot.lane.b32.xlu0 %v295, 126
  %v371 = vpop.permute.xlu0 %370
  %372 = vrot.lane.b32.xlu0 %v296, 126
  %v373 = vpop.permute.xlu0 %372
  %374 = vrot.lane.b32.xlu0 %v297, 126
  %v375 = vpop.permute.xlu0 %374
  %376 = vrot.lane.b32.xlu0 %v298, 126
  %v377 = vpop.permute.xlu0 %376
  %378 = vrot.lane.b32.xlu0 %v299, 126
  %v379 = vpop.permute.xlu0 %378
  %380 = vrot.lane.b32.xlu0 %v300, 126
  %v381 = vpop.permute.xlu0 %380
  %vm382 = vcmask 1031168
  %v383 = vsel %vm382, %v329, %v331
  %v384 = vsel %vm382, %v331, %v333
  %v385 = vsel %vm382, %v333, %v335
  %v386 = vsel %vm382, %v335, %v337
  %v387 = vsel %vm382, %v337, %v339
  %v388 = vsel %vm382, %v339, %v341
  %v389 = vsel %vm382, %v341, %v343
  %v390 = vsel %vm382, %v343, %v345
  %v391 = vsel %vm382, %v347, %v349
  %v392 = vsel %vm382, %v349, %v351
  %v393 = vsel %vm382, %v351, %v353
  %v394 = vsel %vm382, %v353, %v355
  %v395 = vsel %vm382, %v355, %v357
  %v396 = vsel %vm382, %v357, %v359
  %v397 = vsel %vm382, %v359, %v361
  %v398 = vsel %vm382, %v361, %v363
  %v399 = vsel %vm382, %v365, %v367
  %v400 = vsel %vm382, %v367, %v369
  %v401 = vsel %vm382, %v369, %v371
  %v402 = vsel %vm382, %v371, %v373
  %v403 = vsel %vm382, %v373, %v375
  %v404 = vsel %vm382, %v375, %v377
  %v405 = vsel %vm382, %v377, %v379
  %v406 = vsel %vm382, %v379, %v381
  %434 = vst [vmem:[#allocation2 + $0x1b0] sm:$0xff] %v383
  %435 = vst [vmem:[#allocation2 + $0x1b8] sm:$0xff] %v384
  %436 = vst [vmem:[#allocation2 + $0x1c0] sm:$0xff] %v385
  %437 = vst [vmem:[#allocation2 + $0x1c8] sm:$0xff] %v386
  %438 = vst [vmem:[#allocation2 + $0x1d0] sm:$0xff] %v387
  %439 = vst [vmem:[#allocation2 + $0x1d8] sm:$0xff] %v388
  %440 = vst [vmem:[#allocation2 + $0x1e0] sm:$0xff] %v389
  %441 = vst [vmem:[#allocation2 + $0x1e8] sm:$0xff] %v390
  %442 = vst.msk [vmem:[#allocation2 + $0x1f0] sm:$0xff] %vm67, %v345
  %443 = vst [vmem:[#allocation2 + $0x1f8] sm:$0xff] %v391
  %444 = vst [vmem:[#allocation2 + $0x200] sm:$0xff] %v392
  %445 = vst [vmem:[#allocation2 + $0x208] sm:$0xff] %v393
  %446 = vst [vmem:[#allocation2 + $0x210] sm:$0xff] %v394
  %447 = vst [vmem:[#allocation2 + $0x218] sm:$0xff] %v395
  %448 = vst [vmem:[#allocation2 + $0x220] sm:$0xff] %v396
  %449 = vst [vmem:[#allocation2 + $0x228] sm:$0xff] %v397
  %450 = vst [vmem:[#allocation2 + $0x230] sm:$0xff] %v398
  %451 = vst.msk [vmem:[#allocation2 + $0x238] sm:$0xff] %vm67, %v363
  %452 = vst [vmem:[#allocation2 + $0x240] sm:$0xff] %v399
  %453 = vst [vmem:[#allocation2 + $0x248] sm:$0xff] %v400
  %454 = vst [vmem:[#allocation2 + $0x250] sm:$0xff] %v401
  %455 = vst [vmem:[#allocation2 + $0x258] sm:$0xff] %v402
  %456 = vst [vmem:[#allocation2 + $0x260] sm:$0xff] %v403
  %457 = vst [vmem:[#allocation2 + $0x268] sm:$0xff] %v404
  %458 = vst [vmem:[#allocation2 + $0x270] sm:$0xff] %v405
  %459 = vst [vmem:[#allocation2 + $0x278] sm:$0xff] %v406
  %460 = vst.msk [vmem:[#allocation2 + $0x280] sm:$0xff] %vm67, %v381
  %v461 = vld [vmem:[%s0] sm:$0xff]
  %v462 = vld [vmem:[%s0 + $0x8] sm:$0xff]
  %v463 = vld [vmem:[%s0 + $0x10] sm:$0xff]
  %v464 = vld [vmem:[%s0 + $0x18] sm:$0xff]
  %v465 = vld [vmem:[%s0 + $0x20] sm:$0xff]
  %v466 = vld [vmem:[%s0 + $0x28] sm:$0xff]
  %v467 = vld [vmem:[%s0 + $0x30] sm:$0xff]
  %v468 = vld [vmem:[%s0 + $0x38] sm:$0xff]
  %v469 = vld [vmem:[%s0 + $0x40] sm:$0xff]
  %v470 = vld [vmem:[%s0 + $0x48] sm:$0xff]
  %v471 = vld [vmem:[%s0 + $0x50] sm:$0xff]
  %v472 = vld [vmem:[%s0 + $0x58] sm:$0xff]
  %v473 = vld [vmem:[%s0 + $0x60] sm:$0xff]
  %v474 = vld [vmem:[%s0 + $0x68] sm:$0xff]
  %v475 = vld [vmem:[%s0 + $0x70] sm:$0xff]
  %v476 = vld [vmem:[%s0 + $0x78] sm:$0xff]
  %v477 = vld [vmem:[%s0 + $0x80] sm:$0xff]
  %v478 = vld [vmem:[%s0 + $0x88] sm:$0xff]
  %v479 = vld [vmem:[%s0 + $0x90] sm:$0xff]
  %v480 = vld [vmem:[%s0 + $0x98] sm:$0xff]
  %v481 = vld [vmem:[%s0 + $0xa0] sm:$0xff]
  %v482 = vld [vmem:[%s0 + $0xa8] sm:$0xff]
  %v483 = vld [vmem:[%s0 + $0xb0] sm:$0xff]
  %v484 = vld [vmem:[%s0 + $0xb8] sm:$0xff]
  %v485 = vld [vmem:[%s0 + $0xc0] sm:$0xff]
  %v486 = vld [vmem:[%s0 + $0xc8] sm:$0xff]
  %v487 = vld [vmem:[%s0 + $0xd0] sm:$0xff]
  %515 = vrot.lane.b32.xlu0 %v461, 125
  %v516 = vpop.permute.xlu0 %515
  %517 = vrot.lane.b32.xlu0 %v462, 125
  %v518 = vpop.permute.xlu0 %517
  %519 = vrot.lane.b32.xlu0 %v463, 125
  %v520 = vpop.permute.xlu0 %519
  %521 = vrot.lane.b32.xlu0 %v464, 125
  %v522 = vpop.permute.xlu0 %521
  %523 = vrot.lane.b32.xlu0 %v465, 125
  %v524 = vpop.permute.xlu0 %523
  %525 = vrot.lane.b32.xlu0 %v466, 125
  %v526 = vpop.permute.xlu0 %525
  %527 = vrot.lane.b32.xlu0 %v467, 125
  %v528 = vpop.permute.xlu0 %527
  %529 = vrot.lane.b32.xlu0 %v468, 125
  %v530 = vpop.permute.xlu0 %529
  %531 = vrot.lane.b32.xlu0 %v469, 125
  %v532 = vpop.permute.xlu0 %531
  %533 = vrot.lane.b32.xlu0 %v470, 125
  %v534 = vpop.permute.xlu0 %533
  %535 = vrot.lane.b32.xlu0 %v471, 125
  %v536 = vpop.permute.xlu0 %535
  %537 = vrot.lane.b32.xlu0 %v472, 125
  %v538 = vpop.permute.xlu0 %537
  %539 = vrot.lane.b32.xlu0 %v473, 125
  %v540 = vpop.permute.xlu0 %539
  %541 = vrot.lane.b32.xlu0 %v474, 125
  %v542 = vpop.permute.xlu0 %541
  %543 = vrot.lane.b32.xlu0 %v475, 125
  %v544 = vpop.permute.xlu0 %543
  %545 = vrot.lane.b32.xlu0 %v476, 125
  %v546 = vpop.permute.xlu0 %545
  %547 = vrot.lane.b32.xlu0 %v477, 125
  %v548 = vpop.permute.xlu0 %547
  %549 = vrot.lane.b32.xlu0 %v478, 125
  %v550 = vpop.permute.xlu0 %549
  %551 = vrot.lane.b32.xlu0 %v479, 125
  %v552 = vpop.permute.xlu0 %551
  %553 = vrot.lane.b32.xlu0 %v480, 125
  %v554 = vpop.permute.xlu0 %553
  %555 = vrot.lane.b32.xlu0 %v481, 125
  %v556 = vpop.permute.xlu0 %555
  %557 = vrot.lane.b32.xlu0 %v482, 125
  %v558 = vpop.permute.xlu0 %557
  %559 = vrot.lane.b32.xlu0 %v483, 125
  %v560 = vpop.permute.xlu0 %559
  %561 = vrot.lane.b32.xlu0 %v484, 125
  %v562 = vpop.permute.xlu0 %561
  %563 = vrot.lane.b32.xlu0 %v485, 125
  %v564 = vpop.permute.xlu0 %563
  %565 = vrot.lane.b32.xlu0 %v486, 125
  %v566 = vpop.permute.xlu0 %565
  %567 = vrot.lane.b32.xlu0 %v487, 125
  %v568 = vpop.permute.xlu0 %567
  %vm569 = vcmask 1022976
  %v570 = vsel %vm569, %v516, %v518
  %v571 = vsel %vm569, %v518, %v520
  %v572 = vsel %vm569, %v520, %v522
  %v573 = vsel %vm569, %v522, %v524
  %v574 = vsel %vm569, %v524, %v526
  %v575 = vsel %vm569, %v526, %v528
  %v576 = vsel %vm569, %v528, %v530
  %v577 = vsel %vm569, %v530, %v532
  %v578 = vsel %vm569, %v534, %v536
  %v579 = vsel %vm569, %v536, %v538
  %v580 = vsel %vm569, %v538, %v540
  %v581 = vsel %vm569, %v540, %v542
  %v582 = vsel %vm569, %v542, %v544
  %v583 = vsel %vm569, %v544, %v546
  %v584 = vsel %vm569, %v546, %v548
  %v585 = vsel %vm569, %v548, %v550
  %v586 = vsel %vm569, %v552, %v554
  %v587 = vsel %vm569, %v554, %v556
  %v588 = vsel %vm569, %v556, %v558
  %v589 = vsel %vm569, %v558, %v560
  %v590 = vsel %vm569, %v560, %v562
  %v591 = vsel %vm569, %v562, %v564
  %v592 = vsel %vm569, %v564, %v566
  %v593 = vsel %vm569, %v566, %v568
  %621 = vst [vmem:[#allocation2 + $0x288] sm:$0xff] %v570
  %622 = vst [vmem:[#allocation2 + $0x290] sm:$0xff] %v571
  %623 = vst [vmem:[#allocation2 + $0x298] sm:$0xff] %v572
  %624 = vst [vmem:[#allocation2 + $0x2a0] sm:$0xff] %v573
  %625 = vst [vmem:[#allocation2 + $0x2a8] sm:$0xff] %v574
  %626 = vst [vmem:[#allocation2 + $0x2b0] sm:$0xff] %v575
  %627 = vst [vmem:[#allocation2 + $0x2b8] sm:$0xff] %v576
  %628 = vst [vmem:[#allocation2 + $0x2c0] sm:$0xff] %v577
  %629 = vst.msk [vmem:[#allocation2 + $0x2c8] sm:$0xff] %vm67, %v532
  %630 = vst [vmem:[#allocation2 + $0x2d0] sm:$0xff] %v578
  %631 = vst [vmem:[#allocation2 + $0x2d8] sm:$0xff] %v579
  %632 = vst [vmem:[#allocation2 + $0x2e0] sm:$0xff] %v580
  %633 = vst [vmem:[#allocation2 + $0x2e8] sm:$0xff] %v581
  %634 = vst [vmem:[#allocation2 + $0x2f0] sm:$0xff] %v582
  %635 = vst [vmem:[#allocation2 + $0x2f8] sm:$0xff] %v583
  %636 = vst [vmem:[#allocation2 + $0x300] sm:$0xff] %v584
  %637 = vst [vmem:[#allocation2 + $0x308] sm:$0xff] %v585
  %638 = vst.msk [vmem:[#allocation2 + $0x310] sm:$0xff] %vm67, %v550
  %639 = vst [vmem:[#allocation2 + $0x318] sm:$0xff] %v586
  %640 = vst [vmem:[#allocation2 + $0x320] sm:$0xff] %v587
  %641 = vst [vmem:[#allocation2 + $0x328] sm:$0xff] %v588
  %642 = vst [vmem:[#allocation2 + $0x330] sm:$0xff] %v589
  %643 = vst [vmem:[#allocation2 + $0x338] sm:$0xff] %v590
  %644 = vst [vmem:[#allocation2 + $0x340] sm:$0xff] %v591
  %645 = vst [vmem:[#allocation2 + $0x348] sm:$0xff] %v592
  %646 = vst [vmem:[#allocation2 + $0x350] sm:$0xff] %v593
  %647 = vst.msk [vmem:[#allocation2 + $0x358] sm:$0xff] %vm67, %v568
  %v648 = vld [vmem:[%s0] sm:$0xff]
  %v649 = vld [vmem:[%s0 + $0x8] sm:$0xff]
  %v650 = vld [vmem:[%s0 + $0x10] sm:$0xff]
  %v651 = vld [vmem:[%s0 + $0x18] sm:$0xff]
  %v652 = vld [vmem:[%s0 + $0x20] sm:$0xff]
  %v653 = vld [vmem:[%s0 + $0x28] sm:$0xff]
  %v654 = vld [vmem:[%s0 + $0x30] sm:$0xff]
  %v655 = vld [vmem:[%s0 + $0x38] sm:$0xff]
  %v656 = vld [vmem:[%s0 + $0x40] sm:$0xff]
  %v657 = vld [vmem:[%s0 + $0x48] sm:$0xff]
  %v658 = vld [vmem:[%s0 + $0x50] sm:$0xff]
  %v659 = vld [vmem:[%s0 + $0x58] sm:$0xff]
  %v660 = vld [vmem:[%s0 + $0x60] sm:$0xff]
  %v661 = vld [vmem:[%s0 + $0x68] sm:$0xff]
  %v662 = vld [vmem:[%s0 + $0x70] sm:$0xff]
  %v663 = vld [vmem:[%s0 + $0x78] sm:$0xff]
  %v664 = vld [vmem:[%s0 + $0x80] sm:$0xff]
  %v665 = vld [vmem:[%s0 + $0x88] sm:$0xff]
  %v666 = vld [vmem:[%s0 + $0x90] sm:$0xff]
  %v667 = vld [vmem:[%s0 + $0x98] sm:$0xff]
  %v668 = vld [vmem:[%s0 + $0xa0] sm:$0xff]
  %v669 = vld [vmem:[%s0 + $0xa8] sm:$0xff]
  %v670 = vld [vmem:[%s0 + $0xb0] sm:$0xff]
  %v671 = vld [vmem:[%s0 + $0xb8] sm:$0xff]
  %v672 = vld [vmem:[%s0 + $0xc0] sm:$0xff]
  %v673 = vld [vmem:[%s0 + $0xc8] sm:$0xff]
  %v674 = vld [vmem:[%s0 + $0xd0] sm:$0xff]
  %702 = vrot.lane.b32.xlu0 %v648, 124
  %v703 = vpop.permute.xlu0 %702
  %704 = vrot.lane.b32.xlu0 %v649, 124
  %v705 = vpop.permute.xlu0 %704
  %706 = vrot.lane.b32.xlu0 %v650, 124
  %v707 = vpop.permute.xlu0 %706
  %708 = vrot.lane.b32.xlu0 %v651, 124
  %v709 = vpop.permute.xlu0 %708
  %710 = vrot.lane.b32.xlu0 %v652, 124
  %v711 = vpop.permute.xlu0 %710
  %712 = vrot.lane.b32.xlu0 %v653, 124
  %v713 = vpop.permute.xlu0 %712
  %714 = vrot.lane.b32.xlu0 %v654, 124
  %v715 = vpop.permute.xlu0 %714
  %716 = vrot.lane.b32.xlu0 %v655, 124
  %v717 = vpop.permute.xlu0 %716
  %718 = vrot.lane.b32.xlu0 %v656, 124
  %v719 = vpop.permute.xlu0 %718
  %720 = vrot.lane.b32.xlu0 %v657, 124
  %v721 = vpop.permute.xlu0 %720
  %722 = vrot.lane.b32.xlu0 %v658, 124
  %v723 = vpop.permute.xlu0 %722
  %724 = vrot.lane.b32.xlu0 %v659, 124
  %v725 = vpop.permute.xlu0 %724
  %726 = vrot.lane.b32.xlu0 %v660, 124
  %v727 = vpop.permute.xlu0 %726
  %728 = vrot.lane.b32.xlu0 %v661, 124
  %v729 = vpop.permute.xlu0 %728
  %730 = vrot.lane.b32.xlu0 %v662, 124
  %v731 = vpop.permute.xlu0 %730
  %732 = vrot.lane.b32.xlu0 %v663, 124
  %v733 = vpop.permute.xlu0 %732
  %734 = vrot.lane.b32.xlu0 %v664, 124
  %v735 = vpop.permute.xlu0 %734
  %736 = vrot.lane.b32.xlu0 %v665, 124
  %v737 = vpop.permute.xlu0 %736
  %738 = vrot.lane.b32.xlu0 %v666, 124
  %v739 = vpop.permute.xlu0 %738
  %740 = vrot.lane.b32.xlu0 %v667, 124
  %v741 = vpop.permute.xlu0 %740
  %742 = vrot.lane.b32.xlu0 %v668, 124
  %v743 = vpop.permute.xlu0 %742
  %744 = vrot.lane.b32.xlu0 %v669, 124
  %v745 = vpop.permute.xlu0 %744
  %746 = vrot.lane.b32.xlu0 %v670, 124
  %v747 = vpop.permute.xlu0 %746
  %748 = vrot.lane.b32.xlu0 %v671, 124
  %v749 = vpop.permute.xlu0 %748
  %750 = vrot.lane.b32.xlu0 %v672, 124
  %v751 = vpop.permute.xlu0 %750
  %752 = vrot.lane.b32.xlu0 %v673, 124
  %v753 = vpop.permute.xlu0 %752
  %754 = vrot.lane.b32.xlu0 %v674, 124
  %v755 = vpop.permute.xlu0 %754
  %vm756 = vcmask 1014784
  %v757 = vsel %vm756, %v703, %v705
  %v758 = vsel %vm756, %v705, %v707
  %v759 = vsel %vm756, %v707, %v709
  %v760 = vsel %vm756, %v709, %v711
  %v761 = vsel %vm756, %v711, %v713
  %v762 = vsel %vm756, %v713, %v715
  %v763 = vsel %vm756, %v715, %v717
  %v764 = vsel %vm756, %v717, %v719
  %v765 = vsel %vm756, %v721, %v723
  %v766 = vsel %vm756, %v723, %v725
  %v767 = vsel %vm756, %v725, %v727
  %v768 = vsel %vm756, %v727, %v729
  %v769 = vsel %vm756, %v729, %v731
  %v770 = vsel %vm756, %v731, %v733
  %v771 = vsel %vm756, %v733, %v735
  %v772 = vsel %vm756, %v735, %v737
  %v773 = vsel %vm756, %v739, %v741
  %v774 = vsel %vm756, %v741, %v743
  %v775 = vsel %vm756, %v743, %v745
  %v776 = vsel %vm756, %v745, %v747
  %v777 = vsel %vm756, %v747, %v749
  %v778 = vsel %vm756, %v749, %v751
  %v779 = vsel %vm756, %v751, %v753
  %v780 = vsel %vm756, %v753, %v755
  %808 = vst [vmem:[#allocation2 + $0x360] sm:$0xff] %v757
  %809 = vst [vmem:[#allocation2 + $0x368] sm:$0xff] %v758
  %810 = vst [vmem:[#allocation2 + $0x370] sm:$0xff] %v759
  %811 = vst [vmem:[#allocation2 + $0x378] sm:$0xff] %v760
  %812 = vst [vmem:[#allocation2 + $0x380] sm:$0xff] %v761
  %813 = vst [vmem:[#allocation2 + $0x388] sm:$0xff] %v762
  %814 = vst [vmem:[#allocation2 + $0x390] sm:$0xff] %v763
  %815 = vst [vmem:[#allocation2 + $0x398] sm:$0xff] %v764
  %816 = vst.msk [vmem:[#allocation2 + $0x3a0] sm:$0xff] %vm67, %v719
  %817 = vst [vmem:[#allocation2 + $0x3a8] sm:$0xff] %v765
  %818 = vst [vmem:[#allocation2 + $0x3b0] sm:$0xff] %v766
  %819 = vst [vmem:[#allocation2 + $0x3b8] sm:$0xff] %v767
  %820 = vst [vmem:[#allocation2 + $0x3c0] sm:$0xff] %v768
  %821 = vst [vmem:[#allocation2 + $0x3c8] sm:$0xff] %v769
  %822 = vst [vmem:[#allocation2 + $0x3d0] sm:$0xff] %v770
  %823 = vst [vmem:[#allocation2 + $0x3d8] sm:$0xff] %v771
  %824 = vst [vmem:[#allocation2 + $0x3e0] sm:$0xff] %v772
  %825 = vst.msk [vmem:[#allocation2 + $0x3e8] sm:$0xff] %vm67, %v737
  %826 = vst [vmem:[#allocation2 + $0x3f0] sm:$0xff] %v773
  %827 = vst [vmem:[#allocation2 + $0x3f8] sm:$0xff] %v774
  %828 = vst [vmem:[#allocation2 + $0x400] sm:$0xff] %v775
  %829 = vst [vmem:[#allocation2 + $0x408] sm:$0xff] %v776
  %830 = vst [vmem:[#allocation2 + $0x410] sm:$0xff] %v777
  %831 = vst [vmem:[#allocation2 + $0x418] sm:$0xff] %v778
  %832 = vst [vmem:[#allocation2 + $0x420] sm:$0xff] %v779
  %833 = vst [vmem:[#allocation2 + $0x428] sm:$0xff] %v780
  %834 = vst.msk [vmem:[#allocation2 + $0x430] sm:$0xff] %vm67, %v755
  %v835 = vld [vmem:[%s0] sm:$0xff]
  %v836 = vld [vmem:[%s0 + $0x8] sm:$0xff]
  %v837 = vld [vmem:[%s0 + $0x10] sm:$0xff]
  %v838 = vld [vmem:[%s0 + $0x18] sm:$0xff]
  %v839 = vld [vmem:[%s0 + $0x20] sm:$0xff]
  %v840 = vld [vmem:[%s0 + $0x28] sm:$0xff]
  %v841 = vld [vmem:[%s0 + $0x30] sm:$0xff]
  %v842 = vld [vmem:[%s0 + $0x38] sm:$0xff]
  %v843 = vld [vmem:[%s0 + $0x40] sm:$0xff]
  %v844 = vld [vmem:[%s0 + $0x48] sm:$0xff]
  %v845 = vld [vmem:[%s0 + $0x50] sm:$0xff]
  %v846 = vld [vmem:[%s0 + $0x58] sm:$0xff]
  %v847 = vld [vmem:[%s0 + $0x60] sm:$0xff]
  %v848 = vld [vmem:[%s0 + $0x68] sm:$0xff]
  %v849 = vld [vmem:[%s0 + $0x70] sm:$0xff]
  %v850 = vld [vmem:[%s0 + $0x78] sm:$0xff]
  %v851 = vld [vmem:[%s0 + $0x80] sm:$0xff]
  %v852 = vld [vmem:[%s0 + $0x88] sm:$0xff]
  %v853 = vld [vmem:[%s0 + $0x90] sm:$0xff]
  %v854 = vld [vmem:[%s0 + $0x98] sm:$0xff]
  %v855 = vld [vmem:[%s0 + $0xa0] sm:$0xff]
  %v856 = vld [vmem:[%s0 + $0xa8] sm:$0xff]
  %v857 = vld [vmem:[%s0 + $0xb0] sm:$0xff]
  %v858 = vld [vmem:[%s0 + $0xb8] sm:$0xff]
  %v859 = vld [vmem:[%s0 + $0xc0] sm:$0xff]
  %v860 = vld [vmem:[%s0 + $0xc8] sm:$0xff]
  %v861 = vld [vmem:[%s0 + $0xd0] sm:$0xff]
  %889 = vrot.lane.b32.xlu0 %v835, 123
  %v890 = vpop.permute.xlu0 %889
  %891 = vrot.lane.b32.xlu0 %v836, 123
  %v892 = vpop.permute.xlu0 %891
  %893 = vrot.lane.b32.xlu0 %v837, 123
  %v894 = vpop.permute.xlu0 %893
  %895 = vrot.lane.b32.xlu0 %v838, 123
  %v896 = vpop.permute.xlu0 %895
  %897 = vrot.lane.b32.xlu0 %v839, 123
  %v898 = vpop.permute.xlu0 %897
  %899 = vrot.lane.b32.xlu0 %v840, 123
  %v900 = vpop.permute.xlu0 %899
  %901 = vrot.lane.b32.xlu0 %v841, 123
  %v902 = vpop.permute.xlu0 %901
  %903 = vrot.lane.b32.xlu0 %v842, 123
  %v904 = vpop.permute.xlu0 %903
  %905 = vrot.lane.b32.xlu0 %v843, 123
  %v906 = vpop.permute.xlu0 %905
  %907 = vrot.lane.b32.xlu0 %v844, 123
  %v908 = vpop.permute.xlu0 %907
  %909 = vrot.lane.b32.xlu0 %v845, 123
  %v910 = vpop.permute.xlu0 %909
  %911 = vrot.lane.b32.xlu0 %v846, 123
  %v912 = vpop.permute.xlu0 %911
  %913 = vrot.lane.b32.xlu0 %v847, 123
  %v914 = vpop.permute.xlu0 %913
  %915 = vrot.lane.b32.xlu0 %v848, 123
  %v916 = vpop.permute.xlu0 %915
  %917 = vrot.lane.b32.xlu0 %v849, 123
  %v918 = vpop.permute.xlu0 %917
  %919 = vrot.lane.b32.xlu0 %v850, 123
  %v920 = vpop.permute.xlu0 %919
  %921 = vrot.lane.b32.xlu0 %v851, 123
  %v922 = vpop.permute.xlu0 %921
  %923 = vrot.lane.b32.xlu0 %v852, 123
  %v924 = vpop.permute.xlu0 %923
  %925 = vrot.lane.b32.xlu0 %v853, 123
  %v926 = vpop.permute.xlu0 %925
  %927 = vrot.lane.b32.xlu0 %v854, 123
  %v928 = vpop.permute.xlu0 %927
  %929 = vrot.lane.b32.xlu0 %v855, 123
  %v930 = vpop.permute.xlu0 %929
  %931 = vrot.lane.b32.xlu0 %v856, 123
  %v932 = vpop.permute.xlu0 %931
  %933 = vrot.lane.b32.xlu0 %v857, 123
  %v934 = vpop.permute.xlu0 %933
  %935 = vrot.lane.b32.xlu0 %v858, 123
  %v936 = vpop.permute.xlu0 %935
  %937 = vrot.lane.b32.xlu0 %v859, 123
  %v938 = vpop.permute.xlu0 %937
  %939 = vrot.lane.b32.xlu0 %v860, 123
  %v940 = vpop.permute.xlu0 %939
  %941 = vrot.lane.b32.xlu0 %v861, 123
  %v942 = vpop.permute.xlu0 %941
  %vm943 = vcmask 1006592
  %v944 = vsel %vm943, %v890, %v892
  %v945 = vsel %vm943, %v892, %v894
  %v946 = vsel %vm943, %v894, %v896
  %v947 = vsel %vm943, %v896, %v898
  %v948 = vsel %vm943, %v898, %v900
  %v949 = vsel %vm943, %v900, %v902
  %v950 = vsel %vm943, %v902, %v904
  %v951 = vsel %vm943, %v904, %v906
  %v952 = vsel %vm943, %v908, %v910
  %v953 = vsel %vm943, %v910, %v912
  %v954 = vsel %vm943, %v912, %v914
  %v955 = vsel %vm943, %v914, %v916
  %v956 = vsel %vm943, %v916, %v918
  %v957 = vsel %vm943, %v918, %v920
  %v958 = vsel %vm943, %v920, %v922
  %v959 = vsel %vm943, %v922, %v924
  %v960 = vsel %vm943, %v926, %v928
  %v961 = vsel %vm943, %v928, %v930
  %v962 = vsel %vm943, %v930, %v932
  %v963 = vsel %vm943, %v932, %v934
  %v964 = vsel %vm943, %v934, %v936
  %v965 = vsel %vm943, %v936, %v938
  %v966 = vsel %vm943, %v938, %v940
  %v967 = vsel %vm943, %v940, %v942
  %995 = vst [vmem:[#allocation2 + $0x438] sm:$0xff] %v944
  %996 = vst [vmem:[#allocation2 + $0x440] sm:$0xff] %v945
  %997 = vst [vmem:[#allocation2 + $0x448] sm:$0xff] %v946
  %998 = vst [vmem:[#allocation2 + $0x450] sm:$0xff] %v947
  %999 = vst [vmem:[#allocation2 + $0x458] sm:$0xff] %v948
  %1000 = vst [vmem:[#allocation2 + $0x460] sm:$0xff] %v949
  %1001 = vst [vmem:[#allocation2 + $0x468] sm:$0xff] %v950
  %1002 = vst [vmem:[#allocation2 + $0x470] sm:$0xff] %v951
  %1003 = vst.msk [vmem:[#allocation2 + $0x478] sm:$0xff] %vm67, %v906
  %1004 = vst [vmem:[#allocation2 + $0x480] sm:$0xff] %v952
  %1005 = vst [vmem:[#allocation2 + $0x488] sm:$0xff] %v953
  %1006 = vst [vmem:[#allocation2 + $0x490] sm:$0xff] %v954
  %1007 = vst [vmem:[#allocation2 + $0x498] sm:$0xff] %v955
  %1008 = vst [vmem:[#allocation2 + $0x4a0] sm:$0xff] %v956
  %1009 = vst [vmem:[#allocation2 + $0x4a8] sm:$0xff] %v957
  %1010 = vst [vmem:[#allocation2 + $0x4b0] sm:$0xff] %v958
  %1011 = vst [vmem:[#allocation2 + $0x4b8] sm:$0xff] %v959
  %1012 = vst.msk [vmem:[#allocation2 + $0x4c0] sm:$0xff] %vm67, %v924
  %1013 = vst [vmem:[#allocation2 + $0x4c8] sm:$0xff] %v960
  %1014 = vst [vmem:[#allocation2 + $0x4d0] sm:$0xff] %v961
  %1015 = vst [vmem:[#allocation2 + $0x4d8] sm:$0xff] %v962
  %1016 = vst [vmem:[#allocation2 + $0x4e0] sm:$0xff] %v963
  %1017 = vst [vmem:[#allocation2 + $0x4e8] sm:$0xff] %v964
  %1018 = vst [vmem:[#allocation2 + $0x4f0] sm:$0xff] %v965
  %1019 = vst [vmem:[#allocation2 + $0x4f8] sm:$0xff] %v966
  %1020 = vst [vmem:[#allocation2 + $0x500] sm:$0xff] %v967
  %1021 = vst.msk [vmem:[#allocation2 + $0x508] sm:$0xff] %vm67, %v942
  %v1022 = vld [vmem:[%s0] sm:$0xff]
  %v1023 = vld [vmem:[%s0 + $0x8] sm:$0xff]
  %v1024 = vld [vmem:[%s0 + $0x10] sm:$0xff]
  %v1025 = vld [vmem:[%s0 + $0x18] sm:$0xff]
  %v1026 = vld [vmem:[%s0 + $0x20] sm:$0xff]
  %v1027 = vld [vmem:[%s0 + $0x28] sm:$0xff]
  %v1028 = vld [vmem:[%s0 + $0x30] sm:$0xff]
  %v1029 = vld [vmem:[%s0 + $0x38] sm:$0xff]
  %v1030 = vld [vmem:[%s0 + $0x40] sm:$0xff]
  %v1031 = vld [vmem:[%s0 + $0x48] sm:$0xff]
  %v1032 = vld [vmem:[%s0 + $0x50] sm:$0xff]
  %v1033 = vld [vmem:[%s0 + $0x58] sm:$0xff]
  %v1034 = vld [vmem:[%s0 + $0x60] sm:$0xff]
  %v1035 = vld [vmem:[%s0 + $0x68] sm:$0xff]
  %v1036 = vld [vmem:[%s0 + $0x70] sm:$0xff]
  %v1037 = vld [vmem:[%s0 + $0x78] sm:$0xff]
  %v1038 = vld [vmem:[%s0 + $0x80] sm:$0xff]
  %v1039 = vld [vmem:[%s0 + $0x88] sm:$0xff]
  %v1040 = vld [vmem:[%s0 + $0x90] sm:$0xff]
  %v1041 = vld [vmem:[%s0 + $0x98] sm:$0xff]
  %v1042 = vld [vmem:[%s0 + $0xa0] sm:$0xff]
  %v1043 = vld [vmem:[%s0 + $0xa8] sm:$0xff]
  %v1044 = vld [vmem:[%s0 + $0xb0] sm:$0xff]
  %v1045 = vld [vmem:[%s0 + $0xb8] sm:$0xff]
  %v1046 = vld [vmem:[%s0 + $0xc0] sm:$0xff]
  %v1047 = vld [vmem:[%s0 + $0xc8] sm:$0xff]
  %v1048 = vld [vmem:[%s0 + $0xd0] sm:$0xff]
  %1076 = vrot.lane.b32.xlu0 %v1022, 122
  %v1077 = vpop.permute.xlu0 %1076
  %1078 = vrot.lane.b32.xlu0 %v1023, 122
  %v1079 = vpop.permute.xlu0 %1078
  %1080 = vrot.lane.b32.xlu0 %v1024, 122
  %v1081 = vpop.permute.xlu0 %1080
  %1082 = vrot.lane.b32.xlu0 %v1025, 122
  %v1083 = vpop.permute.xlu0 %1082
  %1084 = vrot.lane.b32.xlu0 %v1026, 122
  %v1085 = vpop.permute.xlu0 %1084
  %1086 = vrot.lane.b32.xlu0 %v1027, 122
  %v1087 = vpop.permute.xlu0 %1086
  %1088 = vrot.lane.b32.xlu0 %v1028, 122
  %v1089 = vpop.permute.xlu0 %1088
  %1090 = vrot.lane.b32.xlu0 %v1029, 122
  %v1091 = vpop.permute.xlu0 %1090
  %1092 = vrot.lane.b32.xlu0 %v1030, 122
  %v1093 = vpop.permute.xlu0 %1092
  %1094 = vrot.lane.b32.xlu0 %v1031, 122
  %v1095 = vpop.permute.xlu0 %1094
  %1096 = vrot.lane.b32.xlu0 %v1032, 122
  %v1097 = vpop.permute.xlu0 %1096
  %1098 = vrot.lane.b32.xlu0 %v1033, 122
  %v1099 = vpop.permute.xlu0 %1098
  %1100 = vrot.lane.b32.xlu0 %v1034, 122
  %v1101 = vpop.permute.xlu0 %1100
  %1102 = vrot.lane.b32.xlu0 %v1035, 122
  %v1103 = vpop.permute.xlu0 %1102
  %1104 = vrot.lane.b32.xlu0 %v1036, 122
  %v1105 = vpop.permute.xlu0 %1104
  %1106 = vrot.lane.b32.xlu0 %v1037, 122
  %v1107 = vpop.permute.xlu0 %1106
  %1108 = vrot.lane.b32.xlu0 %v1038, 122
  %v1109 = vpop.permute.xlu0 %1108
  %1110 = vrot.lane.b32.xlu0 %v1039, 122
  %v1111 = vpop.permute.xlu0 %1110
  %1112 = vrot.lane.b32.xlu0 %v1040, 122
  %v1113 = vpop.permute.xlu0 %1112
  %1114 = vrot.lane.b32.xlu0 %v1041, 122
  %v1115 = vpop.permute.xlu0 %1114
  %1116 = vrot.lane.b32.xlu0 %v1042, 122
  %v1117 = vpop.permute.xlu0 %1116
  %1118 = vrot.lane.b32.xlu0 %v1043, 122
  %v1119 = vpop.permute.xlu0 %1118
  %1120 = vrot.lane.b32.xlu0 %v1044, 122
  %v1121 = vpop.permute.xlu0 %1120
  %1122 = vrot.lane.b32.xlu0 %v1045, 122
  %v1123 = vpop.permute.xlu0 %1122
  %1124 = vrot.lane.b32.xlu0 %v1046, 122
  %v1125 = vpop.permute.xlu0 %1124
  %1126 = vrot.lane.b32.xlu0 %v1047, 122
  %v1127 = vpop.permute.xlu0 %1126
  %1128 = vrot.lane.b32.xlu0 %v1048, 122
  %v1129 = vpop.permute.xlu0 %1128
  %vm1130 = vcmask 998400
  %v1131 = vsel %vm1130, %v1077, %v1079
  %v1132 = vsel %vm1130, %v1079, %v1081
  %v1133 = vsel %vm1130, %v1081, %v1083
  %v1134 = vsel %vm1130, %v1083, %v1085
  %v1135 = vsel %vm1130, %v1085, %v1087
  %v1136 = vsel %vm1130, %v1087, %v1089
  %v1137 = vsel %vm1130, %v1089, %v1091
  %v1138 = vsel %vm1130, %v1091, %v1093
  %v1139 = vsel %vm1130, %v1095, %v1097
  %v1140 = vsel %vm1130, %v1097, %v1099
  %v1141 = vsel %vm1130, %v1099, %v1101
  %v1142 = vsel %vm1130, %v1101, %v1103
  %v1143 = vsel %vm1130, %v1103, %v1105
  %v1144 = vsel %vm1130, %v1105, %v1107
  %v1145 = vsel %vm1130, %v1107, %v1109
  %v1146 = vsel %vm1130, %v1109, %v1111
  %v1147 = vsel %vm1130, %v1113, %v1115
  %v1148 = vsel %vm1130, %v1115, %v1117
  %v1149 = vsel %vm1130, %v1117, %v1119
  %v1150 = vsel %vm1130, %v1119, %v1121
  %v1151 = vsel %vm1130, %v1121, %v1123
  %v1152 = vsel %vm1130, %v1123, %v1125
  %v1153 = vsel %vm1130, %v1125, %v1127
  %v1154 = vsel %vm1130, %v1127, %v1129
  %1182 = vst [vmem:[#allocation2 + $0x510] sm:$0xff] %v1131
  %1183 = vst [vmem:[#allocation2 + $0x518] sm:$0xff] %v1132
  %1184 = vst [vmem:[#allocation2 + $0x520] sm:$0xff] %v1133
  %1185 = vst [vmem:[#allocation2 + $0x528] sm:$0xff] %v1134
  %1186 = vst [vmem:[#allocation2 + $0x530] sm:$0xff] %v1135
  %1187 = vst [vmem:[#allocation2 + $0x538] sm:$0xff] %v1136
  %1188 = vst [vmem:[#allocation2 + $0x540] sm:$0xff] %v1137
  %1189 = vst [vmem:[#allocation2 + $0x548] sm:$0xff] %v1138
  %1190 = vst.msk [vmem:[#allocation2 + $0x550] sm:$0xff] %vm67, %v1093
  %1191 = vst [vmem:[#allocation2 + $0x558] sm:$0xff] %v1139
  %1192 = vst [vmem:[#allocation2 + $0x560] sm:$0xff] %v1140
  %1193 = vst [vmem:[#allocation2 + $0x568] sm:$0xff] %v1141
  %1194 = vst [vmem:[#allocation2 + $0x570] sm:$0xff] %v1142
  %1195 = vst [vmem:[#allocation2 + $0x578] sm:$0xff] %v1143
  %1196 = vst [vmem:[#allocation2 + $0x580] sm:$0xff] %v1144
  %1197 = vst [vmem:[#allocation2 + $0x588] sm:$0xff] %v1145
  %1198 = vst [vmem:[#allocation2 + $0x590] sm:$0xff] %v1146
  %1199 = vst.msk [vmem:[#allocation2 + $0x598] sm:$0xff] %vm67, %v1111
  %1200 = vst [vmem:[#allocation2 + $0x5a0] sm:$0xff] %v1147
  %1201 = vst [vmem:[#allocation2 + $0x5a8] sm:$0xff] %v1148
  %1202 = vst [vmem:[#allocation2 + $0x5b0] sm:$0xff] %v1149
  %1203 = vst [vmem:[#allocation2 + $0x5b8] sm:$0xff] %v1150
  %1204 = vst [vmem:[#allocation2 + $0x5c0] sm:$0xff] %v1151
  %1205 = vst [vmem:[#allocation2 + $0x5c8] sm:$0xff] %v1152
  %1206 = vst [vmem:[#allocation2 + $0x5d0] sm:$0xff] %v1153
  %1207 = vst [vmem:[#allocation2 + $0x5d8] sm:$0xff] %v1154
  %1208 = vst.msk [vmem:[#allocation2 + $0x5e0] sm:$0xff] %vm67, %v1129
  %v1209 = vld [vmem:[%s0] sm:$0xff]
  %v1210 = vld [vmem:[%s0 + $0x8] sm:$0xff]
  %v1211 = vld [vmem:[%s0 + $0x10] sm:$0xff]
  %v1212 = vld [vmem:[%s0 + $0x18] sm:$0xff]
  %v1213 = vld [vmem:[%s0 + $0x20] sm:$0xff]
  %v1214 = vld [vmem:[%s0 + $0x28] sm:$0xff]
  %v1215 = vld [vmem:[%s0 + $0x30] sm:$0xff]
  %v1216 = vld [vmem:[%s0 + $0x38] sm:$0xff]
  %v1217 = vld [vmem:[%s0 + $0x40] sm:$0xff]
  %v1218 = vld [vmem:[%s0 + $0x48] sm:$0xff]
  %v1219 = vld [vmem:[%s0 + $0x50] sm:$0xff]
  %v1220 = vld [vmem:[%s0 + $0x58] sm:$0xff]
  %v1221 = vld [vmem:[%s0 + $0x60] sm:$0xff]
  %v1222 = vld [vmem:[%s0 + $0x68] sm:$0xff]
  %v1223 = vld [vmem:[%s0 + $0x70] sm:$0xff]
  %v1224 = vld [vmem:[%s0 + $0x78] sm:$0xff]
  %v1225 = vld [vmem:[%s0 + $0x80] sm:$0xff]
  %v1226 = vld [vmem:[%s0 + $0x88] sm:$0xff]
  %v1227 = vld [vmem:[%s0 + $0x90] sm:$0xff]
  %v1228 = vld [vmem:[%s0 + $0x98] sm:$0xff]
  %v1229 = vld [vmem:[%s0 + $0xa0] sm:$0xff]
  %v1230 = vld [vmem:[%s0 + $0xa8] sm:$0xff]
  %v1231 = vld [vmem:[%s0 + $0xb0] sm:$0xff]
  %v1232 = vld [vmem:[%s0 + $0xb8] sm:$0xff]
  %v1233 = vld [vmem:[%s0 + $0xc0] sm:$0xff]
  %v1234 = vld [vmem:[%s0 + $0xc8] sm:$0xff]
  %v1235 = vld [vmem:[%s0 + $0xd0] sm:$0xff]
  %1263 = vrot.lane.b32.xlu0 %v1209, 121
  %v1264 = vpop.permute.xlu0 %1263
  %1265 = vrot.lane.b32.xlu0 %v1210, 121
  %v1266 = vpop.permute.xlu0 %1265
  %1267 = vrot.lane.b32.xlu0 %v1211, 121
  %v1268 = vpop.permute.xlu0 %1267
  %1269 = vrot.lane.b32.xlu0 %v1212, 121
  %v1270 = vpop.permute.xlu0 %1269
  %1271 = vrot.lane.b32.xlu0 %v1213, 121
  %v1272 = vpop.permute.xlu0 %1271
  %1273 = vrot.lane.b32.xlu0 %v1214, 121
  %v1274 = vpop.permute.xlu0 %1273
  %1275 = vrot.lane.b32.xlu0 %v1215, 121
  %v1276 = vpop.permute.xlu0 %1275
  %1277 = vrot.lane.b32.xlu0 %v1216, 121
  %v1278 = vpop.permute.xlu0 %1277
  %1279 = vrot.lane.b32.xlu0 %v1217, 121
  %v1280 = vpop.permute.xlu0 %1279
  %1281 = vrot.lane.b32.xlu0 %v1218, 121
  %v1282 = vpop.permute.xlu0 %1281
  %1283 = vrot.lane.b32.xlu0 %v1219, 121
  %v1284 = vpop.permute.xlu0 %1283
  %1285 = vrot.lane.b32.xlu0 %v1220, 121
  %v1286 = vpop.permute.xlu0 %1285
  %1287 = vrot.lane.b32.xlu0 %v1221, 121
  %v1288 = vpop.permute.xlu0 %1287
  %1289 = vrot.lane.b32.xlu0 %v1222, 121
  %v1290 = vpop.permute.xlu0 %1289
  %1291 = vrot.lane.b32.xlu0 %v1223, 121
  %v1292 = vpop.permute.xlu0 %1291
  %1293 = vrot.lane.b32.xlu0 %v1224, 121
  %v1294 = vpop.permute.xlu0 %1293
  %1295 = vrot.lane.b32.xlu0 %v1225, 121
  %v1296 = vpop.permute.xlu0 %1295
  %1297 = vrot.lane.b32.xlu0 %v1226, 121
  %v1298 = vpop.permute.xlu0 %1297
  %1299 = vrot.lane.b32.xlu0 %v1227, 121
  %v1300 = vpop.permute.xlu0 %1299
  %1301 = vrot.lane.b32.xlu0 %v1228, 121
  %v1302 = vpop.permute.xlu0 %1301
  %1303 = vrot.lane.b32.xlu0 %v1229, 121
  %v1304 = vpop.permute.xlu0 %1303
  %1305 = vrot.lane.b32.xlu0 %v1230, 121
  %v1306 = vpop.permute.xlu0 %1305
  %1307 = vrot.lane.b32.xlu0 %v1231, 121
  %v1308 = vpop.permute.xlu0 %1307
  %1309 = vrot.lane.b32.xlu0 %v1232, 121
  %v1310 = vpop.permute.xlu0 %1309
  %1311 = vrot.lane.b32.xlu0 %v1233, 121
  %v1312 = vpop.permute.xlu0 %1311
  %1313 = vrot.lane.b32.xlu0 %v1234, 121
  %v1314 = vpop.permute.xlu0 %1313
  %1315 = vrot.lane.b32.xlu0 %v1235, 121
  %v1316 = vpop.permute.xlu0 %1315
  %vm1317 = vcmask 990208
  %v1318 = vsel %vm1317, %v1264, %v1266
  %v1319 = vsel %vm1317, %v1266, %v1268
  %v1320 = vsel %vm1317, %v1268, %v1270
  %v1321 = vsel %vm1317, %v1270, %v1272
  %v1322 = vsel %vm1317, %v1272, %v1274
  %v1323 = vsel %vm1317, %v1274, %v1276
  %v1324 = vsel %vm1317, %v1276, %v1278
  %v1325 = vsel %vm1317, %v1278, %v1280
  %v1326 = vsel %vm1317, %v1282, %v1284
  %v1327 = vsel %vm1317, %v1284, %v1286
  %v1328 = vsel %vm1317, %v1286, %v1288
  %v1329 = vsel %vm1317, %v1288, %v1290
  %v1330 = vsel %vm1317, %v1290, %v1292
  %v1331 = vsel %vm1317, %v1292, %v1294
  %v1332 = vsel %vm1317, %v1294, %v1296
  %v1333 = vsel %vm1317, %v1296, %v1298
  %v1334 = vsel %vm1317, %v1300, %v1302
  %v1335 = vsel %vm1317, %v1302, %v1304
  %v1336 = vsel %vm1317, %v1304, %v1306
  %v1337 = vsel %vm1317, %v1306, %v1308
  %v1338 = vsel %vm1317, %v1308, %v1310
  %v1339 = vsel %vm1317, %v1310, %v1312
  %v1340 = vsel %vm1317, %v1312, %v1314
  %v1341 = vsel %vm1317, %v1314, %v1316
  %1369 = vst [vmem:[#allocation2 + $0x5e8] sm:$0xff] %v1318
  %1370 = vst [vmem:[#allocation2 + $0x5f0] sm:$0xff] %v1319
  %1371 = vst [vmem:[#allocation2 + $0x5f8] sm:$0xff] %v1320
  %1372 = vst [vmem:[#allocation2 + $0x600] sm:$0xff] %v1321
  %1373 = vst [vmem:[#allocation2 + $0x608] sm:$0xff] %v1322
  %1374 = vst [vmem:[#allocation2 + $0x610] sm:$0xff] %v1323
  %1375 = vst [vmem:[#allocation2 + $0x618] sm:$0xff] %v1324
  %1376 = vst [vmem:[#allocation2 + $0x620] sm:$0xff] %v1325
  %1377 = vst.msk [vmem:[#allocation2 + $0x628] sm:$0xff] %vm67, %v1280
  %1378 = vst [vmem:[#allocation2 + $0x630] sm:$0xff] %v1326
  %1379 = vst [vmem:[#allocation2 + $0x638] sm:$0xff] %v1327
  %1380 = vst [vmem:[#allocation2 + $0x640] sm:$0xff] %v1328
  %1381 = vst [vmem:[#allocation2 + $0x648] sm:$0xff] %v1329
  %1382 = vst [vmem:[#allocation2 + $0x650] sm:$0xff] %v1330
  %1383 = vst [vmem:[#allocation2 + $0x658] sm:$0xff] %v1331
  %1384 = vst [vmem:[#allocation2 + $0x660] sm:$0xff] %v1332
  %1385 = vst [vmem:[#allocation2 + $0x668] sm:$0xff] %v1333
  %1386 = vst.msk [vmem:[#allocation2 + $0x670] sm:$0xff] %vm67, %v1298
  %1387 = vst [vmem:[#allocation2 + $0x678] sm:$0xff] %v1334
  %1388 = vst [vmem:[#allocation2 + $0x680] sm:$0xff] %v1335
  %1389 = vst [vmem:[#allocation2 + $0x688] sm:$0xff] %v1336
  %1390 = vst [vmem:[#allocation2 + $0x690] sm:$0xff] %v1337
  %1391 = vst [vmem:[#allocation2 + $0x698] sm:$0xff] %v1338
  %1392 = vst [vmem:[#allocation2 + $0x6a0] sm:$0xff] %v1339
  %1393 = vst [vmem:[#allocation2 + $0x6a8] sm:$0xff] %v1340
  %1394 = vst [vmem:[#allocation2 + $0x6b0] sm:$0xff] %v1341
  %1395 = vst.msk [vmem:[#allocation2 + $0x6b8] sm:$0xff] %vm67, %v1316
  %v1396 = vld [vmem:[%s0] sm:$0xff]
  %v1397 = vld [vmem:[%s0 + $0x8] sm:$0xff]
  %v1398 = vld [vmem:[%s0 + $0x10] sm:$0xff]
  %v1399 = vld [vmem:[%s0 + $0x18] sm:$0xff]
  %v1400 = vld [vmem:[%s0 + $0x20] sm:$0xff]
  %v1401 = vld [vmem:[%s0 + $0x28] sm:$0xff]
  %v1402 = vld [vmem:[%s0 + $0x30] sm:$0xff]
  %v1403 = vld [vmem:[%s0 + $0x38] sm:$0xff]
  %v1404 = vld [vmem:[%s0 + $0x40] sm:$0xff]
  %v1405 = vld [vmem:[%s0 + $0x48] sm:$0xff]
  %v1406 = vld [vmem:[%s0 + $0x50] sm:$0xff]
  %v1407 = vld [vmem:[%s0 + $0x58] sm:$0xff]
  %v1408 = vld [vmem:[%s0 + $0x60] sm:$0xff]
  %v1409 = vld [vmem:[%s0 + $0x68] sm:$0xff]
  %v1410 = vld [vmem:[%s0 + $0x70] sm:$0xff]
  %v1411 = vld [vmem:[%s0 + $0x78] sm:$0xff]
  %v1412 = vld [vmem:[%s0 + $0x80] sm:$0xff]
  %v1413 = vld [vmem:[%s0 + $0x88] sm:$0xff]
  %v1414 = vld [vmem:[%s0 + $0x90] sm:$0xff]
  %v1415 = vld [vmem:[%s0 + $0x98] sm:$0xff]
  %v1416 = vld [vmem:[%s0 + $0xa0] sm:$0xff]
  %v1417 = vld [vmem:[%s0 + $0xa8] sm:$0xff]
  %v1418 = vld [vmem:[%s0 + $0xb0] sm:$0xff]
  %v1419 = vld [vmem:[%s0 + $0xb8] sm:$0xff]
  %v1420 = vld [vmem:[%s0 + $0xc0] sm:$0xff]
  %v1421 = vld [vmem:[%s0 + $0xc8] sm:$0xff]
  %v1422 = vld [vmem:[%s0 + $0xd0] sm:$0xff]
  %1450 = vrot.lane.b32.xlu0 %v1396, 120
  %v1451 = vpop.permute.xlu0 %1450
  %1452 = vrot.lane.b32.xlu0 %v1397, 120
  %v1453 = vpop.permute.xlu0 %1452
  %1454 = vrot.lane.b32.xlu0 %v1398, 120
  %v1455 = vpop.permute.xlu0 %1454
  %1456 = vrot.lane.b32.xlu0 %v1399, 120
  %v1457 = vpop.permute.xlu0 %1456
  %1458 = vrot.lane.b32.xlu0 %v1400, 120
  %v1459 = vpop.permute.xlu0 %1458
  %1460 = vrot.lane.b32.xlu0 %v1401, 120
  %v1461 = vpop.permute.xlu0 %1460
  %1462 = vrot.lane.b32.xlu0 %v1402, 120
  %v1463 = vpop.permute.xlu0 %1462
  %1464 = vrot.lane.b32.xlu0 %v1403, 120
  %v1465 = vpop.permute.xlu0 %1464
  %1466 = vrot.lane.b32.xlu0 %v1404, 120
  %v1467 = vpop.permute.xlu0 %1466
  %1468 = vrot.lane.b32.xlu0 %v1405, 120
  %v1469 = vpop.permute.xlu0 %1468
  %1470 = vrot.lane.b32.xlu0 %v1406, 120
  %v1471 = vpop.permute.xlu0 %1470
  %1472 = vrot.lane.b32.xlu0 %v1407, 120
  %v1473 = vpop.permute.xlu0 %1472
  %1474 = vrot.lane.b32.xlu0 %v1408, 120
  %v1475 = vpop.permute.xlu0 %1474
  %1476 = vrot.lane.b32.xlu0 %v1409, 120
  %v1477 = vpop.permute.xlu0 %1476
  %1478 = vrot.lane.b32.xlu0 %v1410, 120
  %v1479 = vpop.permute.xlu0 %1478
  %1480 = vrot.lane.b32.xlu0 %v1411, 120
  %v1481 = vpop.permute.xlu0 %1480
  %1482 = vrot.lane.b32.xlu0 %v1412, 120
  %v1483 = vpop.permute.xlu0 %1482
  %1484 = vrot.lane.b32.xlu0 %v1413, 120
  %v1485 = vpop.permute.xlu0 %1484
  %1486 = vrot.lane.b32.xlu0 %v1414, 120
  %v1487 = vpop.permute.xlu0 %1486
  %1488 = vrot.lane.b32.xlu0 %v1415, 120
  %v1489 = vpop.permute.xlu0 %1488
  %1490 = vrot.lane.b32.xlu0 %v1416, 120
  %v1491 = vpop.permute.xlu0 %1490
  %1492 = vrot.lane.b32.xlu0 %v1417, 120
  %v1493 = vpop.permute.xlu0 %1492
  %1494 = vrot.lane.b32.xlu0 %v1418, 120
  %v1495 = vpop.permute.xlu0 %1494
  %1496 = vrot.lane.b32.xlu0 %v1419, 120
  %v1497 = vpop.permute.xlu0 %1496
  %1498 = vrot.lane.b32.xlu0 %v1420, 120
  %v1499 = vpop.permute.xlu0 %1498
  %1500 = vrot.lane.b32.xlu0 %v1421, 120
  %v1501 = vpop.permute.xlu0 %1500
  %1502 = vrot.lane.b32.xlu0 %v1422, 120
  %v1503 = vpop.permute.xlu0 %1502
  %vm1504 = vcmask 982016
  %v1505 = vsel %vm1504, %v1451, %v1453
  %v1506 = vsel %vm1504, %v1453, %v1455
  %v1507 = vsel %vm1504, %v1455, %v1457
  %v1508 = vsel %vm1504, %v1457, %v1459
  %v1509 = vsel %vm1504, %v1459, %v1461
  %v1510 = vsel %vm1504, %v1461, %v1463
  %v1511 = vsel %vm1504, %v1463, %v1465
  %v1512 = vsel %vm1504, %v1465, %v1467
  %v1513 = vsel %vm1504, %v1469, %v1471
  %v1514 = vsel %vm1504, %v1471, %v1473
  %v1515 = vsel %vm1504, %v1473, %v1475
  %v1516 = vsel %vm1504, %v1475, %v1477
  %v1517 = vsel %vm1504, %v1477, %v1479
  %v1518 = vsel %vm1504, %v1479, %v1481
  %v1519 = vsel %vm1504, %v1481, %v1483
  %v1520 = vsel %vm1504, %v1483, %v1485
  %v1521 = vsel %vm1504, %v1487, %v1489
  %v1522 = vsel %vm1504, %v1489, %v1491
  %v1523 = vsel %vm1504, %v1491, %v1493
  %v1524 = vsel %vm1504, %v1493, %v1495
  %v1525 = vsel %vm1504, %v1495, %v1497
  %v1526 = vsel %vm1504, %v1497, %v1499
  %v1527 = vsel %vm1504, %v1499, %v1501
  %v1528 = vsel %vm1504, %v1501, %v1503
  %1556 = vst [vmem:[#allocation2 + $0x6c0] sm:$0xff] %v1505
  %1557 = vst [vmem:[#allocation2 + $0x6c8] sm:$0xff] %v1506
  %1558 = vst [vmem:[#allocation2 + $0x6d0] sm:$0xff] %v1507
  %1559 = vst [vmem:[#allocation2 + $0x6d8] sm:$0xff] %v1508
  %1560 = vst [vmem:[#allocation2 + $0x6e0] sm:$0xff] %v1509
  %1561 = vst [vmem:[#allocation2 + $0x6e8] sm:$0xff] %v1510
  %1562 = vst [vmem:[#allocation2 + $0x6f0] sm:$0xff] %v1511
  %1563 = vst [vmem:[#allocation2 + $0x6f8] sm:$0xff] %v1512
  %1564 = vst.msk [vmem:[#allocation2 + $0x700] sm:$0xff] %vm67, %v1467
  %1565 = vst [vmem:[#allocation2 + $0x708] sm:$0xff] %v1513
  %1566 = vst [vmem:[#allocation2 + $0x710] sm:$0xff] %v1514
  %1567 = vst [vmem:[#allocation2 + $0x718] sm:$0xff] %v1515
  %1568 = vst [vmem:[#allocation2 + $0x720] sm:$0xff] %v1516
  %1569 = vst [vmem:[#allocation2 + $0x728] sm:$0xff] %v1517
  %1570 = vst [vmem:[#allocation2 + $0x730] sm:$0xff] %v1518
  %1571 = vst [vmem:[#allocation2 + $0x738] sm:$0xff] %v1519
  %1572 = vst [vmem:[#allocation2 + $0x740] sm:$0xff] %v1520
  %1573 = vst.msk [vmem:[#allocation2 + $0x748] sm:$0xff] %vm67, %v1485
  %1574 = vst [vmem:[#allocation2 + $0x750] sm:$0xff] %v1521
  %1575 = vst [vmem:[#allocation2 + $0x758] sm:$0xff] %v1522
  %1576 = vst [vmem:[#allocation2 + $0x760] sm:$0xff] %v1523
  %1577 = vst [vmem:[#allocation2 + $0x768] sm:$0xff] %v1524
  %1578 = vst [vmem:[#allocation2 + $0x770] sm:$0xff] %v1525
  %1579 = vst [vmem:[#allocation2 + $0x778] sm:$0xff] %v1526
  %1580 = vst [vmem:[#allocation2 + $0x780] sm:$0xff] %v1527
  %1581 = vst [vmem:[#allocation2 + $0x788] sm:$0xff] %v1528
  %1582 = vst.msk [vmem:[#allocation2 + $0x790] sm:$0xff] %vm67, %v1503
  %v1583 = vld [vmem:[%s0] sm:$0xff]
  %v1584 = vld [vmem:[%s0 + $0x8] sm:$0xff]
  %v1585 = vld [vmem:[%s0 + $0x10] sm:$0xff]
  %v1586 = vld [vmem:[%s0 + $0x18] sm:$0xff]
  %v1587 = vld [vmem:[%s0 + $0x20] sm:$0xff]
  %v1588 = vld [vmem:[%s0 + $0x28] sm:$0xff]
  %v1589 = vld [vmem:[%s0 + $0x30] sm:$0xff]
  %v1590 = vld [vmem:[%s0 + $0x38] sm:$0xff]
  %v1591 = vld [vmem:[%s0 + $0x40] sm:$0xff]
  %v1592 = vld [vmem:[%s0 + $0x48] sm:$0xff]
  %v1593 = vld [vmem:[%s0 + $0x50] sm:$0xff]
  %v1594 = vld [vmem:[%s0 + $0x58] sm:$0xff]
  %v1595 = vld [vmem:[%s0 + $0x60] sm:$0xff]
  %v1596 = vld [vmem:[%s0 + $0x68] sm:$0xff]
  %v1597 = vld [vmem:[%s0 + $0x70] sm:$0xff]
  %v1598 = vld [vmem:[%s0 + $0x78] sm:$0xff]
  %v1599 = vld [vmem:[%s0 + $0x80] sm:$0xff]
  %v1600 = vld [vmem:[%s0 + $0x88] sm:$0xff]
  %v1601 = vld [vmem:[%s0 + $0x90] sm:$0xff]
  %v1602 = vld [vmem:[%s0 + $0x98] sm:$0xff]
  %v1603 = vld [vmem:[%s0 + $0xa0] sm:$0xff]
  %v1604 = vld [vmem:[%s0 + $0xa8] sm:$0xff]
  %v1605 = vld [vmem:[%s0 + $0xb0] sm:$0xff]
  %v1606 = vld [vmem:[%s0 + $0xb8] sm:$0xff]
  %v1607 = vld [vmem:[%s0 + $0xc0] sm:$0xff]
  %v1608 = vld [vmem:[%s0 + $0xc8] sm:$0xff]
  %v1609 = vld [vmem:[%s0 + $0xd0] sm:$0xff]
  %1637 = vrot.lane.b32.xlu0 %v1583, 119
  %v1638 = vpop.permute.xlu0 %1637
  %1639 = vrot.lane.b32.xlu0 %v1584, 119
  %v1640 = vpop.permute.xlu0 %1639
  %1641 = vrot.lane.b32.xlu0 %v1585, 119
  %v1642 = vpop.permute.xlu0 %1641
  %1643 = vrot.lane.b32.xlu0 %v1586, 119
  %v1644 = vpop.permute.xlu0 %1643
  %1645 = vrot.lane.b32.xlu0 %v1587, 119
  %v1646 = vpop.permute.xlu0 %1645
  %1647 = vrot.lane.b32.xlu0 %v1588, 119
  %v1648 = vpop.permute.xlu0 %1647
  %1649 = vrot.lane.b32.xlu0 %v1589, 119
  %v1650 = vpop.permute.xlu0 %1649
  %1651 = vrot.lane.b32.xlu0 %v1590, 119
  %v1652 = vpop.permute.xlu0 %1651
  %1653 = vrot.lane.b32.xlu0 %v1591, 119
  %v1654 = vpop.permute.xlu0 %1653
  %1655 = vrot.lane.b32.xlu0 %v1592, 119
  %v1656 = vpop.permute.xlu0 %1655
  %1657 = vrot.lane.b32.xlu0 %v1593, 119
  %v1658 = vpop.permute.xlu0 %1657
  %1659 = vrot.lane.b32.xlu0 %v1594, 119
  %v1660 = vpop.permute.xlu0 %1659
  %1661 = vrot.lane.b32.xlu0 %v1595, 119
  %v1662 = vpop.permute.xlu0 %1661
  %1663 = vrot.lane.b32.xlu0 %v1596, 119
  %v1664 = vpop.permute.xlu0 %1663
  %1665 = vrot.lane.b32.xlu0 %v1597, 119
  %v1666 = vpop.permute.xlu0 %1665
  %1667 = vrot.lane.b32.xlu0 %v1598, 119
  %v1668 = vpop.permute.xlu0 %1667
  %1669 = vrot.lane.b32.xlu0 %v1599, 119
  %v1670 = vpop.permute.xlu0 %1669
  %1671 = vrot.lane.b32.xlu0 %v1600, 119
  %v1672 = vpop.permute.xlu0 %1671
  %1673 = vrot.lane.b32.xlu0 %v1601, 119
  %v1674 = vpop.permute.xlu0 %1673
  %1675 = vrot.lane.b32.xlu0 %v1602, 119
  %v1676 = vpop.permute.xlu0 %1675
  %1677 = vrot.lane.b32.xlu0 %v1603, 119
  %v1678 = vpop.permute.xlu0 %1677
  %1679 = vrot.lane.b32.xlu0 %v1604, 119
  %v1680 = vpop.permute.xlu0 %1679
  %1681 = vrot.lane.b32.xlu0 %v1605, 119
  %v1682 = vpop.permute.xlu0 %1681
  %1683 = vrot.lane.b32.xlu0 %v1606, 119
  %v1684 = vpop.permute.xlu0 %1683
  %1685 = vrot.lane.b32.xlu0 %v1607, 119
  %v1686 = vpop.permute.xlu0 %1685
  %1687 = vrot.lane.b32.xlu0 %v1608, 119
  %v1688 = vpop.permute.xlu0 %1687
  %1689 = vrot.lane.b32.xlu0 %v1609, 119
  %v1690 = vpop.permute.xlu0 %1689
  %vm1691 = vcmask 973824
  %v1692 = vsel %vm1691, %v1638, %v1640
  %v1693 = vsel %vm1691, %v1640, %v1642
  %v1694 = vsel %vm1691, %v1642, %v1644
  %v1695 = vsel %vm1691, %v1644, %v1646
  %v1696 = vsel %vm1691, %v1646, %v1648
  %v1697 = vsel %vm1691, %v1648, %v1650
  %v1698 = vsel %vm1691, %v1650, %v1652
  %v1699 = vsel %vm1691, %v1652, %v1654
  %v1700 = vsel %vm1691, %v1656, %v1658
  %v1701 = vsel %vm1691, %v1658, %v1660
  %v1702 = vsel %vm1691, %v1660, %v1662
  %v1703 = vsel %vm1691, %v1662, %v1664
  %v1704 = vsel %vm1691, %v1664, %v1666
  %v1705 = vsel %vm1691, %v1666, %v1668
  %v1706 = vsel %vm1691, %v1668, %v1670
  %v1707 = vsel %vm1691, %v1670, %v1672
  %v1708 = vsel %vm1691, %v1674, %v1676
  %v1709 = vsel %vm1691, %v1676, %v1678
  %v1710 = vsel %vm1691, %v1678, %v1680
  %v1711 = vsel %vm1691, %v1680, %v1682
  %v1712 = vsel %vm1691, %v1682, %v1684
  %v1713 = vsel %vm1691, %v1684, %v1686
  %v1714 = vsel %vm1691, %v1686, %v1688
  %v1715 = vsel %vm1691, %v1688, %v1690
  %1743 = vst [vmem:[#allocation2 + $0x798] sm:$0xff] %v1692
  %1744 = vst [vmem:[#allocation2 + $0x7a0] sm:$0xff] %v1693
  %1745 = vst [vmem:[#allocation2 + $0x7a8] sm:$0xff] %v1694
  %1746 = vst [vmem:[#allocation2 + $0x7b0] sm:$0xff] %v1695
  %1747 = vst [vmem:[#allocation2 + $0x7b8] sm:$0xff] %v1696
  %1748 = vst [vmem:[#allocation2 + $0x7c0] sm:$0xff] %v1697
  %1749 = vst [vmem:[#allocation2 + $0x7c8] sm:$0xff] %v1698
  %1750 = vst [vmem:[#allocation2 + $0x7d0] sm:$0xff] %v1699
  %1751 = vst.msk [vmem:[#allocation2 + $0x7d8] sm:$0xff] %vm67, %v1654
  %1752 = vst [vmem:[#allocation2 + $0x7e0] sm:$0xff] %v1700
  %1753 = vst [vmem:[#allocation2 + $0x7e8] sm:$0xff] %v1701
  %1754 = vst [vmem:[#allocation2 + $0x7f0] sm:$0xff] %v1702
  %1755 = vst [vmem:[#allocation2 + $0x7f8] sm:$0xff] %v1703
  %1756 = vst [vmem:[#allocation2 + $0x800] sm:$0xff] %v1704
  %1757 = vst [vmem:[#allocation2 + $0x808] sm:$0xff] %v1705
  %1758 = vst [vmem:[#allocation2 + $0x810] sm:$0xff] %v1706
  %1759 = vst [vmem:[#allocation2 + $0x818] sm:$0xff] %v1707
  %1760 = vst.msk [vmem:[#allocation2 + $0x820] sm:$0xff] %vm67, %v1672
  %1761 = vst [vmem:[#allocation2 + $0x828] sm:$0xff] %v1708
  %1762 = vst [vmem:[#allocation2 + $0x830] sm:$0xff] %v1709
  %1763 = vst [vmem:[#allocation2 + $0x838] sm:$0xff] %v1710
  %1764 = vst [vmem:[#allocation2 + $0x840] sm:$0xff] %v1711
  %1765 = vst [vmem:[#allocation2 + $0x848] sm:$0xff] %v1712
  %1766 = vst [vmem:[#allocation2 + $0x850] sm:$0xff] %v1713
  %1767 = vst [vmem:[#allocation2 + $0x858] sm:$0xff] %v1714
  %1768 = vst [vmem:[#allocation2 + $0x860] sm:$0xff] %v1715
  %1769 = vst.msk [vmem:[#allocation2 + $0x868] sm:$0xff] %vm67, %v1690
  %v1770 = vld [vmem:[%s0] sm:$0xff]
  %v1771 = vld [vmem:[%s0 + $0x8] sm:$0xff]
  %v1772 = vld [vmem:[%s0 + $0x10] sm:$0xff]
  %v1773 = vld [vmem:[%s0 + $0x18] sm:$0xff]
  %v1774 = vld [vmem:[%s0 + $0x20] sm:$0xff]
  %v1775 = vld [vmem:[%s0 + $0x28] sm:$0xff]
  %v1776 = vld [vmem:[%s0 + $0x30] sm:$0xff]
  %v1777 = vld [vmem:[%s0 + $0x38] sm:$0xff]
  %v1778 = vld [vmem:[%s0 + $0x40] sm:$0xff]
  %v1779 = vld [vmem:[%s0 + $0x48] sm:$0xff]
  %v1780 = vld [vmem:[%s0 + $0x50] sm:$0xff]
  %v1781 = vld [vmem:[%s0 + $0x58] sm:$0xff]
  %v1782 = vld [vmem:[%s0 + $0x60] sm:$0xff]
  %v1783 = vld [vmem:[%s0 + $0x68] sm:$0xff]
  %v1784 = vld [vmem:[%s0 + $0x70] sm:$0xff]
  %v1785 = vld [vmem:[%s0 + $0x78] sm:$0xff]
  %v1786 = vld [vmem:[%s0 + $0x80] sm:$0xff]
  %v1787 = vld [vmem:[%s0 + $0x88] sm:$0xff]
  %v1788 = vld [vmem:[%s0 + $0x90] sm:$0xff]
  %v1789 = vld [vmem:[%s0 + $0x98] sm:$0xff]
  %v1790 = vld [vmem:[%s0 + $0xa0] sm:$0xff]
  %v1791 = vld [vmem:[%s0 + $0xa8] sm:$0xff]
  %v1792 = vld [vmem:[%s0 + $0xb0] sm:$0xff]
  %v1793 = vld [vmem:[%s0 + $0xb8] sm:$0xff]
  %v1794 = vld [vmem:[%s0 + $0xc0] sm:$0xff]
  %v1795 = vld [vmem:[%s0 + $0xc8] sm:$0xff]
  %v1796 = vld [vmem:[%s0 + $0xd0] sm:$0xff]
  %1824 = vrot.lane.b32.xlu0 %v1770, 118
  %v1825 = vpop.permute.xlu0 %1824
  %1826 = vrot.lane.b32.xlu0 %v1771, 118
  %v1827 = vpop.permute.xlu0 %1826
  %1828 = vrot.lane.b32.xlu0 %v1772, 118
  %v1829 = vpop.permute.xlu0 %1828
  %1830 = vrot.lane.b32.xlu0 %v1773, 118
  %v1831 = vpop.permute.xlu0 %1830
  %1832 = vrot.lane.b32.xlu0 %v1774, 118
  %v1833 = vpop.permute.xlu0 %1832
  %1834 = vrot.lane.b32.xlu0 %v1775, 118
  %v1835 = vpop.permute.xlu0 %1834
  %1836 = vrot.lane.b32.xlu0 %v1776, 118
  %v1837 = vpop.permute.xlu0 %1836
  %1838 = vrot.lane.b32.xlu0 %v1777, 118
  %v1839 = vpop.permute.xlu0 %1838
  %1840 = vrot.lane.b32.xlu0 %v1778, 118
  %v1841 = vpop.permute.xlu0 %1840
  %1842 = vrot.lane.b32.xlu0 %v1779, 118
  %v1843 = vpop.permute.xlu0 %1842
  %1844 = vrot.lane.b32.xlu0 %v1780, 118
  %v1845 = vpop.permute.xlu0 %1844
  %1846 = vrot.lane.b32.xlu0 %v1781, 118
  %v1847 = vpop.permute.xlu0 %1846
  %1848 = vrot.lane.b32.xlu0 %v1782, 118
  %v1849 = vpop.permute.xlu0 %1848
  %1850 = vrot.lane.b32.xlu0 %v1783, 118
  %v1851 = vpop.permute.xlu0 %1850
  %1852 = vrot.lane.b32.xlu0 %v1784, 118
  %v1853 = vpop.permute.xlu0 %1852
  %1854 = vrot.lane.b32.xlu0 %v1785, 118
  %v1855 = vpop.permute.xlu0 %1854
  %1856 = vrot.lane.b32.xlu0 %v1786, 118
  %v1857 = vpop.permute.xlu0 %1856
  %1858 = vrot.lane.b32.xlu0 %v1787, 118
  %v1859 = vpop.permute.xlu0 %1858
  %1860 = vrot.lane.b32.xlu0 %v1788, 118
  %v1861 = vpop.permute.xlu0 %1860
  %1862 = vrot.lane.b32.xlu0 %v1789, 118
  %v1863 = vpop.permute.xlu0 %1862
  %1864 = vrot.lane.b32.xlu0 %v1790, 118
  %v1865 = vpop.permute.xlu0 %1864
  %1866 = vrot.lane.b32.xlu0 %v1791, 118
  %v1867 = vpop.permute.xlu0 %1866
  %1868 = vrot.lane.b32.xlu0 %v1792, 118
  %v1869 = vpop.permute.xlu0 %1868
  %1870 = vrot.lane.b32.xlu0 %v1793, 118
  %v1871 = vpop.permute.xlu0 %1870
  %1872 = vrot.lane.b32.xlu0 %v1794, 118
  %v1873 = vpop.permute.xlu0 %1872
  %1874 = vrot.lane.b32.xlu0 %v1795, 118
  %v1875 = vpop.permute.xlu0 %1874
  %1876 = vrot.lane.b32.xlu0 %v1796, 118
  %v1877 = vpop.permute.xlu0 %1876
  %vm1878 = vcmask 965632
  %v1879 = vsel %vm1878, %v1825, %v1827
  %v1880 = vsel %vm1878, %v1827, %v1829
  %v1881 = vsel %vm1878, %v1829, %v1831
  %v1882 = vsel %vm1878, %v1831, %v1833
  %v1883 = vsel %vm1878, %v1833, %v1835
  %v1884 = vsel %vm1878, %v1835, %v1837
  %v1885 = vsel %vm1878, %v1837, %v1839
  %v1886 = vsel %vm1878, %v1839, %v1841
  %v1887 = vsel %vm1878, %v1843, %v1845
  %v1888 = vsel %vm1878, %v1845, %v1847
  %v1889 = vsel %vm1878, %v1847, %v1849
  %v1890 = vsel %vm1878, %v1849, %v1851
  %v1891 = vsel %vm1878, %v1851, %v1853
  %v1892 = vsel %vm1878, %v1853, %v1855
  %v1893 = vsel %vm1878, %v1855, %v1857
  %v1894 = vsel %vm1878, %v1857, %v1859
  %v1895 = vsel %vm1878, %v1861, %v1863
  %v1896 = vsel %vm1878, %v1863, %v1865
  %v1897 = vsel %vm1878, %v1865, %v1867
  %v1898 = vsel %vm1878, %v1867, %v1869
  %v1899 = vsel %vm1878, %v1869, %v1871
  %v1900 = vsel %vm1878, %v1871, %v1873
  %v1901 = vsel %vm1878, %v1873, %v1875
  %v1902 = vsel %vm1878, %v1875, %v1877
  %1930 = vst [vmem:[#allocation2 + $0x870] sm:$0xff] %v1879
  %1931 = vst [vmem:[#allocation2 + $0x878] sm:$0xff] %v1880
  %1932 = vst [vmem:[#allocation2 + $0x880] sm:$0xff] %v1881
  %1933 = vst [vmem:[#allocation2 + $0x888] sm:$0xff] %v1882
  %1934 = vst [vmem:[#allocation2 + $0x890] sm:$0xff] %v1883
  %1935 = vst [vmem:[#allocation2 + $0x898] sm:$0xff] %v1884
  %1936 = vst [vmem:[#allocation2 + $0x8a0] sm:$0xff] %v1885
  %1937 = vst [vmem:[#allocation2 + $0x8a8] sm:$0xff] %v1886
  %1938 = vst.msk [vmem:[#allocation2 + $0x8b0] sm:$0xff] %vm67, %v1841
  %1939 = vst [vmem:[#allocation2 + $0x8b8] sm:$0xff] %v1887
  %1940 = vst [vmem:[#allocation2 + $0x8c0] sm:$0xff] %v1888
  %1941 = vst [vmem:[#allocation2 + $0x8c8] sm:$0xff] %v1889
  %1942 = vst [vmem:[#allocation2 + $0x8d0] sm:$0xff] %v1890
  %1943 = vst [vmem:[#allocation2 + $0x8d8] sm:$0xff] %v1891
  %1944 = vst [vmem:[#allocation2 + $0x8e0] sm:$0xff] %v1892
  %1945 = vst [vmem:[#allocation2 + $0x8e8] sm:$0xff] %v1893
  %1946 = vst [vmem:[#allocation2 + $0x8f0] sm:$0xff] %v1894
  %1947 = vst.msk [vmem:[#allocation2 + $0x8f8] sm:$0xff] %vm67, %v1859
  %1948 = vst [vmem:[#allocation2 + $0x900] sm:$0xff] %v1895
  %1949 = vst [vmem:[#allocation2 + $0x908] sm:$0xff] %v1896
  %1950 = vst [vmem:[#allocation2 + $0x910] sm:$0xff] %v1897
  %1951 = vst [vmem:[#allocation2 + $0x918] sm:$0xff] %v1898
  %1952 = vst [vmem:[#allocation2 + $0x920] sm:$0xff] %v1899
  %1953 = vst [vmem:[#allocation2 + $0x928] sm:$0xff] %v1900
  %1954 = vst [vmem:[#allocation2 + $0x930] sm:$0xff] %v1901
  %1955 = vst [vmem:[#allocation2 + $0x938] sm:$0xff] %v1902
  %1956 = vst.msk [vmem:[#allocation2 + $0x940] sm:$0xff] %vm67, %v1877
  %v1957 = vld [vmem:[%s0] sm:$0xff]
  %v1958 = vld [vmem:[%s0 + $0x8] sm:$0xff]
  %v1959 = vld [vmem:[%s0 + $0x10] sm:$0xff]
  %v1960 = vld [vmem:[%s0 + $0x18] sm:$0xff]
  %v1961 = vld [vmem:[%s0 + $0x20] sm:$0xff]
  %v1962 = vld [vmem:[%s0 + $0x28] sm:$0xff]
  %v1963 = vld [vmem:[%s0 + $0x30] sm:$0xff]
  %v1964 = vld [vmem:[%s0 + $0x38] sm:$0xff]
  %v1965 = vld [vmem:[%s0 + $0x40] sm:$0xff]
  %v1966 = vld [vmem:[%s0 + $0x48] sm:$0xff]
  %v1967 = vld [vmem:[%s0 + $0x50] sm:$0xff]
  %v1968 = vld [vmem:[%s0 + $0x58] sm:$0xff]
  %v1969 = vld [vmem:[%s0 + $0x60] sm:$0xff]
  %v1970 = vld [vmem:[%s0 + $0x68] sm:$0xff]
  %v1971 = vld [vmem:[%s0 + $0x70] sm:$0xff]
  %v1972 = vld [vmem:[%s0 + $0x78] sm:$0xff]
  %v1973 = vld [vmem:[%s0 + $0x80] sm:$0xff]
  %v1974 = vld [vmem:[%s0 + $0x88] sm:$0xff]
  %v1975 = vld [vmem:[%s0 + $0x90] sm:$0xff]
  %v1976 = vld [vmem:[%s0 + $0x98] sm:$0xff]
  %v1977 = vld [vmem:[%s0 + $0xa0] sm:$0xff]
  %v1978 = vld [vmem:[%s0 + $0xa8] sm:$0xff]
  %v1979 = vld [vmem:[%s0 + $0xb0] sm:$0xff]
  %v1980 = vld [vmem:[%s0 + $0xb8] sm:$0xff]
  %v1981 = vld [vmem:[%s0 + $0xc0] sm:$0xff]
  %v1982 = vld [vmem:[%s0 + $0xc8] sm:$0xff]
  %v1983 = vld [vmem:[%s0 + $0xd0] sm:$0xff]
  %2011 = vrot.lane.b32.xlu0 %v1957, 117
  %v2012 = vpop.permute.xlu0 %2011
  %2013 = vrot.lane.b32.xlu0 %v1958, 117
  %v2014 = vpop.permute.xlu0 %2013
  %2015 = vrot.lane.b32.xlu0 %v1959, 117
  %v2016 = vpop.permute.xlu0 %2015
  %2017 = vrot.lane.b32.xlu0 %v1960, 117
  %v2018 = vpop.permute.xlu0 %2017
  %2019 = vrot.lane.b32.xlu0 %v1961, 117
  %v2020 = vpop.permute.xlu0 %2019
  %2021 = vrot.lane.b32.xlu0 %v1962, 117
  %v2022 = vpop.permute.xlu0 %2021
  %2023 = vrot.lane.b32.xlu0 %v1963, 117
  %v2024 = vpop.permute.xlu0 %2023
  %2025 = vrot.lane.b32.xlu0 %v1964, 117
  %v2026 = vpop.permute.xlu0 %2025
  %2027 = vrot.lane.b32.xlu0 %v1965, 117
  %v2028 = vpop.permute.xlu0 %2027
  %2029 = vrot.lane.b32.xlu0 %v1966, 117
  %v2030 = vpop.permute.xlu0 %2029
  %2031 = vrot.lane.b32.xlu0 %v1967, 117
  %v2032 = vpop.permute.xlu0 %2031
  %2033 = vrot.lane.b32.xlu0 %v1968, 117
  %v2034 = vpop.permute.xlu0 %2033
  %2035 = vrot.lane.b32.xlu0 %v1969, 117
  %v2036 = vpop.permute.xlu0 %2035
  %2037 = vrot.lane.b32.xlu0 %v1970, 117
  %v2038 = vpop.permute.xlu0 %2037
  %2039 = vrot.lane.b32.xlu0 %v1971, 117
  %v2040 = vpop.permute.xlu0 %2039
  %2041 = vrot.lane.b32.xlu0 %v1972, 117
  %v2042 = vpop.permute.xlu0 %2041
  %2043 = vrot.lane.b32.xlu0 %v1973, 117
  %v2044 = vpop.permute.xlu0 %2043
  %2045 = vrot.lane.b32.xlu0 %v1974, 117
  %v2046 = vpop.permute.xlu0 %2045
  %2047 = vrot.lane.b32.xlu0 %v1975, 117
  %v2048 = vpop.permute.xlu0 %2047
  %2049 = vrot.lane.b32.xlu0 %v1976, 117
  %v2050 = vpop.permute.xlu0 %2049
  %2051 = vrot.lane.b32.xlu0 %v1977, 117
  %v2052 = vpop.permute.xlu0 %2051
  %2053 = vrot.lane.b32.xlu0 %v1978, 117
  %v2054 = vpop.permute.xlu0 %2053
  %2055 = vrot.lane.b32.xlu0 %v1979, 117
  %v2056 = vpop.permute.xlu0 %2055
  %2057 = vrot.lane.b32.xlu0 %v1980, 117
  %v2058 = vpop.permute.xlu0 %2057
  %2059 = vrot.lane.b32.xlu0 %v1981, 117
  %v2060 = vpop.permute.xlu0 %2059
  %2061 = vrot.lane.b32.xlu0 %v1982, 117
  %v2062 = vpop.permute.xlu0 %2061
  %2063 = vrot.lane.b32.xlu0 %v1983, 117
  %v2064 = vpop.permute.xlu0 %2063
  %vm2065 = vcmask 957440
  %v2066 = vsel %vm2065, %v2012, %v2014
  %v2067 = vsel %vm2065, %v2014, %v2016
  %v2068 = vsel %vm2065, %v2016, %v2018
  %v2069 = vsel %vm2065, %v2018, %v2020
  %v2070 = vsel %vm2065, %v2020, %v2022
  %v2071 = vsel %vm2065, %v2022, %v2024
  %v2072 = vsel %vm2065, %v2024, %v2026
  %v2073 = vsel %vm2065, %v2026, %v2028
  %v2074 = vsel %vm2065, %v2030, %v2032
  %v2075 = vsel %vm2065, %v2032, %v2034
  %v2076 = vsel %vm2065, %v2034, %v2036
  %v2077 = vsel %vm2065, %v2036, %v2038
  %v2078 = vsel %vm2065, %v2038, %v2040
  %v2079 = vsel %vm2065, %v2040, %v2042
  %v2080 = vsel %vm2065, %v2042, %v2044
  %v2081 = vsel %vm2065, %v2044, %v2046
  %v2082 = vsel %vm2065, %v2048, %v2050
  %v2083 = vsel %vm2065, %v2050, %v2052
  %v2084 = vsel %vm2065, %v2052, %v2054
  %v2085 = vsel %vm2065, %v2054, %v2056
  %v2086 = vsel %vm2065, %v2056, %v2058
  %v2087 = vsel %vm2065, %v2058, %v2060
  %v2088 = vsel %vm2065, %v2060, %v2062
  %v2089 = vsel %vm2065, %v2062, %v2064
  %2117 = vst [vmem:[#allocation2 + $0x948] sm:$0xff] %v2066
  %2118 = vst [vmem:[#allocation2 + $0x950] sm:$0xff] %v2067
  %2119 = vst [vmem:[#allocation2 + $0x958] sm:$0xff] %v2068
  %2120 = vst [vmem:[#allocation2 + $0x960] sm:$0xff] %v2069
  %2121 = vst [vmem:[#allocation2 + $0x968] sm:$0xff] %v2070
  %2122 = vst [vmem:[#allocation2 + $0x970] sm:$0xff] %v2071
  %2123 = vst [vmem:[#allocation2 + $0x978] sm:$0xff] %v2072
  %2124 = vst [vmem:[#allocation2 + $0x980] sm:$0xff] %v2073
  %2125 = vst.msk [vmem:[#allocation2 + $0x988] sm:$0xff] %vm67, %v2028
  %2126 = vst [vmem:[#allocation2 + $0x990] sm:$0xff] %v2074
  %2127 = vst [vmem:[#allocation2 + $0x998] sm:$0xff] %v2075
  %2128 = vst [vmem:[#allocation2 + $0x9a0] sm:$0xff] %v2076
  %2129 = vst [vmem:[#allocation2 + $0x9a8] sm:$0xff] %v2077
  %2130 = vst [vmem:[#allocation2 + $0x9b0] sm:$0xff] %v2078
  %2131 = vst [vmem:[#allocation2 + $0x9b8] sm:$0xff] %v2079
  %2132 = vst [vmem:[#allocation2 + $0x9c0] sm:$0xff] %v2080
  %2133 = vst [vmem:[#allocation2 + $0x9c8] sm:$0xff] %v2081
  %2134 = vst.msk [vmem:[#allocation2 + $0x9d0] sm:$0xff] %vm67, %v2046
  %2135 = vst [vmem:[#allocation2 + $0x9d8] sm:$0xff] %v2082
  %2136 = vst [vmem:[#allocation2 + $0x9e0] sm:$0xff] %v2083
  %2137 = vst [vmem:[#allocation2 + $0x9e8] sm:$0xff] %v2084
  %2138 = vst [vmem:[#allocation2 + $0x9f0] sm:$0xff] %v2085
  %2139 = vst [vmem:[#allocation2 + $0x9f8] sm:$0xff] %v2086
  %2140 = vst [vmem:[#allocation2 + $0xa00] sm:$0xff] %v2087
  %2141 = vst [vmem:[#allocation2 + $0xa08] sm:$0xff] %v2088
  %2142 = vst [vmem:[#allocation2 + $0xa10] sm:$0xff] %v2089
  %2143 = vst.msk [vmem:[#allocation2 + $0xa18] sm:$0xff] %vm67, %v2064
  %v2144 = vld [vmem:[%s1] sm:$0xff]
  %v2145 = vld [vmem:[%s1 + $0x8] sm:$0xff]
  %v2146 = vld [vmem:[%s1 + $0x10] sm:$0xff]
  %v2147 = vld [vmem:[%s1 + $0x18] sm:$0xff]
  %v2148 = vld [vmem:[%s1 + $0x20] sm:$0xff]
  %v2149 = vld [vmem:[%s1 + $0x28] sm:$0xff]
  %v2150 = vld [vmem:[%s1 + $0x30] sm:$0xf]
  %v2151 = vld [vmem:[%s1 + $0x38] sm:$0xf]
  %v2152 = vld [vmem:[%s1 + $0x40] sm:$0xf]
  %v2153 = vld [vmem:[#allocation2] sm:$0xff]
  %v2154 = vld [vmem:[#allocation2 + $0x8] sm:$0xff]
  %v2155 = vld [vmem:[#allocation2 + $0x10] sm:$0xff]
  %v2156 = vld [vmem:[#allocation2 + $0x18] sm:$0xff]
  %v2157 = vld [vmem:[#allocation2 + $0x20] sm:$0xff]
  %v2158 = vld [vmem:[#allocation2 + $0x28] sm:$0xff]
  %v2159 = vld [vmem:[#allocation2 + $0x30] sm:$0xff]
  %v2160 = vld [vmem:[#allocation2 + $0x38] sm:$0xff]
  %v2161 = vld [vmem:[#allocation2 + $0x40] sm:$0xff]
  %v2162 = vld [vmem:[#allocation2 + $0x48] sm:$0xff]
  %v2163 = vld [vmem:[#allocation2 + $0x50] sm:$0xff]
  %v2164 = vld [vmem:[#allocation2 + $0x58] sm:$0xff]
  %v2165 = vld [vmem:[#allocation2 + $0x60] sm:$0xff]
  %v2166 = vld [vmem:[#allocation2 + $0x68] sm:$0xff]
  %v2167 = vld [vmem:[#allocation2 + $0x70] sm:$0xff]
  %v2168 = vld [vmem:[#allocation2 + $0x78] sm:$0xff]
  %v2169 = vld [vmem:[#allocation2 + $0x80] sm:$0xff]
  %v2170 = vld [vmem:[#allocation2 + $0x88] sm:$0xff]
  %v2171 = vld [vmem:[#allocation2 + $0x90] sm:$0xff]
  %v2172 = vld [vmem:[#allocation2 + $0x98] sm:$0xff]
  %v2173 = vld [vmem:[#allocation2 + $0xa0] sm:$0xff]
  %v2174 = vld [vmem:[#allocation2 + $0xa8] sm:$0xff]
  %v2175 = vld [vmem:[#allocation2 + $0xb0] sm:$0xff]
  %v2176 = vld [vmem:[#allocation2 + $0xb8] sm:$0xff]
  %v2177 = vld [vmem:[#allocation2 + $0xc0] sm:$0xff]
  %v2178 = vld [vmem:[#allocation2 + $0xc8] sm:$0xff]
  %v2179 = vld [vmem:[#allocation2 + $0xd0] sm:$0xff]
  %v2180 = vld [vmem:[#allocation2 + $0xd8] sm:$0xff]
  %v2181 = vld [vmem:[#allocation2 + $0xe0] sm:$0xff]
  %v2182 = vld [vmem:[#allocation2 + $0xe8] sm:$0xff]
  %v2183 = vld [vmem:[#allocation2 + $0xf0] sm:$0xff]
  %v2184 = vld [vmem:[#allocation2 + $0xf8] sm:$0xff]
  %v2185 = vld [vmem:[#allocation2 + $0x100] sm:$0xff]
  %v2186 = vld [vmem:[#allocation2 + $0x108] sm:$0xff]
  %v2187 = vld [vmem:[#allocation2 + $0x110] sm:$0xff]
  %v2188 = vld [vmem:[#allocation2 + $0x118] sm:$0xff]
  %v2189 = vld [vmem:[#allocation2 + $0x120] sm:$0xff]
  %v2190 = vld [vmem:[#allocation2 + $0x128] sm:$0xff]
  %v2191 = vld [vmem:[#allocation2 + $0x130] sm:$0xff]
  %v2192 = vld [vmem:[#allocation2 + $0x138] sm:$0xff]
  %v2193 = vld [vmem:[#allocation2 + $0x140] sm:$0xff]
  %v2194 = vld [vmem:[#allocation2 + $0x148] sm:$0xff]
  %v2195 = vld [vmem:[#allocation2 + $0x150] sm:$0xff]
  %v2196 = vld [vmem:[#allocation2 + $0x158] sm:$0xff]
  %v2197 = vld [vmem:[#allocation2 + $0x160] sm:$0xff]
  %v2198 = vld [vmem:[#allocation2 + $0x168] sm:$0xff]
  %v2199 = vld [vmem:[#allocation2 + $0x170] sm:$0xff]
  %v2200 = vld [vmem:[#allocation2 + $0x178] sm:$0xff]
  %v2201 = vld [vmem:[#allocation2 + $0x180] sm:$0xff]
  %v2202 = vld [vmem:[#allocation2 + $0x188] sm:$0xff]
  %v2203 = vld [vmem:[#allocation2 + $0x190] sm:$0xff]
  %v2204 = vld [vmem:[#allocation2 + $0x198] sm:$0xff]
  %v2205 = vld [vmem:[#allocation2 + $0x1a0] sm:$0xff]
  %v2206 = vld [vmem:[#allocation2 + $0x1a8] sm:$0xff]
  %v2207 = vld [vmem:[#allocation2 + $0x1b0] sm:$0xff]
  %v2208 = vld [vmem:[#allocation2 + $0x1b8] sm:$0xff]
  %v2209 = vld [vmem:[#allocation2 + $0x1c0] sm:$0xff]
  %v2210 = vld [vmem:[#allocation2 + $0x1c8] sm:$0xff]
  %v2211 = vld [vmem:[#allocation2 + $0x1d0] sm:$0xff]
  %v2212 = vld [vmem:[#allocation2 + $0x1d8] sm:$0xff]
  %v2213 = vld [vmem:[#allocation2 + $0x1e0] sm:$0xff]
  %v2214 = vld [vmem:[#allocation2 + $0x1e8] sm:$0xff]
  %v2215 = vld [vmem:[#allocation2 + $0x1f0] sm:$0xff]
  %v2216 = vld [vmem:[#allocation2 + $0x1f8] sm:$0xff]
  %v2217 = vld [vmem:[#allocation2 + $0x200] sm:$0xff]
  %v2218 = vld [vmem:[#allocation2 + $0x208] sm:$0xff]
  %v2219 = vld [vmem:[#allocation2 + $0x210] sm:$0xff]
  %v2220 = vld [vmem:[#allocation2 + $0x218] sm:$0xff]
  %v2221 = vld [vmem:[#allocation2 + $0x220] sm:$0xff]
  %v2222 = vld [vmem:[#allocation2 + $0x228] sm:$0xff]
  %v2223 = vld [vmem:[#allocation2 + $0x230] sm:$0xff]
  %v2224 = vld [vmem:[#allocation2 + $0x238] sm:$0xff]
  %v2225 = vld [vmem:[#allocation2 + $0x240] sm:$0xff]
  %v2226 = vld [vmem:[#allocation2 + $0x248] sm:$0xff]
  %v2227 = vld [vmem:[#allocation2 + $0x250] sm:$0xff]
  %v2228 = vld [vmem:[#allocation2 + $0x258] sm:$0xff]
  %v2229 = vld [vmem:[#allocation2 + $0x260] sm:$0xff]
  %v2230 = vld [vmem:[#allocation2 + $0x268] sm:$0xff]
  %v2231 = vld [vmem:[#allocation2 + $0x270] sm:$0xff]
  %v2232 = vld [vmem:[#allocation2 + $0x278] sm:$0xff]
  %v2233 = vld [vmem:[#allocation2 + $0x280] sm:$0xff]
  %v2234 = vld [vmem:[#allocation2 + $0x288] sm:$0xff]
  %v2235 = vld [vmem:[#allocation2 + $0x290] sm:$0xff]
  %v2236 = vld [vmem:[#allocation2 + $0x298] sm:$0xff]
  %v2237 = vld [vmem:[#allocation2 + $0x2a0] sm:$0xff]
  %v2238 = vld [vmem:[#allocation2 + $0x2a8] sm:$0xff]
  %v2239 = vld [vmem:[#allocation2 + $0x2b0] sm:$0xff]
  %v2240 = vld [vmem:[#allocation2 + $0x2b8] sm:$0xff]
  %v2241 = vld [vmem:[#allocation2 + $0x2c0] sm:$0xff]
  %v2242 = vld [vmem:[#allocation2 + $0x2c8] sm:$0xff]
  %v2243 = vld [vmem:[#allocation2 + $0x2d0] sm:$0xff]
  %v2244 = vld [vmem:[#allocation2 + $0x2d8] sm:$0xff]
  %v2245 = vld [vmem:[#allocation2 + $0x2e0] sm:$0xff]
  %v2246 = vld [vmem:[#allocation2 + $0x2e8] sm:$0xff]
  %v2247 = vld [vmem:[#allocation2 + $0x2f0] sm:$0xff]
  %v2248 = vld [vmem:[#allocation2 + $0x2f8] sm:$0xff]
  %v2249 = vld [vmem:[#allocation2 + $0x300] sm:$0xff]
  %v2250 = vld [vmem:[#allocation2 + $0x308] sm:$0xff]
  %v2251 = vld [vmem:[#allocation2 + $0x310] sm:$0xff]
  %v2252 = vld [vmem:[#allocation2 + $0x318] sm:$0xff]
  %v2253 = vld [vmem:[#allocation2 + $0x320] sm:$0xff]
  %v2254 = vld [vmem:[#allocation2 + $0x328] sm:$0xff]
  %v2255 = vld [vmem:[#allocation2 + $0x330] sm:$0xff]
  %v2256 = vld [vmem:[#allocation2 + $0x338] sm:$0xff]
  %v2257 = vld [vmem:[#allocation2 + $0x340] sm:$0xff]
  %v2258 = vld [vmem:[#allocation2 + $0x348] sm:$0xff]
  %v2259 = vld [vmem:[#allocation2 + $0x350] sm:$0xff]
  %v2260 = vld [vmem:[#allocation2 + $0x358] sm:$0xff]
  %v2261 = vld [vmem:[#allocation2 + $0x360] sm:$0xff]
  %v2262 = vld [vmem:[#allocation2 + $0x368] sm:$0xff]
  %v2263 = vld [vmem:[#allocation2 + $0x370] sm:$0xff]
  %v2264 = vld [vmem:[#allocation2 + $0x378] sm:$0xff]
  %v2265 = vld [vmem:[#allocation2 + $0x380] sm:$0xff]
  %v2266 = vld [vmem:[#allocation2 + $0x388] sm:$0xff]
  %v2267 = vld [vmem:[#allocation2 + $0x390] sm:$0xff]
  %v2268 = vld [vmem:[#allocation2 + $0x398] sm:$0xff]
  %v2269 = vld [vmem:[#allocation2 + $0x3a0] sm:$0xff]
  %v2270 = vld [vmem:[#allocation2 + $0x3a8] sm:$0xff]
  %v2271 = vld [vmem:[#allocation2 + $0x3b0] sm:$0xff]
  %v2272 = vld [vmem:[#allocation2 + $0x3b8] sm:$0xff]
  %v2273 = vld [vmem:[#allocation2 + $0x3c0] sm:$0xff]
  %v2274 = vld [vmem:[#allocation2 + $0x3c8] sm:$0xff]
  %v2275 = vld [vmem:[#allocation2 + $0x3d0] sm:$0xff]
  %v2276 = vld [vmem:[#allocation2 + $0x3d8] sm:$0xff]
  %v2277 = vld [vmem:[#allocation2 + $0x3e0] sm:$0xff]
  %v2278 = vld [vmem:[#allocation2 + $0x3e8] sm:$0xff]
  %v2279 = vld [vmem:[#allocation2 + $0x3f0] sm:$0xff]
  %v2280 = vld [vmem:[#allocation2 + $0x3f8] sm:$0xff]
  %v2281 = vld [vmem:[#allocation2 + $0x400] sm:$0xff]
  %v2282 = vld [vmem:[#allocation2 + $0x408] sm:$0xff]
  %v2283 = vld [vmem:[#allocation2 + $0x410] sm:$0xff]
  %v2284 = vld [vmem:[#allocation2 + $0x418] sm:$0xff]
  %v2285 = vld [vmem:[#allocation2 + $0x420] sm:$0xff]
  %v2286 = vld [vmem:[#allocation2 + $0x428] sm:$0xff]
  %v2287 = vld [vmem:[#allocation2 + $0x430] sm:$0xff]
  %v2288 = vld [vmem:[#allocation2 + $0x438] sm:$0xff]
  %v2289 = vld [vmem:[#allocation2 + $0x440] sm:$0xff]
  %v2290 = vld [vmem:[#allocation2 + $0x448] sm:$0xff]
  %v2291 = vld [vmem:[#allocation2 + $0x450] sm:$0xff]
  %v2292 = vld [vmem:[#allocation2 + $0x458] sm:$0xff]
  %v2293 = vld [vmem:[#allocation2 + $0x460] sm:$0xff]
  %v2294 = vld [vmem:[#allocation2 + $0x468] sm:$0xff]
  %v2295 = vld [vmem:[#allocation2 + $0x470] sm:$0xff]
  %v2296 = vld [vmem:[#allocation2 + $0x478] sm:$0xff]
  %v2297 = vld [vmem:[#allocation2 + $0x480] sm:$0xff]
  %v2298 = vld [vmem:[#allocation2 + $0x488] sm:$0xff]
  %v2299 = vld [vmem:[#allocation2 + $0x490] sm:$0xff]
  %v2300 = vld [vmem:[#allocation2 + $0x498] sm:$0xff]
  %v2301 = vld [vmem:[#allocation2 + $0x4a0] sm:$0xff]
  %v2302 = vld [vmem:[#allocation2 + $0x4a8] sm:$0xff]
  %v2303 = vld [vmem:[#allocation2 + $0x4b0] sm:$0xff]
  %v2304 = vld [vmem:[#allocation2 + $0x4b8] sm:$0xff]
  %v2305 = vld [vmem:[#allocation2 + $0x4c0] sm:$0xff]
  %v2306 = vld [vmem:[#allocation2 + $0x4c8] sm:$0xff]
  %v2307 = vld [vmem:[#allocation2 + $0x4d0] sm:$0xff]
  %v2308 = vld [vmem:[#allocation2 + $0x4d8] sm:$0xff]
  %v2309 = vld [vmem:[#allocation2 + $0x4e0] sm:$0xff]
  %v2310 = vld [vmem:[#allocation2 + $0x4e8] sm:$0xff]
  %v2311 = vld [vmem:[#allocation2 + $0x4f0] sm:$0xff]
  %v2312 = vld [vmem:[#allocation2 + $0x4f8] sm:$0xff]
  %v2313 = vld [vmem:[#allocation2 + $0x500] sm:$0xff]
  %v2314 = vld [vmem:[#allocation2 + $0x508] sm:$0xff]
  %v2315 = vld [vmem:[#allocation2 + $0x510] sm:$0xff]
  %v2316 = vld [vmem:[#allocation2 + $0x518] sm:$0xff]
  %v2317 = vld [vmem:[#allocation2 + $0x520] sm:$0xff]
  %v2318 = vld [vmem:[#allocation2 + $0x528] sm:$0xff]
  %v2319 = vld [vmem:[#allocation2 + $0x530] sm:$0xff]
  %v2320 = vld [vmem:[#allocation2 + $0x538] sm:$0xff]
  %v2321 = vld [vmem:[#allocation2 + $0x540] sm:$0xff]
  %v2322 = vld [vmem:[#allocation2 + $0x548] sm:$0xff]
  %v2323 = vld [vmem:[#allocation2 + $0x550] sm:$0xff]
  %v2324 = vld [vmem:[#allocation2 + $0x558] sm:$0xff]
  %v2325 = vld [vmem:[#allocation2 + $0x560] sm:$0xff]
  %v2326 = vld [vmem:[#allocation2 + $0x568] sm:$0xff]
  %v2327 = vld [vmem:[#allocation2 + $0x570] sm:$0xff]
  %v2328 = vld [vmem:[#allocation2 + $0x578] sm:$0xff]
  %v2329 = vld [vmem:[#allocation2 + $0x580] sm:$0xff]
  %v2330 = vld [vmem:[#allocation2 + $0x588] sm:$0xff]
  %v2331 = vld [vmem:[#allocation2 + $0x590] sm:$0xff]
  %v2332 = vld [vmem:[#allocation2 + $0x598] sm:$0xff]
  %v2333 = vld [vmem:[#allocation2 + $0x5a0] sm:$0xff]
  %v2334 = vld [vmem:[#allocation2 + $0x5a8] sm:$0xff]
  %v2335 = vld [vmem:[#allocation2 + $0x5b0] sm:$0xff]
  %v2336 = vld [vmem:[#allocation2 + $0x5b8] sm:$0xff]
  %v2337 = vld [vmem:[#allocation2 + $0x5c0] sm:$0xff]
  %v2338 = vld [vmem:[#allocation2 + $0x5c8] sm:$0xff]
  %v2339 = vld [vmem:[#allocation2 + $0x5d0] sm:$0xff]
  %v2340 = vld [vmem:[#allocation2 + $0x5d8] sm:$0xff]
  %v2341 = vld [vmem:[#allocation2 + $0x5e0] sm:$0xff]
  %v2342 = vld [vmem:[#allocation2 + $0x5e8] sm:$0xff]
  %v2343 = vld [vmem:[#allocation2 + $0x5f0] sm:$0xff]
  %v2344 = vld [vmem:[#allocation2 + $0x5f8] sm:$0xff]
  %v2345 = vld [vmem:[#allocation2 + $0x600] sm:$0xff]
  %v2346 = vld [vmem:[#allocation2 + $0x608] sm:$0xff]
  %v2347 = vld [vmem:[#allocation2 + $0x610] sm:$0xff]
  %v2348 = vld [vmem:[#allocation2 + $0x618] sm:$0xff]
  %v2349 = vld [vmem:[#allocation2 + $0x620] sm:$0xff]
  %v2350 = vld [vmem:[#allocation2 + $0x628] sm:$0xff]
  %v2351 = vld [vmem:[#allocation2 + $0x630] sm:$0xff]
  %v2352 = vld [vmem:[#allocation2 + $0x638] sm:$0xff]
  %v2353 = vld [vmem:[#allocation2 + $0x640] sm:$0xff]
  %v2354 = vld [vmem:[#allocation2 + $0x648] sm:$0xff]
  %v2355 = vld [vmem:[#allocation2 + $0x650] sm:$0xff]
  %v2356 = vld [vmem:[#allocation2 + $0x658] sm:$0xff]
  %v2357 = vld [vmem:[#allocation2 + $0x660] sm:$0xff]
  %v2358 = vld [vmem:[#allocation2 + $0x668] sm:$0xff]
  %v2359 = vld [vmem:[#allocation2 + $0x670] sm:$0xff]
  %v2360 = vld [vmem:[#allocation2 + $0x678] sm:$0xff]
  %v2361 = vld [vmem:[#allocation2 + $0x680] sm:$0xff]
  %v2362 = vld [vmem:[#allocation2 + $0x688] sm:$0xff]
  %v2363 = vld [vmem:[#allocation2 + $0x690] sm:$0xff]
  %v2364 = vld [vmem:[#allocation2 + $0x698] sm:$0xff]
  %v2365 = vld [vmem:[#allocation2 + $0x6a0] sm:$0xff]
  %v2366 = vld [vmem:[#allocation2 + $0x6a8] sm:$0xff]
  %v2367 = vld [vmem:[#allocation2 + $0x6b0] sm:$0xff]
  %v2368 = vld [vmem:[#allocation2 + $0x6b8] sm:$0xff]
  %v2369 = vld [vmem:[#allocation2 + $0x6c0] sm:$0xff]
  %v2370 = vld [vmem:[#allocation2 + $0x6c8] sm:$0xff]
  %v2371 = vld [vmem:[#allocation2 + $0x6d0] sm:$0xff]
  %v2372 = vld [vmem:[#allocation2 + $0x6d8] sm:$0xff]
  %v2373 = vld [vmem:[#allocation2 + $0x6e0] sm:$0xff]
  %v2374 = vld [vmem:[#allocation2 + $0x6e8] sm:$0xff]
  %v2375 = vld [vmem:[#allocation2 + $0x6f0] sm:$0xff]
  %v2376 = vld [vmem:[#allocation2 + $0x6f8] sm:$0xff]
  %v2377 = vld [vmem:[#allocation2 + $0x700] sm:$0xff]
  %v2378 = vld [vmem:[#allocation2 + $0x708] sm:$0xff]
  %v2379 = vld [vmem:[#allocation2 + $0x710] sm:$0xff]
  %v2380 = vld [vmem:[#allocation2 + $0x718] sm:$0xff]
  %v2381 = vld [vmem:[#allocation2 + $0x720] sm:$0xff]
  %v2382 = vld [vmem:[#allocation2 + $0x728] sm:$0xff]
  %v2383 = vld [vmem:[#allocation2 + $0x730] sm:$0xff]
  %v2384 = vld [vmem:[#allocation2 + $0x738] sm:$0xff]
  %v2385 = vld [vmem:[#allocation2 + $0x740] sm:$0xff]
  %v2386 = vld [vmem:[#allocation2 + $0x748] sm:$0xff]
  %v2387 = vld [vmem:[#allocation2 + $0x750] sm:$0xff]
  %v2388 = vld [vmem:[#allocation2 + $0x758] sm:$0xff]
  %v2389 = vld [vmem:[#allocation2 + $0x760] sm:$0xff]
  %v2390 = vld [vmem:[#allocation2 + $0x768] sm:$0xff]
  %v2391 = vld [vmem:[#allocation2 + $0x770] sm:$0xff]
  %v2392 = vld [vmem:[#allocation2 + $0x778] sm:$0xff]
  %v2393 = vld [vmem:[#allocation2 + $0x780] sm:$0xff]
  %v2394 = vld [vmem:[#allocation2 + $0x788] sm:$0xff]
  %v2395 = vld [vmem:[#allocation2 + $0x790] sm:$0xff]
  %v2396 = vld [vmem:[#allocation2 + $0x798] sm:$0xff]
  %v2397 = vld [vmem:[#allocation2 + $0x7a0] sm:$0xff]
  %v2398 = vld [vmem:[#allocation2 + $0x7a8] sm:$0xff]
  %v2399 = vld [vmem:[#allocation2 + $0x7b0] sm:$0xff]
  %v2400 = vld [vmem:[#allocation2 + $0x7b8] sm:$0xff]
  %v2401 = vld [vmem:[#allocation2 + $0x7c0] sm:$0xff]
  %v2402 = vld [vmem:[#allocation2 + $0x7c8] sm:$0xff]
  %v2403 = vld [vmem:[#allocation2 + $0x7d0] sm:$0xff]
  %v2404 = vld [vmem:[#allocation2 + $0x7d8] sm:$0xff]
  %v2405 = vld [vmem:[#allocation2 + $0x7e0] sm:$0xff]
  %v2406 = vld [vmem:[#allocation2 + $0x7e8] sm:$0xff]
  %v2407 = vld [vmem:[#allocation2 + $0x7f0] sm:$0xff]
  %v2408 = vld [vmem:[#allocation2 + $0x7f8] sm:$0xff]
  %v2409 = vld [vmem:[#allocation2 + $0x800] sm:$0xff]
  %v2410 = vld [vmem:[#allocation2 + $0x808] sm:$0xff]
  %v2411 = vld [vmem:[#allocation2 + $0x810] sm:$0xff]
  %v2412 = vld [vmem:[#allocation2 + $0x818] sm:$0xff]
  %v2413 = vld [vmem:[#allocation2 + $0x820] sm:$0xff]
  %v2414 = vld [vmem:[#allocation2 + $0x828] sm:$0xff]
  %v2415 = vld [vmem:[#allocation2 + $0x830] sm:$0xff]
  %v2416 = vld [vmem:[#allocation2 + $0x838] sm:$0xff]
  %v2417 = vld [vmem:[#allocation2 + $0x840] sm:$0xff]
  %v2418 = vld [vmem:[#allocation2 + $0x848] sm:$0xff]
  %v2419 = vld [vmem:[#allocation2 + $0x850] sm:$0xff]
  %v2420 = vld [vmem:[#allocation2 + $0x858] sm:$0xff]
  %v2421 = vld [vmem:[#allocation2 + $0x860] sm:$0xff]
  %v2422 = vld [vmem:[#allocation2 + $0x868] sm:$0xff]
  %v2423 = vld [vmem:[#allocation2 + $0x870] sm:$0xff]
  %v2424 = vld [vmem:[#allocation2 + $0x878] sm:$0xff]
  %v2425 = vld [vmem:[#allocation2 + $0x880] sm:$0xff]
  %v2426 = vld [vmem:[#allocation2 + $0x888] sm:$0xff]
  %v2427 = vld [vmem:[#allocation2 + $0x890] sm:$0xff]
  %v2428 = vld [vmem:[#allocation2 + $0x898] sm:$0xff]
  %v2429 = vld [vmem:[#allocation2 + $0x8a0] sm:$0xff]
  %v2430 = vld [vmem:[#allocation2 + $0x8a8] sm:$0xff]
  %v2431 = vld [vmem:[#allocation2 + $0x8b0] sm:$0xff]
  %v2432 = vld [vmem:[#allocation2 + $0x8b8] sm:$0xff]
  %v2433 = vld [vmem:[#allocation2 + $0x8c0] sm:$0xff]
  %v2434 = vld [vmem:[#allocation2 + $0x8c8] sm:$0xff]
  %v2435 = vld [vmem:[#allocation2 + $0x8d0] sm:$0xff]
  %v2436 = vld [vmem:[#allocation2 + $0x8d8] sm:$0xff]
  %v2437 = vld [vmem:[#allocation2 + $0x8e0] sm:$0xff]
  %v2438 = vld [vmem:[#allocation2 + $0x8e8] sm:$0xff]
  %v2439 = vld [vmem:[#allocation2 + $0x8f0] sm:$0xff]
  %v2440 = vld [vmem:[#allocation2 + $0x8f8] sm:$0xff]
  %v2441 = vld [vmem:[#allocation2 + $0x900] sm:$0xff]
  %v2442 = vld [vmem:[#allocation2 + $0x908] sm:$0xff]
  %v2443 = vld [vmem:[#allocation2 + $0x910] sm:$0xff]
  %v2444 = vld [vmem:[#allocation2 + $0x918] sm:$0xff]
  %v2445 = vld [vmem:[#allocation2 + $0x920] sm:$0xff]
  %v2446 = vld [vmem:[#allocation2 + $0x928] sm:$0xff]
  %v2447 = vld [vmem:[#allocation2 + $0x930] sm:$0xff]
  %v2448 = vld [vmem:[#allocation2 + $0x938] sm:$0xff]
  %v2449 = vld [vmem:[#allocation2 + $0x940] sm:$0xff]
  %v2450 = vld [vmem:[#allocation2 + $0x948] sm:$0xff]
  %v2451 = vld [vmem:[#allocation2 + $0x950] sm:$0xff]
  %v2452 = vld [vmem:[#allocation2 + $0x958] sm:$0xff]
  %v2453 = vld [vmem:[#allocation2 + $0x960] sm:$0xff]
  %v2454 = vld [vmem:[#allocation2 + $0x968] sm:$0xff]
  %v2455 = vld [vmem:[#allocation2 + $0x970] sm:$0xff]
  %v2456 = vld [vmem:[#allocation2 + $0x978] sm:$0xff]
  %v2457 = vld [vmem:[#allocation2 + $0x980] sm:$0xff]
  %v2458 = vld [vmem:[#allocation2 + $0x988] sm:$0xff]
  %v2459 = vld [vmem:[#allocation2 + $0x990] sm:$0xff]
  %v2460 = vld [vmem:[#allocation2 + $0x998] sm:$0xff]
  %v2461 = vld [vmem:[#allocation2 + $0x9a0] sm:$0xff]
  %v2462 = vld [vmem:[#allocation2 + $0x9a8] sm:$0xff]
  %v2463 = vld [vmem:[#allocation2 + $0x9b0] sm:$0xff]
  %v2464 = vld [vmem:[#allocation2 + $0x9b8] sm:$0xff]
  %v2465 = vld [vmem:[#allocation2 + $0x9c0] sm:$0xff]
  %v2466 = vld [vmem:[#allocation2 + $0x9c8] sm:$0xff]
  %v2467 = vld [vmem:[#allocation2 + $0x9d0] sm:$0xff]
  %v2468 = vld [vmem:[#allocation2 + $0x9d8] sm:$0xff]
  %v2469 = vld [vmem:[#allocation2 + $0x9e0] sm:$0xff]
  %v2470 = vld [vmem:[#allocation2 + $0x9e8] sm:$0xff]
  %v2471 = vld [vmem:[#allocation2 + $0x9f0] sm:$0xff]
  %v2472 = vld [vmem:[#allocation2 + $0x9f8] sm:$0xff]
  %v2473 = vld [vmem:[#allocation2 + $0xa00] sm:$0xff]
  %v2474 = vld [vmem:[#allocation2 + $0xa08] sm:$0xff]
  %v2475 = vld [vmem:[#allocation2 + $0xa10] sm:$0xff]
  %v2476 = vld [vmem:[#allocation2 + $0xa18] sm:$0xff]
  %v2477 = vld [vmem:[%s2] sm:$0xff]
  %v2478 = vld [vmem:[%s2 + $0x8] sm:$0xff]
  %v2479 = vld [vmem:[%s2 + $0x10] sm:$0xf]
  %2481 = vset.pattern.permute.xlu0 0
  %2482 = vperm.xlu0 %2481, %v2477
  %v2483 = vpop.permute.xlu0 %2482
  %2486 = vset.pattern.permute.xlu0 0
  %2487 = vperm.xlu0 %2486, %v2478
  %v2488 = vpop.permute.xlu0 %2487
  %2491 = vset.pattern.permute.xlu0 0
  %2492 = vperm.xlu0 %2491, %v2479
  %v2493 = vpop.permute.xlu0 %2492
  %vm2495 = vcmask 261120
  %v2497 = vsel %vm2495, %v2146, 0
  %v2500 = vsel %vm2495, %v2149, 0
  %v2503 = vsel %vm2495, %v2152, 0
  %2505 = vmatpush.msra.mxu0 %v2288
  %2506 = vmatpush.msra.mxu0 %v2279
  %2507 = vmatpush.msra.mxu0 %v2270
  %2508 = vmatpush.msra.mxu0 %v2261
  %2509 = vmatpush.msra.mxu0 %v2252
  %2510 = vmatpush.msra.mxu0 %v2243
  %2511 = vmatpush.msra.mxu0 %v2234
  %2512 = vmatpush.msra.mxu0 %v2225
  %2513 = vmatpush.msra.mxu0 %v2216
  %2514 = vmatpush.msra.mxu0 %v2207
  %2515 = vmatpush.msra.mxu0 %v2198
  %2516 = vmatpush.msra.mxu0 %v2189
  %2517 = vmatpush.msra.mxu0 %v2180
  %2518 = vmatpush.msra.mxu0 %v2171
  %2519 = vmatpush.msra.mxu0 %v2162
  %2520 = vmatpush.msra.mxu0 %v2153
  %2521 = vmatmul.f32.gmra.mxu0 %v2144
  %v2522 = vpop.f32.mrf.mxu0
  %v2523 = vadd.f32 %v2483, %v2522
  %2524 = vmatmul.f32.gmra.mxu0 %v2147
  %v2525 = vpop.f32.mrf.mxu0
  %v2526 = vadd.f32 %v2488, %v2525
  %2527 = vmatmul.f32.gmra.mxu0 %v2150
  %v2528 = vpop.f32.mrf.mxu0
  %v2529 = vadd.f32 %v2493, %v2528
  %2530 = vdwg.mxu0
  %2531 = vmatpush.msra.mxu0 %v2432
  %2532 = vmatpush.msra.mxu0 %v2423
  %2533 = vmatpush.msra.mxu0 %v2414
  %2534 = vmatpush.msra.mxu0 %v2405
  %2535 = vmatpush.msra.mxu0 %v2396
  %2536 = vmatpush.msra.mxu0 %v2387
  %2537 = vmatpush.msra.mxu0 %v2378
  %2538 = vmatpush.msra.mxu0 %v2369
  %2539 = vmatpush.msra.mxu0 %v2360
  %2540 = vmatpush.msra.mxu0 %v2351
  %2541 = vmatpush.msra.mxu0 %v2342
  %2542 = vmatpush.msra.mxu0 %v2333
  %2543 = vmatpush.msra.mxu0 %v2324
  %2544 = vmatpush.msra.mxu0 %v2315
  %2545 = vmatpush.msra.mxu0 %v2306
  %2546 = vmatpush.msra.mxu0 %v2297
  %2547 = vmatmul.f32.gmra.mxu0 %v2145
  %v2548 = vpop.f32.mrf.mxu0
  %v2549 = vadd.f32 %v2523, %v2548
  %2550 = vmatmul.f32.gmra.mxu0 %v2148
  %v2551 = vpop.f32.mrf.mxu0
  %v2552 = vadd.f32 %v2526, %v2551
  %2553 = vmatmul.f32.gmra.mxu0 %v2151
  %v2554 = vpop.f32.mrf.mxu0
  %v2555 = vadd.f32 %v2529, %v2554
  %2556 = vdwg.mxu0
  %2557 = vmatpush.msra.mxu0 0.0
  %2558 = vmatpush.msra.mxu0 0.0
  %2559 = vmatpush.msra.mxu0 0.0
  %2560 = vmatpush.msra.mxu0 0.0
  %2561 = vmatpush.msra.mxu0 0.0
  %2562 = vmatpush.msra.mxu0 0.0
  %2563 = vmatpush.msra.mxu0 0.0
  %2564 = vmatpush.msra.mxu0 0.0
  %2565 = vmatpush.msra.mxu0 0.0
  %2566 = vmatpush.msra.mxu0 0.0
  %2567 = vmatpush.msra.mxu0 0.0
  %2568 = vmatpush.msra.mxu0 0.0
  %2569 = vmatpush.msra.mxu0 %v2468
  %2570 = vmatpush.msra.mxu0 %v2459
  %2571 = vmatpush.msra.mxu0 %v2450
  %2572 = vmatpush.msra.mxu0 %v2441
  %2573 = vmatmul.f32.gmra.mxu0 %v2497
  %v2574 = vpop.f32.mrf.mxu0
  %v2575 = vadd.f32 %v2549, %v2574
  %2576 = vmatmul.f32.gmra.mxu0 %v2500
  %v2577 = vpop.f32.mrf.mxu0
  %v2578 = vadd.f32 %v2552, %v2577
  %2579 = vmatmul.f32.gmra.mxu0 %v2503
  %v2580 = vpop.f32.mrf.mxu0
  %v2581 = vadd.f32 %v2555, %v2580
  %2582 = vdwg.mxu0
  %2583 = vmatpush.msra.mxu0 %v2289
  %2584 = vmatpush.msra.mxu0 %v2280
  %2585 = vmatpush.msra.mxu0 %v2271
  %2586 = vmatpush.msra.mxu0 %v2262
  %2587 = vmatpush.msra.mxu0 %v2253
  %2588 = vmatpush.msra.mxu0 %v2244
  %2589 = vmatpush.msra.mxu0 %v2235
  %2590 = vmatpush.msra.mxu0 %v2226
  %2591 = vmatpush.msra.mxu0 %v2217
  %2592 = vmatpush.msra.mxu0 %v2208
  %2593 = vmatpush.msra.mxu0 %v2199
  %2594 = vmatpush.msra.mxu0 %v2190
  %2595 = vmatpush.msra.mxu0 %v2181
  %2596 = vmatpush.msra.mxu0 %v2172
  %2597 = vmatpush.msra.mxu0 %v2163
  %2598 = vmatpush.msra.mxu0 %v2154
  %2599 = vmatmul.f32.gmra.mxu0 %v2144
  %v2600 = vpop.f32.mrf.mxu0
  %v2601 = vadd.f32 %v2483, %v2600
  %2602 = vmatmul.f32.gmra.mxu0 %v2147
  %v2603 = vpop.f32.mrf.mxu0
  %v2604 = vadd.f32 %v2488, %v2603
  %2605 = vmatmul.f32.gmra.mxu0 %v2150
  %v2606 = vpop.f32.mrf.mxu0
  %v2607 = vadd.f32 %v2493, %v2606
  %2608 = vdwg.mxu0
  %2609 = vmatpush.msra.mxu0 %v2433
  %2610 = vmatpush.msra.mxu0 %v2424
  %2611 = vmatpush.msra.mxu0 %v2415
  %2612 = vmatpush.msra.mxu0 %v2406
  %2613 = vmatpush.msra.mxu0 %v2397
  %2614 = vmatpush.msra.mxu0 %v2388
  %2615 = vmatpush.msra.mxu0 %v2379
  %2616 = vmatpush.msra.mxu0 %v2370
  %2617 = vmatpush.msra.mxu0 %v2361
  %2618 = vmatpush.msra.mxu0 %v2352
  %2619 = vmatpush.msra.mxu0 %v2343
  %2620 = vmatpush.msra.mxu0 %v2334
  %2621 = vmatpush.msra.mxu0 %v2325
  %2622 = vmatpush.msra.mxu0 %v2316
  %2623 = vmatpush.msra.mxu0 %v2307
  %2624 = vmatpush.msra.mxu0 %v2298
  %2625 = vmatmul.f32.gmra.mxu0 %v2145
  %v2626 = vpop.f32.mrf.mxu0
  %v2627 = vadd.f32 %v2601, %v2626
  %2628 = vmatmul.f32.gmra.mxu0 %v2148
  %v2629 = vpop.f32.mrf.mxu0
  %v2630 = vadd.f32 %v2604, %v2629
  %2631 = vmatmul.f32.gmra.mxu0 %v2151
  %v2632 = vpop.f32.mrf.mxu0
  %v2633 = vadd.f32 %v2607, %v2632
  %2634 = vdwg.mxu0
  %2635 = vmatpush.msra.mxu0 0.0
  %2636 = vmatpush.msra.mxu0 0.0
  %2637 = vmatpush.msra.mxu0 0.0
  %2638 = vmatpush.msra.mxu0 0.0
  %2639 = vmatpush.msra.mxu0 0.0
  %2640 = vmatpush.msra.mxu0 0.0
  %2641 = vmatpush.msra.mxu0 0.0
  %2642 = vmatpush.msra.mxu0 0.0
  %2643 = vmatpush.msra.mxu0 0.0
  %2644 = vmatpush.msra.mxu0 0.0
  %2645 = vmatpush.msra.mxu0 0.0
  %2646 = vmatpush.msra.mxu0 0.0
  %2647 = vmatpush.msra.mxu0 %v2469
  %2648 = vmatpush.msra.mxu0 %v2460
  %2649 = vmatpush.msra.mxu0 %v2451
  %2650 = vmatpush.msra.mxu0 %v2442
  %2651 = vmatmul.f32.gmra.mxu0 %v2497
  %v2652 = vpop.f32.mrf.mxu0
  %v2653 = vadd.f32 %v2627, %v2652
  %2654 = vmatmul.f32.gmra.mxu0 %v2500
  %v2655 = vpop.f32.mrf.mxu0
  %v2656 = vadd.f32 %v2630, %v2655
  %2657 = vmatmul.f32.gmra.mxu0 %v2503
  %v2658 = vpop.f32.mrf.mxu0
  %v2659 = vadd.f32 %v2633, %v2658
  %2660 = vdwg.mxu0
  %2661 = vmatpush.msra.mxu0 %v2290
  %2662 = vmatpush.msra.mxu0 %v2281
  %2663 = vmatpush.msra.mxu0 %v2272
  %2664 = vmatpush.msra.mxu0 %v2263
  %2665 = vmatpush.msra.mxu0 %v2254
  %2666 = vmatpush.msra.mxu0 %v2245
  %2667 = vmatpush.msra.mxu0 %v2236
  %2668 = vmatpush.msra.mxu0 %v2227
  %2669 = vmatpush.msra.mxu0 %v2218
  %2670 = vmatpush.msra.mxu0 %v2209
  %2671 = vmatpush.msra.mxu0 %v2200
  %2672 = vmatpush.msra.mxu0 %v2191
  %2673 = vmatpush.msra.mxu0 %v2182
  %2674 = vmatpush.msra.mxu0 %v2173
  %2675 = vmatpush.msra.mxu0 %v2164
  %2676 = vmatpush.msra.mxu0 %v2155
  %2677 = vmatmul.f32.gmra.mxu0 %v2144
  %v2678 = vpop.f32.mrf.mxu0
  %v2679 = vadd.f32 %v2483, %v2678
  %2680 = vmatmul.f32.gmra.mxu0 %v2147
  %v2681 = vpop.f32.mrf.mxu0
  %v2682 = vadd.f32 %v2488, %v2681
  %2683 = vmatmul.f32.gmra.mxu0 %v2150
  %v2684 = vpop.f32.mrf.mxu0
  %v2685 = vadd.f32 %v2493, %v2684
  %2686 = vdwg.mxu0
  %2687 = vmatpush.msra.mxu0 %v2434
  %2688 = vmatpush.msra.mxu0 %v2425
  %2689 = vmatpush.msra.mxu0 %v2416
  %2690 = vmatpush.msra.mxu0 %v2407
  %2691 = vmatpush.msra.mxu0 %v2398
  %2692 = vmatpush.msra.mxu0 %v2389
  %2693 = vmatpush.msra.mxu0 %v2380
  %2694 = vmatpush.msra.mxu0 %v2371
  %2695 = vmatpush.msra.mxu0 %v2362
  %2696 = vmatpush.msra.mxu0 %v2353
  %2697 = vmatpush.msra.mxu0 %v2344
  %2698 = vmatpush.msra.mxu0 %v2335
  %2699 = vmatpush.msra.mxu0 %v2326
  %2700 = vmatpush.msra.mxu0 %v2317
  %2701 = vmatpush.msra.mxu0 %v2308
  %2702 = vmatpush.msra.mxu0 %v2299
  %2703 = vmatmul.f32.gmra.mxu0 %v2145
  %v2704 = vpop.f32.mrf.mxu0
  %v2705 = vadd.f32 %v2679, %v2704
  %2706 = vmatmul.f32.gmra.mxu0 %v2148
  %v2707 = vpop.f32.mrf.mxu0
  %v2708 = vadd.f32 %v2682, %v2707
  %2709 = vmatmul.f32.gmra.mxu0 %v2151
  %v2710 = vpop.f32.mrf.mxu0
  %v2711 = vadd.f32 %v2685, %v2710
  %2712 = vdwg.mxu0
  %2713 = vmatpush.msra.mxu0 0.0
  %2714 = vmatpush.msra.mxu0 0.0
  %2715 = vmatpush.msra.mxu0 0.0
  %2716 = vmatpush.msra.mxu0 0.0
  %2717 = vmatpush.msra.mxu0 0.0
  %2718 = vmatpush.msra.mxu0 0.0
  %2719 = vmatpush.msra.mxu0 0.0
  %2720 = vmatpush.msra.mxu0 0.0
  %2721 = vmatpush.msra.mxu0 0.0
  %2722 = vmatpush.msra.mxu0 0.0
  %2723 = vmatpush.msra.mxu0 0.0
  %2724 = vmatpush.msra.mxu0 0.0
  %2725 = vmatpush.msra.mxu0 %v2470
  %2726 = vmatpush.msra.mxu0 %v2461
  %2727 = vmatpush.msra.mxu0 %v2452
  %2728 = vmatpush.msra.mxu0 %v2443
  %2729 = vmatmul.f32.gmra.mxu0 %v2497
  %v2730 = vpop.f32.mrf.mxu0
  %v2731 = vadd.f32 %v2705, %v2730
  %2732 = vmatmul.f32.gmra.mxu0 %v2500
  %v2733 = vpop.f32.mrf.mxu0
  %v2734 = vadd.f32 %v2708, %v2733
  %2735 = vmatmul.f32.gmra.mxu0 %v2503
  %v2736 = vpop.f32.mrf.mxu0
  %v2737 = vadd.f32 %v2711, %v2736
  %2738 = vdwg.mxu0
  %2739 = vmatpush.msra.mxu0 %v2291
  %2740 = vmatpush.msra.mxu0 %v2282
  %2741 = vmatpush.msra.mxu0 %v2273
  %2742 = vmatpush.msra.mxu0 %v2264
  %2743 = vmatpush.msra.mxu0 %v2255
  %2744 = vmatpush.msra.mxu0 %v2246
  %2745 = vmatpush.msra.mxu0 %v2237
  %2746 = vmatpush.msra.mxu0 %v2228
  %2747 = vmatpush.msra.mxu0 %v2219
  %2748 = vmatpush.msra.mxu0 %v2210
  %2749 = vmatpush.msra.mxu0 %v2201
  %2750 = vmatpush.msra.mxu0 %v2192
  %2751 = vmatpush.msra.mxu0 %v2183
  %2752 = vmatpush.msra.mxu0 %v2174
  %2753 = vmatpush.msra.mxu0 %v2165
  %2754 = vmatpush.msra.mxu0 %v2156
  %2755 = vmatmul.f32.gmra.mxu0 %v2144
  %v2756 = vpop.f32.mrf.mxu0
  %v2757 = vadd.f32 %v2483, %v2756
  %2758 = vmatmul.f32.gmra.mxu0 %v2147
  %v2759 = vpop.f32.mrf.mxu0
  %v2760 = vadd.f32 %v2488, %v2759
  %2761 = vmatmul.f32.gmra.mxu0 %v2150
  %v2762 = vpop.f32.mrf.mxu0
  %v2763 = vadd.f32 %v2493, %v2762
  %2764 = vdwg.mxu0
  %2765 = vmatpush.msra.mxu0 %v2435
  %2766 = vmatpush.msra.mxu0 %v2426
  %2767 = vmatpush.msra.mxu0 %v2417
  %2768 = vmatpush.msra.mxu0 %v2408
  %2769 = vmatpush.msra.mxu0 %v2399
  %2770 = vmatpush.msra.mxu0 %v2390
  %2771 = vmatpush.msra.mxu0 %v2381
  %2772 = vmatpush.msra.mxu0 %v2372
  %2773 = vmatpush.msra.mxu0 %v2363
  %2774 = vmatpush.msra.mxu0 %v2354
  %2775 = vmatpush.msra.mxu0 %v2345
  %2776 = vmatpush.msra.mxu0 %v2336
  %2777 = vmatpush.msra.mxu0 %v2327
  %2778 = vmatpush.msra.mxu0 %v2318
  %2779 = vmatpush.msra.mxu0 %v2309
  %2780 = vmatpush.msra.mxu0 %v2300
  %2781 = vmatmul.f32.gmra.mxu0 %v2145
  %v2782 = vpop.f32.mrf.mxu0
  %v2783 = vadd.f32 %v2757, %v2782
  %2784 = vmatmul.f32.gmra.mxu0 %v2148
  %v2785 = vpop.f32.mrf.mxu0
  %v2786 = vadd.f32 %v2760, %v2785
  %2787 = vmatmul.f32.gmra.mxu0 %v2151
  %v2788 = vpop.f32.mrf.mxu0
  %v2789 = vadd.f32 %v2763, %v2788
  %2790 = vdwg.mxu0
  %2791 = vmatpush.msra.mxu0 0.0
  %2792 = vmatpush.msra.mxu0 0.0
  %2793 = vmatpush.msra.mxu0 0.0
  %2794 = vmatpush.msra.mxu0 0.0
  %2795 = vmatpush.msra.mxu0 0.0
  %2796 = vmatpush.msra.mxu0 0.0
  %2797 = vmatpush.msra.mxu0 0.0
  %2798 = vmatpush.msra.mxu0 0.0
  %2799 = vmatpush.msra.mxu0 0.0
  %2800 = vmatpush.msra.mxu0 0.0
  %2801 = vmatpush.msra.mxu0 0.0
  %2802 = vmatpush.msra.mxu0 0.0
  %2803 = vmatpush.msra.mxu0 %v2471
  %2804 = vmatpush.msra.mxu0 %v2462
  %2805 = vmatpush.msra.mxu0 %v2453
  %2806 = vmatpush.msra.mxu0 %v2444
  %2807 = vmatmul.f32.gmra.mxu0 %v2497
  %v2808 = vpop.f32.mrf.mxu0
  %v2809 = vadd.f32 %v2783, %v2808
  %2810 = vmatmul.f32.gmra.mxu0 %v2500
  %v2811 = vpop.f32.mrf.mxu0
  %v2812 = vadd.f32 %v2786, %v2811
  %2813 = vmatmul.f32.gmra.mxu0 %v2503
  %v2814 = vpop.f32.mrf.mxu0
  %v2815 = vadd.f32 %v2789, %v2814
  %2816 = vdwg.mxu0
  %2817 = vmatpush.msra.mxu0 %v2292
  %2818 = vmatpush.msra.mxu0 %v2283
  %2819 = vmatpush.msra.mxu0 %v2274
  %2820 = vmatpush.msra.mxu0 %v2265
  %2821 = vmatpush.msra.mxu0 %v2256
  %2822 = vmatpush.msra.mxu0 %v2247
  %2823 = vmatpush.msra.mxu0 %v2238
  %2824 = vmatpush.msra.mxu0 %v2229
  %2825 = vmatpush.msra.mxu0 %v2220
  %2826 = vmatpush.msra.mxu0 %v2211
  %2827 = vmatpush.msra.mxu0 %v2202
  %2828 = vmatpush.msra.mxu0 %v2193
  %2829 = vmatpush.msra.mxu0 %v2184
  %2830 = vmatpush.msra.mxu0 %v2175
  %2831 = vmatpush.msra.mxu0 %v2166
  %2832 = vmatpush.msra.mxu0 %v2157
  %2833 = vmatmul.f32.gmra.mxu0 %v2144
  %v2834 = vpop.f32.mrf.mxu0
  %v2835 = vadd.f32 %v2483, %v2834
  %2836 = vmatmul.f32.gmra.mxu0 %v2147
  %v2837 = vpop.f32.mrf.mxu0
  %v2838 = vadd.f32 %v2488, %v2837
  %2839 = vmatmul.f32.gmra.mxu0 %v2150
  %v2840 = vpop.f32.mrf.mxu0
  %v2841 = vadd.f32 %v2493, %v2840
  %2842 = vdwg.mxu0
  %2843 = vmatpush.msra.mxu0 %v2436
  %2844 = vmatpush.msra.mxu0 %v2427
  %2845 = vmatpush.msra.mxu0 %v2418
  %2846 = vmatpush.msra.mxu0 %v2409
  %2847 = vmatpush.msra.mxu0 %v2400
  %2848 = vmatpush.msra.mxu0 %v2391
  %2849 = vmatpush.msra.mxu0 %v2382
  %2850 = vmatpush.msra.mxu0 %v2373
  %2851 = vmatpush.msra.mxu0 %v2364
  %2852 = vmatpush.msra.mxu0 %v2355
  %2853 = vmatpush.msra.mxu0 %v2346
  %2854 = vmatpush.msra.mxu0 %v2337
  %2855 = vmatpush.msra.mxu0 %v2328
  %2856 = vmatpush.msra.mxu0 %v2319
  %2857 = vmatpush.msra.mxu0 %v2310
  %2858 = vmatpush.msra.mxu0 %v2301
  %2859 = vmatmul.f32.gmra.mxu0 %v2145
  %v2860 = vpop.f32.mrf.mxu0
  %v2861 = vadd.f32 %v2835, %v2860
  %2862 = vmatmul.f32.gmra.mxu0 %v2148
  %v2863 = vpop.f32.mrf.mxu0
  %v2864 = vadd.f32 %v2838, %v2863
  %2865 = vmatmul.f32.gmra.mxu0 %v2151
  %v2866 = vpop.f32.mrf.mxu0
  %v2867 = vadd.f32 %v2841, %v2866
  %2868 = vdwg.mxu0
  %2869 = vmatpush.msra.mxu0 0.0
  %2870 = vmatpush.msra.mxu0 0.0
  %2871 = vmatpush.msra.mxu0 0.0
  %2872 = vmatpush.msra.mxu0 0.0
  %2873 = vmatpush.msra.mxu0 0.0
  %2874 = vmatpush.msra.mxu0 0.0
  %2875 = vmatpush.msra.mxu0 0.0
  %2876 = vmatpush.msra.mxu0 0.0
  %2877 = vmatpush.msra.mxu0 0.0
  %2878 = vmatpush.msra.mxu0 0.0
  %2879 = vmatpush.msra.mxu0 0.0
  %2880 = vmatpush.msra.mxu0 0.0
  %2881 = vmatpush.msra.mxu0 %v2472
  %2882 = vmatpush.msra.mxu0 %v2463
  %2883 = vmatpush.msra.mxu0 %v2454
  %2884 = vmatpush.msra.mxu0 %v2445
  %2885 = vmatmul.f32.gmra.mxu0 %v2497
  %v2886 = vpop.f32.mrf.mxu0
  %v2887 = vadd.f32 %v2861, %v2886
  %2888 = vmatmul.f32.gmra.mxu0 %v2500
  %v2889 = vpop.f32.mrf.mxu0
  %v2890 = vadd.f32 %v2864, %v2889
  %2891 = vmatmul.f32.gmra.mxu0 %v2503
  %v2892 = vpop.f32.mrf.mxu0
  %v2893 = vadd.f32 %v2867, %v2892
  %2894 = vdwg.mxu0
  %2895 = vmatpush.msra.mxu0 %v2293
  %2896 = vmatpush.msra.mxu0 %v2284
  %2897 = vmatpush.msra.mxu0 %v2275
  %2898 = vmatpush.msra.mxu0 %v2266
  %2899 = vmatpush.msra.mxu0 %v2257
  %2900 = vmatpush.msra.mxu0 %v2248
  %2901 = vmatpush.msra.mxu0 %v2239
  %2902 = vmatpush.msra.mxu0 %v2230
  %2903 = vmatpush.msra.mxu0 %v2221
  %2904 = vmatpush.msra.mxu0 %v2212
  %2905 = vmatpush.msra.mxu0 %v2203
  %2906 = vmatpush.msra.mxu0 %v2194
  %2907 = vmatpush.msra.mxu0 %v2185
  %2908 = vmatpush.msra.mxu0 %v2176
  %2909 = vmatpush.msra.mxu0 %v2167
  %2910 = vmatpush.msra.mxu0 %v2158
  %2911 = vmatmul.f32.gmra.mxu0 %v2144
  %v2912 = vpop.f32.mrf.mxu0
  %v2913 = vadd.f32 %v2483, %v2912
  %2914 = vmatmul.f32.gmra.mxu0 %v2147
  %v2915 = vpop.f32.mrf.mxu0
  %v2916 = vadd.f32 %v2488, %v2915
  %2917 = vmatmul.f32.gmra.mxu0 %v2150
  %v2918 = vpop.f32.mrf.mxu0
  %v2919 = vadd.f32 %v2493, %v2918
  %2920 = vdwg.mxu0
  %2921 = vmatpush.msra.mxu0 %v2437
  %2922 = vmatpush.msra.mxu0 %v2428
  %2923 = vmatpush.msra.mxu0 %v2419
  %2924 = vmatpush.msra.mxu0 %v2410
  %2925 = vmatpush.msra.mxu0 %v2401
  %2926 = vmatpush.msra.mxu0 %v2392
  %2927 = vmatpush.msra.mxu0 %v2383
  %2928 = vmatpush.msra.mxu0 %v2374
  %2929 = vmatpush.msra.mxu0 %v2365
  %2930 = vmatpush.msra.mxu0 %v2356
  %2931 = vmatpush.msra.mxu0 %v2347
  %2932 = vmatpush.msra.mxu0 %v2338
  %2933 = vmatpush.msra.mxu0 %v2329
  %2934 = vmatpush.msra.mxu0 %v2320
  %2935 = vmatpush.msra.mxu0 %v2311
  %2936 = vmatpush.msra.mxu0 %v2302
  %2937 = vmatmul.f32.gmra.mxu0 %v2145
  %v2938 = vpop.f32.mrf.mxu0
  %v2939 = vadd.f32 %v2913, %v2938
  %2940 = vmatmul.f32.gmra.mxu0 %v2148
  %v2941 = vpop.f32.mrf.mxu0
  %v2942 = vadd.f32 %v2916, %v2941
  %2943 = vmatmul.f32.gmra.mxu0 %v2151
  %v2944 = vpop.f32.mrf.mxu0
  %v2945 = vadd.f32 %v2919, %v2944
  %2946 = vdwg.mxu0
  %2947 = vmatpush.msra.mxu0 0.0
  %2948 = vmatpush.msra.mxu0 0.0
  %2949 = vmatpush.msra.mxu0 0.0
  %2950 = vmatpush.msra.mxu0 0.0
  %2951 = vmatpush.msra.mxu0 0.0
  %2952 = vmatpush.msra.mxu0 0.0
  %2953 = vmatpush.msra.mxu0 0.0
  %2954 = vmatpush.msra.mxu0 0.0
  %2955 = vmatpush.msra.mxu0 0.0
  %2956 = vmatpush.msra.mxu0 0.0
  %2957 = vmatpush.msra.mxu0 0.0
  %2958 = vmatpush.msra.mxu0 0.0
  %2959 = vmatpush.msra.mxu0 %v2473
  %2960 = vmatpush.msra.mxu0 %v2464
  %2961 = vmatpush.msra.mxu0 %v2455
  %2962 = vmatpush.msra.mxu0 %v2446
  %2963 = vmatmul.f32.gmra.mxu0 %v2497
  %v2964 = vpop.f32.mrf.mxu0
  %v2965 = vadd.f32 %v2939, %v2964
  %2966 = vmatmul.f32.gmra.mxu0 %v2500
  %v2967 = vpop.f32.mrf.mxu0
  %v2968 = vadd.f32 %v2942, %v2967
  %2969 = vmatmul.f32.gmra.mxu0 %v2503
  %v2970 = vpop.f32.mrf.mxu0
  %v2971 = vadd.f32 %v2945, %v2970
  %2972 = vdwg.mxu0
  %2973 = vmatpush.msra.mxu0 %v2294
  %2974 = vmatpush.msra.mxu0 %v2285
  %2975 = vmatpush.msra.mxu0 %v2276
  %2976 = vmatpush.msra.mxu0 %v2267
  %2977 = vmatpush.msra.mxu0 %v2258
  %2978 = vmatpush.msra.mxu0 %v2249
  %2979 = vmatpush.msra.mxu0 %v2240
  %2980 = vmatpush.msra.mxu0 %v2231
  %2981 = vmatpush.msra.mxu0 %v2222
  %2982 = vmatpush.msra.mxu0 %v2213
  %2983 = vmatpush.msra.mxu0 %v2204
  %2984 = vmatpush.msra.mxu0 %v2195
  %2985 = vmatpush.msra.mxu0 %v2186
  %2986 = vmatpush.msra.mxu0 %v2177
  %2987 = vmatpush.msra.mxu0 %v2168
  %2988 = vmatpush.msra.mxu0 %v2159
  %2989 = vmatmul.f32.gmra.mxu0 %v2144
  %v2990 = vpop.f32.mrf.mxu0
  %v2991 = vadd.f32 %v2483, %v2990
  %2992 = vmatmul.f32.gmra.mxu0 %v2147
  %v2993 = vpop.f32.mrf.mxu0
  %v2994 = vadd.f32 %v2488, %v2993
  %2995 = vmatmul.f32.gmra.mxu0 %v2150
  %v2996 = vpop.f32.mrf.mxu0
  %v2997 = vadd.f32 %v2493, %v2996
  %2998 = vdwg.mxu0
  %2999 = vmatpush.msra.mxu0 %v2438
  %3000 = vmatpush.msra.mxu0 %v2429
  %3001 = vmatpush.msra.mxu0 %v2420
  %3002 = vmatpush.msra.mxu0 %v2411
  %3003 = vmatpush.msra.mxu0 %v2402
  %3004 = vmatpush.msra.mxu0 %v2393
  %3005 = vmatpush.msra.mxu0 %v2384
  %3006 = vmatpush.msra.mxu0 %v2375
  %3007 = vmatpush.msra.mxu0 %v2366
  %3008 = vmatpush.msra.mxu0 %v2357
  %3009 = vmatpush.msra.mxu0 %v2348
  %3010 = vmatpush.msra.mxu0 %v2339
  %3011 = vmatpush.msra.mxu0 %v2330
  %3012 = vmatpush.msra.mxu0 %v2321
  %3013 = vmatpush.msra.mxu0 %v2312
  %3014 = vmatpush.msra.mxu0 %v2303
  %3015 = vmatmul.f32.gmra.mxu0 %v2145
  %v3016 = vpop.f32.mrf.mxu0
  %v3017 = vadd.f32 %v2991, %v3016
  %3018 = vmatmul.f32.gmra.mxu0 %v2148
  %v3019 = vpop.f32.mrf.mxu0
  %v3020 = vadd.f32 %v2994, %v3019
  %3021 = vmatmul.f32.gmra.mxu0 %v2151
  %v3022 = vpop.f32.mrf.mxu0
  %v3023 = vadd.f32 %v2997, %v3022
  %3024 = vdwg.mxu0
  %3025 = vmatpush.msra.mxu0 0.0
  %3026 = vmatpush.msra.mxu0 0.0
  %3027 = vmatpush.msra.mxu0 0.0
  %3028 = vmatpush.msra.mxu0 0.0
  %3029 = vmatpush.msra.mxu0 0.0
  %3030 = vmatpush.msra.mxu0 0.0
  %3031 = vmatpush.msra.mxu0 0.0
  %3032 = vmatpush.msra.mxu0 0.0
  %3033 = vmatpush.msra.mxu0 0.0
  %3034 = vmatpush.msra.mxu0 0.0
  %3035 = vmatpush.msra.mxu0 0.0
  %3036 = vmatpush.msra.mxu0 0.0
  %3037 = vmatpush.msra.mxu0 %v2474
  %3038 = vmatpush.msra.mxu0 %v2465
  %3039 = vmatpush.msra.mxu0 %v2456
  %3040 = vmatpush.msra.mxu0 %v2447
  %3041 = vmatmul.f32.gmra.mxu0 %v2497
  %v3042 = vpop.f32.mrf.mxu0
  %v3043 = vadd.f32 %v3017, %v3042
  %3044 = vmatmul.f32.gmra.mxu0 %v2500
  %v3045 = vpop.f32.mrf.mxu0
  %v3046 = vadd.f32 %v3020, %v3045
  %3047 = vmatmul.f32.gmra.mxu0 %v2503
  %v3048 = vpop.f32.mrf.mxu0
  %v3049 = vadd.f32 %v3023, %v3048
  %3050 = vdwg.mxu0
  %3051 = vmatpush.msra.mxu0 %v2295
  %3052 = vmatpush.msra.mxu0 %v2286
  %3053 = vmatpush.msra.mxu0 %v2277
  %3054 = vmatpush.msra.mxu0 %v2268
  %3055 = vmatpush.msra.mxu0 %v2259
  %3056 = vmatpush.msra.mxu0 %v2250
  %3057 = vmatpush.msra.mxu0 %v2241
  %3058 = vmatpush.msra.mxu0 %v2232
  %3059 = vmatpush.msra.mxu0 %v2223
  %3060 = vmatpush.msra.mxu0 %v2214
  %3061 = vmatpush.msra.mxu0 %v2205
  %3062 = vmatpush.msra.mxu0 %v2196
  %3063 = vmatpush.msra.mxu0 %v2187
  %3064 = vmatpush.msra.mxu0 %v2178
  %3065 = vmatpush.msra.mxu0 %v2169
  %3066 = vmatpush.msra.mxu0 %v2160
  %3067 = vmatmul.f32.gmra.mxu0 %v2144
  %v3068 = vpop.f32.mrf.mxu0
  %v3069 = vadd.f32 %v2483, %v3068
  %3070 = vmatmul.f32.gmra.mxu0 %v2147
  %v3071 = vpop.f32.mrf.mxu0
  %v3072 = vadd.f32 %v2488, %v3071
  %3073 = vmatmul.f32.gmra.mxu0 %v2150
  %v3074 = vpop.f32.mrf.mxu0
  %v3075 = vadd.f32 %v2493, %v3074
  %3076 = vdwg.mxu0
  %3077 = vmatpush.msra.mxu0 %v2439
  %3078 = vmatpush.msra.mxu0 %v2430
  %3079 = vmatpush.msra.mxu0 %v2421
  %3080 = vmatpush.msra.mxu0 %v2412
  %3081 = vmatpush.msra.mxu0 %v2403
  %3082 = vmatpush.msra.mxu0 %v2394
  %3083 = vmatpush.msra.mxu0 %v2385
  %3084 = vmatpush.msra.mxu0 %v2376
  %3085 = vmatpush.msra.mxu0 %v2367
  %3086 = vmatpush.msra.mxu0 %v2358
  %3087 = vmatpush.msra.mxu0 %v2349
  %3088 = vmatpush.msra.mxu0 %v2340
  %3089 = vmatpush.msra.mxu0 %v2331
  %3090 = vmatpush.msra.mxu0 %v2322
  %3091 = vmatpush.msra.mxu0 %v2313
  %3092 = vmatpush.msra.mxu0 %v2304
  %3093 = vmatmul.f32.gmra.mxu0 %v2145
  %v3094 = vpop.f32.mrf.mxu0
  %v3095 = vadd.f32 %v3069, %v3094
  %3096 = vmatmul.f32.gmra.mxu0 %v2148
  %v3097 = vpop.f32.mrf.mxu0
  %v3098 = vadd.f32 %v3072, %v3097
  %3099 = vmatmul.f32.gmra.mxu0 %v2151
  %v3100 = vpop.f32.mrf.mxu0
  %v3101 = vadd.f32 %v3075, %v3100
  %3102 = vdwg.mxu0
  %3103 = vmatpush.msra.mxu0 0.0
  %3104 = vmatpush.msra.mxu0 0.0
  %3105 = vmatpush.msra.mxu0 0.0
  %3106 = vmatpush.msra.mxu0 0.0
  %3107 = vmatpush.msra.mxu0 0.0
  %3108 = vmatpush.msra.mxu0 0.0
  %3109 = vmatpush.msra.mxu0 0.0
  %3110 = vmatpush.msra.mxu0 0.0
  %3111 = vmatpush.msra.mxu0 0.0
  %3112 = vmatpush.msra.mxu0 0.0
  %3113 = vmatpush.msra.mxu0 0.0
  %3114 = vmatpush.msra.mxu0 0.0
  %3115 = vmatpush.msra.mxu0 %v2475
  %3116 = vmatpush.msra.mxu0 %v2466
  %3117 = vmatpush.msra.mxu0 %v2457
  %3118 = vmatpush.msra.mxu0 %v2448
  %3119 = vmatmul.f32.gmra.mxu0 %v2497
  %v3120 = vpop.f32.mrf.mxu0
  %v3121 = vadd.f32 %v3095, %v3120
  %3122 = vmatmul.f32.gmra.mxu0 %v2500
  %v3123 = vpop.f32.mrf.mxu0
  %v3124 = vadd.f32 %v3098, %v3123
  %3125 = vmatmul.f32.gmra.mxu0 %v2503
  %v3126 = vpop.f32.mrf.mxu0
  %v3127 = vadd.f32 %v3101, %v3126
  %3128 = vdwg.mxu0
  %3129 = vmatpush.msra.mxu0 %v2296
  %3130 = vmatpush.msra.mxu0 %v2287
  %3131 = vmatpush.msra.mxu0 %v2278
  %3132 = vmatpush.msra.mxu0 %v2269
  %3133 = vmatpush.msra.mxu0 %v2260
  %3134 = vmatpush.msra.mxu0 %v2251
  %3135 = vmatpush.msra.mxu0 %v2242
  %3136 = vmatpush.msra.mxu0 %v2233
  %3137 = vmatpush.msra.mxu0 %v2224
  %3138 = vmatpush.msra.mxu0 %v2215
  %3139 = vmatpush.msra.mxu0 %v2206
  %3140 = vmatpush.msra.mxu0 %v2197
  %3141 = vmatpush.msra.mxu0 %v2188
  %3142 = vmatpush.msra.mxu0 %v2179
  %3143 = vmatpush.msra.mxu0 %v2170
  %3144 = vmatpush.msra.mxu0 %v2161
  %3145 = vmatmul.f32.gmra.mxu0 %v2144
  %v3146 = vpop.f32.mrf.mxu0
  %v3147 = vadd.f32 %v2483, %v3146
  %3148 = vmatmul.f32.gmra.mxu0 %v2147
  %v3149 = vpop.f32.mrf.mxu0
  %v3150 = vadd.f32 %v2488, %v3149
  %3151 = vmatmul.f32.gmra.mxu0 %v2150
  %v3152 = vpop.f32.mrf.mxu0
  %v3153 = vadd.f32 %v2493, %v3152
  %3154 = vdwg.mxu0
  %3155 = vmatpush.msra.mxu0 %v2440
  %3156 = vmatpush.msra.mxu0 %v2431
  %3157 = vmatpush.msra.mxu0 %v2422
  %3158 = vmatpush.msra.mxu0 %v2413
  %3159 = vmatpush.msra.mxu0 %v2404
  %3160 = vmatpush.msra.mxu0 %v2395
  %3161 = vmatpush.msra.mxu0 %v2386
  %3162 = vmatpush.msra.mxu0 %v2377
  %3163 = vmatpush.msra.mxu0 %v2368
  %3164 = vmatpush.msra.mxu0 %v2359
  %3165 = vmatpush.msra.mxu0 %v2350
  %3166 = vmatpush.msra.mxu0 %v2341
  %3167 = vmatpush.msra.mxu0 %v2332
  %3168 = vmatpush.msra.mxu0 %v2323
  %3169 = vmatpush.msra.mxu0 %v2314
  %3170 = vmatpush.msra.mxu0 %v2305
  %3171 = vmatmul.f32.gmra.mxu0 %v2145
  %v3172 = vpop.f32.mrf.mxu0
  %v3173 = vadd.f32 %v3147, %v3172
  %3174 = vmatmul.f32.gmra.mxu0 %v2148
  %v3175 = vpop.f32.mrf.mxu0
  %v3176 = vadd.f32 %v3150, %v3175
  %3177 = vmatmul.f32.gmra.mxu0 %v2151
  %v3178 = vpop.f32.mrf.mxu0
  %v3179 = vadd.f32 %v3153, %v3178
  %3180 = vdwg.mxu0
  %3181 = vmatpush.msra.mxu0 0.0
  %3182 = vmatpush.msra.mxu0 0.0
  %3183 = vmatpush.msra.mxu0 0.0
  %3184 = vmatpush.msra.mxu0 0.0
  %3185 = vmatpush.msra.mxu0 0.0
  %3186 = vmatpush.msra.mxu0 0.0
  %3187 = vmatpush.msra.mxu0 0.0
  %3188 = vmatpush.msra.mxu0 0.0
  %3189 = vmatpush.msra.mxu0 0.0
  %3190 = vmatpush.msra.mxu0 0.0
  %3191 = vmatpush.msra.mxu0 0.0
  %3192 = vmatpush.msra.mxu0 0.0
  %3193 = vmatpush.msra.mxu0 %v2476
  %3194 = vmatpush.msra.mxu0 %v2467
  %3195 = vmatpush.msra.mxu0 %v2458
  %3196 = vmatpush.msra.mxu0 %v2449
  %3197 = vmatmul.f32.gmra.mxu0 %v2497
  %v3198 = vpop.f32.mrf.mxu0
  %v3199 = vadd.f32 %v3173, %v3198
  %3200 = vmatmul.f32.gmra.mxu0 %v2500
  %v3201 = vpop.f32.mrf.mxu0
  %v3202 = vadd.f32 %v3176, %v3201
  %3203 = vmatmul.f32.gmra.mxu0 %v2503
  %v3204 = vpop.f32.mrf.mxu0
  %v3205 = vadd.f32 %v3179, %v3204
  %3206 = vdwg.mxu0
  %v3207 = vmul.f32 %v2575, %v2575
  %v3208 = vmul.f32 %v2653, %v2653
  %v3209 = vmul.f32 %v2731, %v2731
  %v3210 = vmul.f32 %v2809, %v2809
  %v3211 = vmul.f32 %v2887, %v2887
  %v3212 = vmul.f32 %v2965, %v2965
  %v3213 = vmul.f32 %v3043, %v3043
  %v3214 = vmul.f32 %v3121, %v3121
  %v3215 = vmul.f32 %v3199, %v3199
  %v3216 = vmul.f32 %v2578, %v2578
  %v3217 = vmul.f32 %v2656, %v2656
  %v3218 = vmul.f32 %v2734, %v2734
  %v3219 = vmul.f32 %v2812, %v2812
  %v3220 = vmul.f32 %v2890, %v2890
  %v3221 = vmul.f32 %v2968, %v2968
  %v3222 = vmul.f32 %v3046, %v3046
  %v3223 = vmul.f32 %v3124, %v3124
  %v3224 = vmul.f32 %v3202, %v3202
  %v3225 = vmul.f32 %v2581, %v2581
  %v3226 = vmul.f32 %v2659, %v2659
  %v3227 = vmul.f32 %v2737, %v2737
  %v3228 = vmul.f32 %v2815, %v2815
  %v3229 = vmul.f32 %v2893, %v2893
  %v3230 = vmul.f32 %v2971, %v2971
  %v3231 = vmul.f32 %v3049, %v3049
  %v3232 = vmul.f32 %v3127, %v3127
  %v3233 = vmul.f32 %v3205, %v3205
  %v3234 = vld [vmem:[%s3] sm:$0xff]
  %v3235 = vld [vmem:[%s3 + $0x8] sm:$0xff]
  %v3236 = vld [vmem:[%s3 + $0x10] sm:$0xff]
  %v3237 = vld [vmem:[%s3 + $0x18] sm:$0xff]
  %v3238 = vld [vmem:[%s3 + $0x20] sm:$0xff]
  %v3239 = vld [vmem:[%s3 + $0x28] sm:$0xff]
  %v3240 = vld [vmem:[%s3 + $0x30] sm:$0xff]
  %v3241 = vld [vmem:[%s3 + $0x38] sm:$0xff]
  %v3242 = vld [vmem:[%s3 + $0x40] sm:$0xff]
  %v3243 = vld [vmem:[%s3 + $0x48] sm:$0xff]
  %v3244 = vld [vmem:[%s3 + $0x50] sm:$0xff]
  %v3245 = vld [vmem:[%s3 + $0x58] sm:$0xff]
  %v3246 = vld [vmem:[%s3 + $0x60] sm:$0xff]
  %v3247 = vld [vmem:[%s3 + $0x68] sm:$0xff]
  %v3248 = vld [vmem:[%s3 + $0x70] sm:$0xff]
  %v3249 = vld [vmem:[%s3 + $0x78] sm:$0xff]
  %v3250 = vld [vmem:[%s3 + $0x80] sm:$0xff]
  %v3251 = vld [vmem:[%s3 + $0x88] sm:$0xff]
  %v3252 = vld [vmem:[%s3 + $0x90] sm:$0xff]
  %v3253 = vld [vmem:[%s3 + $0x98] sm:$0xff]
  %v3254 = vld [vmem:[%s3 + $0xa0] sm:$0xff]
  %v3255 = vld [vmem:[%s3 + $0xa8] sm:$0xff]
  %v3256 = vld [vmem:[%s3 + $0xb0] sm:$0xff]
  %v3257 = vld [vmem:[%s3 + $0xb8] sm:$0xff]
  %v3258 = vld [vmem:[%s3 + $0xc0] sm:$0xff]
  %v3259 = vld [vmem:[%s3 + $0xc8] sm:$0xff]
  %v3260 = vld [vmem:[%s3 + $0xd0] sm:$0xff]
  %v3261 = vld [vmem:[%s3 + $0xd8] sm:$0xff]
  %v3262 = vld [vmem:[%s3 + $0xe0] sm:$0xff]
  %v3263 = vld [vmem:[%s3 + $0xe8] sm:$0xff]
  %v3264 = vld [vmem:[%s3 + $0xf0] sm:$0xff]
  %v3265 = vld [vmem:[%s3 + $0xf8] sm:$0xff]
  %v3266 = vld [vmem:[%s3 + $0x100] sm:$0xff]
  %v3267 = vld [vmem:[%s3 + $0x108] sm:$0xff]
  %v3268 = vld [vmem:[%s3 + $0x110] sm:$0xff]
  %v3269 = vld [vmem:[%s3 + $0x118] sm:$0xff]
  %v3270 = vld [vmem:[%s3 + $0x120] sm:$0xff]
  %v3271 = vld [vmem:[%s3 + $0x128] sm:$0xff]
  %v3272 = vld [vmem:[%s3 + $0x130] sm:$0xff]
  %v3273 = vld [vmem:[%s3 + $0x138] sm:$0xff]
  %v3274 = vld [vmem:[%s3 + $0x140] sm:$0xff]
  %v3275 = vld [vmem:[%s3 + $0x148] sm:$0xff]
  %v3276 = vld [vmem:[%s3 + $0x150] sm:$0xff]
  %v3277 = vld [vmem:[%s3 + $0x158] sm:$0xff]
  %v3278 = vld [vmem:[%s3 + $0x160] sm:$0xff]
  %v3279 = vld [vmem:[%s3 + $0x168] sm:$0xff]
  %v3280 = vld [vmem:[%s3 + $0x170] sm:$0xff]
  %v3281 = vld [vmem:[%s3 + $0x178] sm:$0xff]
  %v3282 = vld [vmem:[%s3 + $0x180] sm:$0xff]
  %v3283 = vld [vmem:[%s3 + $0x188] sm:$0xff]
  %v3284 = vld [vmem:[%s3 + $0x190] sm:$0xff]
  %v3285 = vld [vmem:[%s3 + $0x198] sm:$0xff]
  %v3286 = vld [vmem:[%s3 + $0x1a0] sm:$0xff]
  %v3287 = vld [vmem:[%s3 + $0x1a8] sm:$0xff]
  %v3288 = vld [vmem:[%s3 + $0x1b0] sm:$0xff]
  %v3289 = vld [vmem:[%s3 + $0x1b8] sm:$0xff]
  %v3290 = vld [vmem:[%s3 + $0x1c0] sm:$0xff]
  %v3291 = vld [vmem:[%s3 + $0x1c8] sm:$0xff]
  %v3292 = vld [vmem:[%s3 + $0x1d0] sm:$0xff]
  %v3293 = vld [vmem:[%s3 + $0x1d8] sm:$0xff]
  %v3294 = vld [vmem:[%s3 + $0x1e0] sm:$0xff]
  %v3295 = vld [vmem:[%s3 + $0x1e8] sm:$0xff]
  %v3296 = vld [vmem:[%s3 + $0x1f0] sm:$0xff]
  %v3297 = vld [vmem:[%s3 + $0x1f8] sm:$0xff]
  %v3298 = vld [vmem:[%s3 + $0x200] sm:$0xff]
  %v3299 = vld [vmem:[%s3 + $0x208] sm:$0xff]
  %v3300 = vld [vmem:[%s3 + $0x210] sm:$0xff]
  %v3301 = vld [vmem:[%s3 + $0x218] sm:$0xff]
  %v3302 = vld [vmem:[%s3 + $0x220] sm:$0xff]
  %v3303 = vld [vmem:[%s3 + $0x228] sm:$0xff]
  %v3304 = vld [vmem:[%s3 + $0x230] sm:$0xff]
  %v3305 = vld [vmem:[%s3 + $0x238] sm:$0xff]
  %v3306 = vld [vmem:[%s3 + $0x240] sm:$0xff]
  %v3307 = vld [vmem:[%s3 + $0x248] sm:$0xff]
  %v3308 = vld [vmem:[%s3 + $0x250] sm:$0xff]
  %v3309 = vld [vmem:[%s3 + $0x258] sm:$0xff]
  %v3310 = vld [vmem:[%s3 + $0x260] sm:$0xff]
  %v3311 = vld [vmem:[%s3 + $0x268] sm:$0xff]
  %v3312 = vld [vmem:[%s3 + $0x270] sm:$0xff]
  %v3313 = vld [vmem:[%s3 + $0x278] sm:$0xff]
  %v3314 = vld [vmem:[%s3 + $0x280] sm:$0xff]
  %v3315 = vld [vmem:[%s3 + $0x288] sm:$0xff]
  %v3316 = vld [vmem:[%s3 + $0x290] sm:$0xff]
  %v3317 = vld [vmem:[%s3 + $0x298] sm:$0xff]
  %v3318 = vld [vmem:[%s3 + $0x2a0] sm:$0xff]
  %v3319 = vld [vmem:[%s3 + $0x2a8] sm:$0xff]
  %v3320 = vld [vmem:[%s3 + $0x2b0] sm:$0xff]
  %v3321 = vld [vmem:[%s3 + $0x2b8] sm:$0xff]
  %v3322 = vld [vmem:[%s3 + $0x2c0] sm:$0xff]
  %v3323 = vld [vmem:[%s3 + $0x2c8] sm:$0xff]
  %v3324 = vld [vmem:[%s3 + $0x2d0] sm:$0xff]
  %v3325 = vld [vmem:[%s3 + $0x2d8] sm:$0xff]
  %v3326 = vld [vmem:[%s3 + $0x2e0] sm:$0xff]
  %v3327 = vld [vmem:[%s3 + $0x2e8] sm:$0xff]
  %v3328 = vld [vmem:[%s3 + $0x2f0] sm:$0xff]
  %v3329 = vld [vmem:[%s3 + $0x2f8] sm:$0xff]
  %v3330 = vld [vmem:[%s3 + $0x300] sm:$0xff]
  %v3331 = vld [vmem:[%s3 + $0x308] sm:$0xff]
  %v3332 = vld [vmem:[%s3 + $0x310] sm:$0xff]
  %v3333 = vld [vmem:[%s3 + $0x318] sm:$0xff]
  %v3334 = vld [vmem:[%s3 + $0x320] sm:$0xff]
  %v3335 = vld [vmem:[%s3 + $0x328] sm:$0xff]
  %v3336 = vld [vmem:[%s3 + $0x330] sm:$0xff]
  %v3337 = vld [vmem:[%s3 + $0x338] sm:$0xff]
  %v3338 = vld [vmem:[%s3 + $0x340] sm:$0xff]
  %v3339 = vld [vmem:[%s3 + $0x348] sm:$0xff]
  %v3340 = vld [vmem:[%s3 + $0x350] sm:$0xff]
  %v3341 = vld [vmem:[%s3 + $0x358] sm:$0xff]
  %v3342 = vld [vmem:[%s3 + $0x360] sm:$0xff]
  %v3343 = vld [vmem:[%s3 + $0x368] sm:$0xff]
  %v3344 = vld [vmem:[%s3 + $0x370] sm:$0xff]
  %v3345 = vld [vmem:[%s3 + $0x378] sm:$0xff]
  %v3346 = vld [vmem:[%s3 + $0x380] sm:$0xff]
  %v3347 = vld [vmem:[%s3 + $0x388] sm:$0xff]
  %v3348 = vld [vmem:[%s3 + $0x390] sm:$0xff]
  %v3349 = vld [vmem:[%s3 + $0x398] sm:$0xff]
  %v3350 = vld [vmem:[%s3 + $0x3a0] sm:$0xff]
  %v3351 = vld [vmem:[%s3 + $0x3a8] sm:$0xff]
  %v3352 = vld [vmem:[%s3 + $0x3b0] sm:$0xff]
  %v3353 = vld [vmem:[%s3 + $0x3b8] sm:$0xff]
  %v3354 = vld [vmem:[%s3 + $0x3c0] sm:$0xff]
  %v3355 = vld [vmem:[%s3 + $0x3c8] sm:$0xff]
  %v3356 = vld [vmem:[%s3 + $0x3d0] sm:$0xff]
  %v3357 = vld [vmem:[%s3 + $0x3d8] sm:$0xff]
  %v3358 = vld [vmem:[%s3 + $0x3e0] sm:$0xff]
  %v3359 = vld [vmem:[%s3 + $0x3e8] sm:$0xff]
  %v3360 = vld [vmem:[%s3 + $0x3f0] sm:$0xff]
  %v3361 = vld [vmem:[%s3 + $0x3f8] sm:$0xff]
  %v3362 = vld [vmem:[%s3 + $0x400] sm:$0xff]
  %v3363 = vld [vmem:[%s3 + $0x408] sm:$0xff]
  %v3364 = vld [vmem:[%s3 + $0x410] sm:$0xff]
  %v3365 = vld [vmem:[%s3 + $0x418] sm:$0xff]
  %v3366 = vld [vmem:[%s3 + $0x420] sm:$0xff]
  %v3367 = vld [vmem:[%s3 + $0x428] sm:$0xff]
  %v3368 = vld [vmem:[%s3 + $0x430] sm:$0xff]
  %v3369 = vld [vmem:[%s3 + $0x438] sm:$0xff]
  %v3370 = vld [vmem:[%s3 + $0x440] sm:$0xff]
  %v3371 = vld [vmem:[%s3 + $0x448] sm:$0xff]
  %v3372 = vld [vmem:[%s3 + $0x450] sm:$0xff]
  %v3373 = vld [vmem:[%s3 + $0x458] sm:$0xff]
  %v3374 = vld [vmem:[%s3 + $0x460] sm:$0xff]
  %v3375 = vld [vmem:[%s3 + $0x468] sm:$0x3]
  %v3377 = vsel %vm67, %v3215, 0
  %v3380 = vsel %vm67, %v3224, 0
  %v3383 = vsel %vm67, %v3233, 0
  %vm3385 = vcmask 1041408
  %v3387 = vsel %vm3385, %v3375, 0
  %3389 = vmatpush.msra.mxu0 %v3249
  %3390 = vmatpush.msra.mxu0 %v3248
  %3391 = vmatpush.msra.mxu0 %v3247
  %3392 = vmatpush.msra.mxu0 %v3246
  %3393 = vmatpush.msra.mxu0 %v3245
  %3394 = vmatpush.msra.mxu0 %v3244
  %3395 = vmatpush.msra.mxu0 %v3243
  %3396 = vmatpush.msra.mxu0 %v3242
  %3397 = vmatpush.msra.mxu0 %v3241
  %3398 = vmatpush.msra.mxu0 %v3240
  %3399 = vmatpush.msra.mxu0 %v3239
  %3400 = vmatpush.msra.mxu0 %v3238
  %3401 = vmatpush.msra.mxu0 %v3237
  %3402 = vmatpush.msra.mxu0 %v3236
  %3403 = vmatpush.msra.mxu0 %v3235
  %3404 = vmatpush.msra.mxu0 %v3234
  %3405 = vmatmul.f32.gmra.mxu0 %v3207
  %v3406 = vpop.f32.mrf.mxu0
  %v3407 = vadd.f32 0.0, %v3406
  %3408 = vmatmul.f32.gmra.mxu0 %v3216
  %v3409 = vpop.f32.mrf.mxu0
  %v3410 = vadd.f32 0.0, %v3409
  %3411 = vmatmul.f32.gmra.mxu0 %v3225
  %v3412 = vpop.f32.mrf.mxu0
  %v3413 = vadd.f32 0.0, %v3412
  %3414 = vdwg.mxu0
  %3415 = vmatpush.msra.mxu0 %v3265
  %3416 = vmatpush.msra.mxu0 %v3264
  %3417 = vmatpush.msra.mxu0 %v3263
  %3418 = vmatpush.msra.mxu0 %v3262
  %3419 = vmatpush.msra.mxu0 %v3261
  %3420 = vmatpush.msra.mxu0 %v3260
  %3421 = vmatpush.msra.mxu0 %v3259
  %3422 = vmatpush.msra.mxu0 %v3258
  %3423 = vmatpush.msra.mxu0 %v3257
  %3424 = vmatpush.msra.mxu0 %v3256
  %3425 = vmatpush.msra.mxu0 %v3255
  %3426 = vmatpush.msra.mxu0 %v3254
  %3427 = vmatpush.msra.mxu0 %v3253
  %3428 = vmatpush.msra.mxu0 %v3252
  %3429 = vmatpush.msra.mxu0 %v3251
  %3430 = vmatpush.msra.mxu0 %v3250
  %3431 = vmatmul.f32.gmra.mxu0 %v3208
  %v3432 = vpop.f32.mrf.mxu0
  %v3433 = vadd.f32 %v3407, %v3432
  %3434 = vmatmul.f32.gmra.mxu0 %v3217
  %v3435 = vpop.f32.mrf.mxu0
  %v3436 = vadd.f32 %v3410, %v3435
  %3437 = vmatmul.f32.gmra.mxu0 %v3226
  %v3438 = vpop.f32.mrf.mxu0
  %v3439 = vadd.f32 %v3413, %v3438
  %3440 = vdwg.mxu0
  %3441 = vmatpush.msra.mxu0 %v3281
  %3442 = vmatpush.msra.mxu0 %v3280
  %3443 = vmatpush.msra.mxu0 %v3279
  %3444 = vmatpush.msra.mxu0 %v3278
  %3445 = vmatpush.msra.mxu0 %v3277
  %3446 = vmatpush.msra.mxu0 %v3276
  %3447 = vmatpush.msra.mxu0 %v3275
  %3448 = vmatpush.msra.mxu0 %v3274
  %3449 = vmatpush.msra.mxu0 %v3273
  %3450 = vmatpush.msra.mxu0 %v3272
  %3451 = vmatpush.msra.mxu0 %v3271
  %3452 = vmatpush.msra.mxu0 %v3270
  %3453 = vmatpush.msra.mxu0 %v3269
  %3454 = vmatpush.msra.mxu0 %v3268
  %3455 = vmatpush.msra.mxu0 %v3267
  %3456 = vmatpush.msra.mxu0 %v3266
  %3457 = vmatmul.f32.gmra.mxu0 %v3209
  %v3458 = vpop.f32.mrf.mxu0
  %v3459 = vadd.f32 %v3433, %v3458
  %3460 = vmatmul.f32.gmra.mxu0 %v3218
  %v3461 = vpop.f32.mrf.mxu0
  %v3462 = vadd.f32 %v3436, %v3461
  %3463 = vmatmul.f32.gmra.mxu0 %v3227
  %v3464 = vpop.f32.mrf.mxu0
  %v3465 = vadd.f32 %v3439, %v3464
  %3466 = vdwg.mxu0
  %3467 = vmatpush.msra.mxu0 %v3297
  %3468 = vmatpush.msra.mxu0 %v3296
  %3469 = vmatpush.msra.mxu0 %v3295
  %3470 = vmatpush.msra.mxu0 %v3294
  %3471 = vmatpush.msra.mxu0 %v3293
  %3472 = vmatpush.msra.mxu0 %v3292
  %3473 = vmatpush.msra.mxu0 %v3291
  %3474 = vmatpush.msra.mxu0 %v3290
  %3475 = vmatpush.msra.mxu0 %v3289
  %3476 = vmatpush.msra.mxu0 %v3288
  %3477 = vmatpush.msra.mxu0 %v3287
  %3478 = vmatpush.msra.mxu0 %v3286
  %3479 = vmatpush.msra.mxu0 %v3285
  %3480 = vmatpush.msra.mxu0 %v3284
  %3481 = vmatpush.msra.mxu0 %v3283
  %3482 = vmatpush.msra.mxu0 %v3282
  %3483 = vmatmul.f32.gmra.mxu0 %v3210
  %v3484 = vpop.f32.mrf.mxu0
  %v3485 = vadd.f32 %v3459, %v3484
  %3486 = vmatmul.f32.gmra.mxu0 %v3219
  %v3487 = vpop.f32.mrf.mxu0
  %v3488 = vadd.f32 %v3462, %v3487
  %3489 = vmatmul.f32.gmra.mxu0 %v3228
  %v3490 = vpop.f32.mrf.mxu0
  %v3491 = vadd.f32 %v3465, %v3490
  %3492 = vdwg.mxu0
  %3493 = vmatpush.msra.mxu0 %v3313
  %3494 = vmatpush.msra.mxu0 %v3312
  %3495 = vmatpush.msra.mxu0 %v3311
  %3496 = vmatpush.msra.mxu0 %v3310
  %3497 = vmatpush.msra.mxu0 %v3309
  %3498 = vmatpush.msra.mxu0 %v3308
  %3499 = vmatpush.msra.mxu0 %v3307
  %3500 = vmatpush.msra.mxu0 %v3306
  %3501 = vmatpush.msra.mxu0 %v3305
  %3502 = vmatpush.msra.mxu0 %v3304
  %3503 = vmatpush.msra.mxu0 %v3303
  %3504 = vmatpush.msra.mxu0 %v3302
  %3505 = vmatpush.msra.mxu0 %v3301
  %3506 = vmatpush.msra.mxu0 %v3300
  %3507 = vmatpush.msra.mxu0 %v3299
  %3508 = vmatpush.msra.mxu0 %v3298
  %3509 = vmatmul.f32.gmra.mxu0 %v3211
  %v3510 = vpop.f32.mrf.mxu0
  %v3511 = vadd.f32 %v3485, %v3510
  %3512 = vmatmul.f32.gmra.mxu0 %v3220
  %v3513 = vpop.f32.mrf.mxu0
  %v3514 = vadd.f32 %v3488, %v3513
  %3515 = vmatmul.f32.gmra.mxu0 %v3229
  %v3516 = vpop.f32.mrf.mxu0
  %v3517 = vadd.f32 %v3491, %v3516
  %3518 = vdwg.mxu0
  %3519 = vmatpush.msra.mxu0 %v3329
  %3520 = vmatpush.msra.mxu0 %v3328
  %3521 = vmatpush.msra.mxu0 %v3327
  %3522 = vmatpush.msra.mxu0 %v3326
  %3523 = vmatpush.msra.mxu0 %v3325
  %3524 = vmatpush.msra.mxu0 %v3324
  %3525 = vmatpush.msra.mxu0 %v3323
  %3526 = vmatpush.msra.mxu0 %v3322
  %3527 = vmatpush.msra.mxu0 %v3321
  %3528 = vmatpush.msra.mxu0 %v3320
  %3529 = vmatpush.msra.mxu0 %v3319
  %3530 = vmatpush.msra.mxu0 %v3318
  %3531 = vmatpush.msra.mxu0 %v3317
  %3532 = vmatpush.msra.mxu0 %v3316
  %3533 = vmatpush.msra.mxu0 %v3315
  %3534 = vmatpush.msra.mxu0 %v3314
  %3535 = vmatmul.f32.gmra.mxu0 %v3212
  %v3536 = vpop.f32.mrf.mxu0
  %v3537 = vadd.f32 %v3511, %v3536
  %3538 = vmatmul.f32.gmra.mxu0 %v3221
  %v3539 = vpop.f32.mrf.mxu0
  %v3540 = vadd.f32 %v3514, %v3539
  %3541 = vmatmul.f32.gmra.mxu0 %v3230
  %v3542 = vpop.f32.mrf.mxu0
  %v3543 = vadd.f32 %v3517, %v3542
  %3544 = vdwg.mxu0
  %3545 = vmatpush.msra.mxu0 %v3345
  %3546 = vmatpush.msra.mxu0 %v3344
  %3547 = vmatpush.msra.mxu0 %v3343
  %3548 = vmatpush.msra.mxu0 %v3342
  %3549 = vmatpush.msra.mxu0 %v3341
  %3550 = vmatpush.msra.mxu0 %v3340
  %3551 = vmatpush.msra.mxu0 %v3339
  %3552 = vmatpush.msra.mxu0 %v3338
  %3553 = vmatpush.msra.mxu0 %v3337
  %3554 = vmatpush.msra.mxu0 %v3336
  %3555 = vmatpush.msra.mxu0 %v3335
  %3556 = vmatpush.msra.mxu0 %v3334
  %3557 = vmatpush.msra.mxu0 %v3333
  %3558 = vmatpush.msra.mxu0 %v3332
  %3559 = vmatpush.msra.mxu0 %v3331
  %3560 = vmatpush.msra.mxu0 %v3330
  %3561 = vmatmul.f32.gmra.mxu0 %v3213
  %v3562 = vpop.f32.mrf.mxu0
  %v3563 = vadd.f32 %v3537, %v3562
  %3564 = vmatmul.f32.gmra.mxu0 %v3222
  %v3565 = vpop.f32.mrf.mxu0
  %v3566 = vadd.f32 %v3540, %v3565
  %3567 = vmatmul.f32.gmra.mxu0 %v3231
  %v3568 = vpop.f32.mrf.mxu0
  %v3569 = vadd.f32 %v3543, %v3568
  %3570 = vdwg.mxu0
  %3571 = vmatpush.msra.mxu0 %v3361
  %3572 = vmatpush.msra.mxu0 %v3360
  %3573 = vmatpush.msra.mxu0 %v3359
  %3574 = vmatpush.msra.mxu0 %v3358
  %3575 = vmatpush.msra.mxu0 %v3357
  %3576 = vmatpush.msra.mxu0 %v3356
  %3577 = vmatpush.msra.mxu0 %v3355
  %3578 = vmatpush.msra.mxu0 %v3354
  %3579 = vmatpush.msra.mxu0 %v3353
  %3580 = vmatpush.msra.mxu0 %v3352
  %3581 = vmatpush.msra.mxu0 %v3351
  %3582 = vmatpush.msra.mxu0 %v3350
  %3583 = vmatpush.msra.mxu0 %v3349
  %3584 = vmatpush.msra.mxu0 %v3348
  %3585 = vmatpush.msra.mxu0 %v3347
  %3586 = vmatpush.msra.mxu0 %v3346
  %3587 = vmatmul.f32.gmra.mxu0 %v3214
  %v3588 = vpop.f32.mrf.mxu0
  %v3589 = vadd.f32 %v3563, %v3588
  %3590 = vmatmul.f32.gmra.mxu0 %v3223
  %v3591 = vpop.f32.mrf.mxu0
  %v3592 = vadd.f32 %v3566, %v3591
  %3593 = vmatmul.f32.gmra.mxu0 %v3232
  %v3594 = vpop.f32.mrf.mxu0
  %v3595 = vadd.f32 %v3569, %v3594
  %3596 = vdwg.mxu0
  %3597 = vmatpush.msra.mxu0 0.0
  %3598 = vmatpush.msra.mxu0 0.0
  %3599 = vmatpush.msra.mxu0 %v3387
  %3600 = vmatpush.msra.mxu0 %v3374
  %3601 = vmatpush.msra.mxu0 %v3373
  %3602 = vmatpush.msra.mxu0 %v3372
  %3603 = vmatpush.msra.mxu0 %v3371
  %3604 = vmatpush.msra.mxu0 %v3370
  %3605 = vmatpush.msra.mxu0 %v3369
  %3606 = vmatpush.msra.mxu0 %v3368
  %3607 = vmatpush.msra.mxu0 %v3367
  %3608 = vmatpush.msra.mxu0 %v3366
  %3609 = vmatpush.msra.mxu0 %v3365
  %3610 = vmatpush.msra.mxu0 %v3364
  %3611 = vmatpush.msra.mxu0 %v3363
  %3612 = vmatpush.msra.mxu0 %v3362
  %3613 = vmatmul.f32.gmra.mxu0 %v3377
  %v3614 = vpop.f32.mrf.mxu0
  %v3615 = vadd.f32 %v3589, %v3614
  %3616 = vmatmul.f32.gmra.mxu0 %v3380
  %v3617 = vpop.f32.mrf.mxu0
  %v3618 = vadd.f32 %v3592, %v3617
  %3619 = vmatmul.f32.gmra.mxu0 %v3383
  %v3620 = vpop.f32.mrf.mxu0
  %v3621 = vadd.f32 %v3595, %v3620
  %3622 = vdwg.mxu0
  %v3623 = vlog2.pop %v3615
  %v3624 = vmul.f32 %v3623, 0.6931472
  %v3625 = vlog2.pop %v3618
  %v3626 = vmul.f32 %v3625, 0.6931472
  %v3627 = vlog2.pop %v3621
  %v3628 = vmul.f32 %v3627, 0.6931472
  %v3629 = vld [vmem:[%s4] sm:$0xff]
  %v3630 = vld [vmem:[%s4 + $0x8] sm:$0xff]
  %v3631 = vld [vmem:[%s4 + $0x10] sm:$0xff]
  %v3632 = vld [vmem:[%s4 + $0x18] sm:$0xff]
  %v3633 = vld [vmem:[%s4 + $0x20] sm:$0xff]
  %v3634 = vld [vmem:[%s4 + $0x28] sm:$0xff]
  %v3635 = vld [vmem:[%s4 + $0x30] sm:$0xff]
  %v3636 = vld [vmem:[%s4 + $0x38] sm:$0xff]
  %v3637 = vld [vmem:[%s4 + $0x40] sm:$0xff]
  %v3638 = vld [vmem:[%s4 + $0x48] sm:$0xff]
  %v3639 = vld [vmem:[%s4 + $0x50] sm:$0xff]
  %v3640 = vld [vmem:[%s4 + $0x58] sm:$0xff]
  %v3641 = vld [vmem:[%s4 + $0x60] sm:$0xff]
  %v3642 = vld [vmem:[%s4 + $0x68] sm:$0xff]
  %v3643 = vld [vmem:[%s4 + $0x70] sm:$0xff]
  %v3644 = vld [vmem:[%s4 + $0x78] sm:$0xff]
  %v3645 = vld [vmem:[%s4 + $0x80] sm:$0xff]
  %v3646 = vld [vmem:[%s4 + $0x88] sm:$0xff]
  %v3647 = vld [vmem:[%s4 + $0x90] sm:$0xff]
  %v3648 = vld [vmem:[%s4 + $0x98] sm:$0xff]
  %v3649 = vld [vmem:[%s4 + $0xa0] sm:$0xff]
  %vm3650 = vcmask 162816
  %v3652 = vsel %vm3650, %v3629, 0
  %v3655 = vsel %vm3650, %v3630, 0
  %v3658 = vsel %vm3650, %v3631, 0
  %v3661 = vsel %vm3650, %v3632, 0
  %v3664 = vsel %vm3650, %v3633, 0
  %v3667 = vsel %vm3650, %v3634, 0
  %v3670 = vsel %vm3650, %v3635, 0
  %v3673 = vsel %vm3650, %v3636, 0
  %v3676 = vsel %vm3650, %v3637, 0
  %v3679 = vsel %vm3650, %v3638, 0
  %v3682 = vsel %vm3650, %v3639, 0
  %v3685 = vsel %vm3650, %v3640, 0
  %v3688 = vsel %vm3650, %v3641, 0
  %v3691 = vsel %vm3650, %v3642, 0
  %v3694 = vsel %vm3650, %v3643, 0
  %v3697 = vsel %vm3650, %v3644, 0
  %v3700 = vsel %vm3650, %v3645, 0
  %v3703 = vsel %vm3650, %v3646, 0
  %v3706 = vsel %vm3650, %v3647, 0
  %v3709 = vsel %vm3650, %v3648, 0
  %v3712 = vsel %vm3650, %v3649, 0
  %vm3714 = vcmask 1043456
  %v3716 = vsel %vm3714, %v3628, 0
  %3718 = vmatpush.msra.mxu0 0.0
  %3719 = vmatpush.msra.mxu0 0.0
  %3720 = vmatpush.msra.mxu0 0.0
  %3721 = vmatpush.msra.mxu0 0.0
  %3722 = vmatpush.msra.mxu0 0.0
  %3723 = vmatpush.msra.mxu0 0.0
  %3724 = vmatpush.msra.mxu0 0.0
  %3725 = vmatpush.msra.mxu0 0.0
  %3726 = vmatpush.msra.mxu0 0.0
  %3727 = vmatpush.msra.mxu0 0.0
  %3728 = vmatpush.msra.mxu0 0.0
  %3729 = vmatpush.msra.mxu0 0.0
  %3730 = vmatpush.msra.mxu0 0.0
  %3731 = vmatpush.msra.mxu0 %v3716
  %3732 = vmatpush.msra.mxu0 %v3626
  %3733 = vmatpush.msra.mxu0 %v3624
  %3734 = vmatmul.f32.gmra.mxu0 %v3652
  %v3735 = vpop.f32.mrf.mxu0
  %v3736 = vadd.f32 0.0, %v3735
  %3737 = vmatmul.f32.gmra.mxu0 %v3655
  %v3738 = vpop.f32.mrf.mxu0
  %v3739 = vadd.f32 0.0, %v3738
  %3740 = vmatmul.f32.gmra.mxu0 %v3658
  %v3741 = vpop.f32.mrf.mxu0
  %v3742 = vadd.f32 0.0, %v3741
  %3743 = vmatmul.f32.gmra.mxu0 %v3661
  %v3744 = vpop.f32.mrf.mxu0
  %v3745 = vadd.f32 0.0, %v3744
  %3746 = vmatmul.f32.gmra.mxu0 %v3664
  %v3747 = vpop.f32.mrf.mxu0
  %v3748 = vadd.f32 0.0, %v3747
  %3749 = vmatmul.f32.gmra.mxu0 %v3667
  %v3750 = vpop.f32.mrf.mxu0
  %v3751 = vadd.f32 0.0, %v3750
  %3752 = vmatmul.f32.gmra.mxu0 %v3670
  %v3753 = vpop.f32.mrf.mxu0
  %v3754 = vadd.f32 0.0, %v3753
  %3755 = vmatmul.f32.gmra.mxu0 %v3673
  %v3756 = vpop.f32.mrf.mxu0
  %v3757 = vadd.f32 0.0, %v3756
  %3758 = vmatmul.f32.gmra.mxu0 %v3676
  %v3759 = vpop.f32.mrf.mxu0
  %v3760 = vadd.f32 0.0, %v3759
  %3761 = vmatmul.f32.gmra.mxu0 %v3679
  %v3762 = vpop.f32.mrf.mxu0
  %v3763 = vadd.f32 0.0, %v3762
  %3764 = vmatmul.f32.gmra.mxu0 %v3682
  %v3765 = vpop.f32.mrf.mxu0
  %v3766 = vadd.f32 0.0, %v3765
  %3767 = vmatmul.f32.gmra.mxu0 %v3685
  %v3768 = vpop.f32.mrf.mxu0
  %v3769 = vadd.f32 0.0, %v3768
  %3770 = vmatmul.f32.gmra.mxu0 %v3688
  %v3771 = vpop.f32.mrf.mxu0
  %v3772 = vadd.f32 0.0, %v3771
  %3773 = vmatmul.f32.gmra.mxu0 %v3691
  %v3774 = vpop.f32.mrf.mxu0
  %v3775 = vadd.f32 0.0, %v3774
  %3776 = vmatmul.f32.gmra.mxu0 %v3694
  %v3777 = vpop.f32.mrf.mxu0
  %v3778 = vadd.f32 0.0, %v3777
  %3779 = vmatmul.f32.gmra.mxu0 %v3697
  %v3780 = vpop.f32.mrf.mxu0
  %v3781 = vadd.f32 0.0, %v3780
  %3782 = vmatmul.f32.gmra.mxu0 %v3700
  %v3783 = vpop.f32.mrf.mxu0
  %v3784 = vadd.f32 0.0, %v3783
  %3785 = vmatmul.f32.gmra.mxu0 %v3703
  %v3786 = vpop.f32.mrf.mxu0
  %v3787 = vadd.f32 0.0, %v3786
  %3788 = vmatmul.f32.gmra.mxu0 %v3706
  %v3789 = vpop.f32.mrf.mxu0
  %v3790 = vadd.f32 0.0, %v3789
  %3791 = vmatmul.f32.gmra.mxu0 %v3709
  %v3792 = vpop.f32.mrf.mxu0
  %v3793 = vadd.f32 0.0, %v3792
  %3794 = vmatmul.f32.gmra.mxu0 %v3712
  %v3795 = vpop.f32.mrf.mxu0
  %v3796 = vadd.f32 0.0, %v3795
  %3797 = vdwg.mxu0
  %v3798 = vld [vmem:[%s5] sm:$0xff]
  %v3799 = vld [vmem:[%s5 + $0x8] sm:$0xff]
  %v3800 = vld [vmem:[%s5 + $0x10] sm:$0xff]
  %v3801 = vld [vmem:[%s5 + $0x18] sm:$0xff]
  %v3802 = vld [vmem:[%s5 + $0x20] sm:$0xff]
  %v3803 = vld [vmem:[%s5 + $0x28] sm:$0xff]
  %v3804 = vld [vmem:[%s5 + $0x30] sm:$0xff]
  %v3805 = vld [vmem:[%s5 + $0x38] sm:$0xff]
  %v3806 = vld [vmem:[%s5 + $0x40] sm:$0xff]
  %v3807 = vld [vmem:[%s5 + $0x48] sm:$0xff]
  %v3808 = vld [vmem:[%s5 + $0x50] sm:$0xff]
  %v3809 = vld [vmem:[%s5 + $0x58] sm:$0xff]
  %v3810 = vld [vmem:[%s5 + $0x60] sm:$0xff]
  %v3811 = vld [vmem:[%s5 + $0x68] sm:$0xff]
  %v3812 = vld [vmem:[%s5 + $0x70] sm:$0xff]
  %v3813 = vld [vmem:[%s5 + $0x78] sm:$0xff]
  %v3814 = vld [vmem:[%s5 + $0x80] sm:$0xff]
  %v3815 = vld [vmem:[%s5 + $0x88] sm:$0xff]
  %v3816 = vld [vmem:[%s5 + $0x90] sm:$0xff]
  %v3817 = vld [vmem:[%s5 + $0x98] sm:$0xff]
  %v3818 = vld [vmem:[%s5 + $0xa0] sm:$0xff]
  %v3819 = vmul.f32 %v3736, %v3798
  %v3820 = vmul.f32 %v3739, %v3799
  %v3821 = vmul.f32 %v3742, %v3800
  %v3822 = vmul.f32 %v3745, %v3801
  %v3823 = vmul.f32 %v3748, %v3802
  %v3824 = vmul.f32 %v3751, %v3803
  %v3825 = vmul.f32 %v3754, %v3804
  %v3826 = vmul.f32 %v3757, %v3805
  %v3827 = vmul.f32 %v3760, %v3806
  %v3828 = vmul.f32 %v3763, %v3807
  %v3829 = vmul.f32 %v3766, %v3808
  %v3830 = vmul.f32 %v3769, %v3809
  %v3831 = vmul.f32 %v3772, %v3810
  %v3832 = vmul.f32 %v3775, %v3811
  %v3833 = vmul.f32 %v3778, %v3812
  %v3834 = vmul.f32 %v3781, %v3813
  %v3835 = vmul.f32 %v3784, %v3814
  %v3836 = vmul.f32 %v3787, %v3815
  %v3837 = vmul.f32 %v3790, %v3816
  %v3838 = vmul.f32 %v3793, %v3817
  %v3839 = vmul.f32 %v3796, %v3818
  %v3840 = vld [vmem:[%s6] sm:$0xff]
  %v3841 = vld [vmem:[%s6 + $0x8] sm:$0xff]
  %v3842 = vld [vmem:[%s6 + $0x10] sm:$0xff]
  %v3843 = vld [vmem:[%s6 + $0x18] sm:$0xff]
  %v3844 = vld [vmem:[%s6 + $0x20] sm:$0xff]
  %v3845 = vld [vmem:[%s6 + $0x28] sm:$0xff]
  %v3846 = vld [vmem:[%s6 + $0x30] sm:$0xff]
  %v3847 = vld [vmem:[%s6 + $0x38] sm:$0xff]
  %v3848 = vld [vmem:[%s6 + $0x40] sm:$0xff]
  %v3849 = vld [vmem:[%s6 + $0x48] sm:$0xff]
  %v3850 = vld [vmem:[%s6 + $0x50] sm:$0xf]
  %vm3851 = vcmask 687104
  %v3853 = vsel %vm3851, %v3819, 0
  %v3856 = vsel %vm3851, %v3820, 0
  %v3859 = vsel %vm3851, %v3821, 0
  %v3862 = vsel %vm3851, %v3822, 0
  %v3865 = vsel %vm3851, %v3823, 0
  %v3868 = vsel %vm3851, %v3824, 0
  %v3871 = vsel %vm3851, %v3825, 0
  %v3874 = vsel %vm3851, %v3826, 0
  %v3877 = vsel %vm3851, %v3827, 0
  %v3880 = vsel %vm3851, %v3828, 0
  %v3883 = vsel %vm3851, %v3829, 0
  %v3886 = vsel %vm3851, %v3830, 0
  %v3889 = vsel %vm3851, %v3831, 0
  %v3892 = vsel %vm3851, %v3832, 0
  %v3895 = vsel %vm3851, %v3833, 0
  %v3898 = vsel %vm3851, %v3834, 0
  %v3901 = vsel %vm3851, %v3835, 0
  %v3904 = vsel %vm3851, %v3836, 0
  %v3907 = vsel %vm3851, %v3837, 0
  %v3910 = vsel %vm3851, %v3838, 0
  %v3913 = vsel %vm3851, %v3839, 0
  %v3916 = vsel %vm3714, %v3850, 0
  %3918 = vmatpush.msra.mxu0 0.0
  %3919 = vmatpush.msra.mxu0 0.0
  %3920 = vmatpush.msra.mxu0 0.0
  %3921 = vmatpush.msra.mxu0 0.0
  %3922 = vmatpush.msra.mxu0 0.0
  %3923 = vmatpush.msra.mxu0 %v3916
  %3924 = vmatpush.msra.mxu0 %v3849
  %3925 = vmatpush.msra.mxu0 %v3848
  %3926 = vmatpush.msra.mxu0 %v3847
  %3927 = vmatpush.msra.mxu0 %v3846
  %3928 = vmatpush.msra.mxu0 %v3845
  %3929 = vmatpush.msra.mxu0 %v3844
  %3930 = vmatpush.msra.mxu0 %v3843
  %3931 = vmatpush.msra.mxu0 %v3842
  %3932 = vmatpush.msra.mxu0 %v3841
  %3933 = vmatpush.msra.mxu0 %v3840
  %3934 = vmatmul.f32.gmra.mxu0 %v3853
  %v3935 = vpop.f32.mrf.mxu0
  %v3936 = vadd.f32 0.0, %v3935
  %3937 = vmatmul.f32.gmra.mxu0 %v3856
  %v3938 = vpop.f32.mrf.mxu0
  %v3939 = vadd.f32 0.0, %v3938
  %3940 = vmatmul.f32.gmra.mxu0 %v3859
  %v3941 = vpop.f32.mrf.mxu0
  %v3942 = vadd.f32 0.0, %v3941
  %3943 = vmatmul.f32.gmra.mxu0 %v3862
  %v3944 = vpop.f32.mrf.mxu0
  %v3945 = vadd.f32 0.0, %v3944
  %3946 = vmatmul.f32.gmra.mxu0 %v3865
  %v3947 = vpop.f32.mrf.mxu0
  %v3948 = vadd.f32 0.0, %v3947
  %3949 = vmatmul.f32.gmra.mxu0 %v3868
  %v3950 = vpop.f32.mrf.mxu0
  %v3951 = vadd.f32 0.0, %v3950
  %3952 = vmatmul.f32.gmra.mxu0 %v3871
  %v3953 = vpop.f32.mrf.mxu0
  %v3954 = vadd.f32 0.0, %v3953
  %3955 = vmatmul.f32.gmra.mxu0 %v3874
  %v3956 = vpop.f32.mrf.mxu0
  %v3957 = vadd.f32 0.0, %v3956
  %3958 = vmatmul.f32.gmra.mxu0 %v3877
  %v3959 = vpop.f32.mrf.mxu0
  %v3960 = vadd.f32 0.0, %v3959
  %3961 = vmatmul.f32.gmra.mxu0 %v3880
  %v3962 = vpop.f32.mrf.mxu0
  %v3963 = vadd.f32 0.0, %v3962
  %3964 = vmatmul.f32.gmra.mxu0 %v3883
  %v3965 = vpop.f32.mrf.mxu0
  %v3966 = vadd.f32 0.0, %v3965
  %3967 = vmatmul.f32.gmra.mxu0 %v3886
  %v3968 = vpop.f32.mrf.mxu0
  %v3969 = vadd.f32 0.0, %v3968
  %3970 = vmatmul.f32.gmra.mxu0 %v3889
  %v3971 = vpop.f32.mrf.mxu0
  %v3972 = vadd.f32 0.0, %v3971
  %3973 = vmatmul.f32.gmra.mxu0 %v3892
  %v3974 = vpop.f32.mrf.mxu0
  %v3975 = vadd.f32 0.0, %v3974
  %3976 = vmatmul.f32.gmra.mxu0 %v3895
  %v3977 = vpop.f32.mrf.mxu0
  %v3978 = vadd.f32 0.0, %v3977
  %3979 = vmatmul.f32.gmra.mxu0 %v3898
  %v3980 = vpop.f32.mrf.mxu0
  %v3981 = vadd.f32 0.0, %v3980
  %3982 = vmatmul.f32.gmra.mxu0 %v3901
  %v3983 = vpop.f32.mrf.mxu0
  %v3984 = vadd.f32 0.0, %v3983
  %3985 = vmatmul.f32.gmra.mxu0 %v3904
  %v3986 = vpop.f32.mrf.mxu0
  %v3987 = vadd.f32 0.0, %v3986
  %3988 = vmatmul.f32.gmra.mxu0 %v3907
  %v3989 = vpop.f32.mrf.mxu0
  %v3990 = vadd.f32 0.0, %v3989
  %3991 = vmatmul.f32.gmra.mxu0 %v3910
  %v3992 = vpop.f32.mrf.mxu0
  %v3993 = vadd.f32 0.0, %v3992
  %3994 = vmatmul.f32.gmra.mxu0 %v3913
  %v3995 = vpop.f32.mrf.mxu0
  %v3996 = vadd.f32 0.0, %v3995
  %3997 = vdwg.mxu0
  %v3998 = vld [vmem:[%s7] sm:$0xff]
  %v3999 = vld [vmem:[%s8] sm:$0xf]
  %4001 = vset.pattern.permute.xlu0 0
  %4002 = vperm.xlu0 %4001, %v3999
  %v4003 = vpop.permute.xlu0 %4002
  %4006 = vst [vmem:[#allocation1] ss:$2 sm:$0xff] %v3998
  %v4007 = vld.sshfl [vmem:[#allocation1] sm:$0xff pattern:$0x75316420]
  %v4008 = vld.sshfl [vmem:[#allocation1 + $0x8] sm:$0xff pattern:$0x75316420]
  %vm4010 = vcmask 326656
  %v4011 = vsel %vm4010, %v4008, 0
  %4013 = vmatpush.msra.mxu0 %v3981
  %4014 = vmatpush.msra.mxu0 %v3978
  %4015 = vmatpush.msra.mxu0 %v3975
  %4016 = vmatpush.msra.mxu0 %v3972
  %4017 = vmatpush.msra.mxu0 %v3969
  %4018 = vmatpush.msra.mxu0 %v3966
  %4019 = vmatpush.msra.mxu0 %v3963
  %4020 = vmatpush.msra.mxu0 %v3960
  %4021 = vmatpush.msra.mxu0 %v3957
  %4022 = vmatpush.msra.mxu0 %v3954
  %4023 = vmatpush.msra.mxu0 %v3951
  %4024 = vmatpush.msra.mxu0 %v3948
  %4025 = vmatpush.msra.mxu0 %v3945
  %4026 = vmatpush.msra.mxu0 %v3942
  %4027 = vmatpush.msra.mxu0 %v3939
  %4028 = vmatpush.msra.mxu0 %v3936
  %4029 = vmatmul.f32.gmra.mxu0 %v4007
  %v4030 = vpop.f32.mrf.mxu0
  %v4031 = vadd.f32 %v4003, %v4030
  %4032 = vdwg.mxu0
  %4033 = vmatpush.msra.mxu0 0.0
  %4034 = vmatpush.msra.mxu0 0.0
  %4035 = vmatpush.msra.mxu0 0.0
  %4036 = vmatpush.msra.mxu0 0.0
  %4037 = vmatpush.msra.mxu0 0.0
  %4038 = vmatpush.msra.mxu0 0.0
  %4039 = vmatpush.msra.mxu0 0.0
  %4040 = vmatpush.msra.mxu0 0.0
  %4041 = vmatpush.msra.mxu0 0.0
  %4042 = vmatpush.msra.mxu0 0.0
  %4043 = vmatpush.msra.mxu0 0.0
  %4044 = vmatpush.msra.mxu0 %v3996
  %4045 = vmatpush.msra.mxu0 %v3993
  %4046 = vmatpush.msra.mxu0 %v3990
  %4047 = vmatpush.msra.mxu0 %v3987
  %4048 = vmatpush.msra.mxu0 %v3984
  %4049 = vmatmul.f32.gmra.mxu0 %v4011
  %v4050 = vpop.f32.mrf.mxu0
  %v4051 = vadd.f32 %v4031, %v4050
  %4052 = vdwg.mxu0
  %vm4053 = vcmask 11264
  %4054 = vst.msk [vmem:[%s9] sm:$0xf] %vm4053, %v4051
  // Predicated region
  $region38: #{sccnet_forward.1} parent=0 // pred_check
    _
  $region39: #{sccnet_forward.1} parent=0 // pred_check_branch
    %4056 = sbr.rel (0) target = $region41
  $region40: #{sccnet_forward.1} parent=0 // pred_region
    _
  $region41: #{sccnet_forward.1} parent=0 // pred_fallthru
    _
  // Predicated region
  $region42: #{sccnet_forward.1} parent=0 // pred_check
    _
  $region43: #{sccnet_forward.1} parent=0 // pred_check_branch
    %4058 = sbr.rel (0) target = $region45
  $region44: #{sccnet_forward.1} parent=0 // pred_region
    _
  $region45: #{sccnet_forward.1} parent=0 // pred_fallthru
    _

</llo_original>
